<compile_context>
chip_gen: v7x
topology: tpu7x:2x2x1
jax: 0.10.0
libtpu: 0.0.40
codegen_flags: <defaults>
</compile_context>

<pallas_src>
import functools

import jax
import jax.numpy as jnp
from jax.experimental import pallas as pl
from jax.experimental.pallas import tpu as pltpu  # noqa: F401  (TPU backend)


# ---------------- config (consistent with SiglipConfig fields) --------------
BATCH = 2
SEQ = 8
HIDDEN = 32           # config.hidden_size
NUM_HEADS = 4         # config.num_attention_heads
HEAD_DIM = HIDDEN // NUM_HEADS
INTERMEDIATE = 64     # config.intermediate_size
LN_EPS = 1e-6         # config.layer_norm_eps
SCALE = HEAD_DIM ** -0.5
LANES = 128           # vector-slab width (D, F <= 128 at this toy size)


def _gelu_tanh(x):
    # "gelu_pytorch_tanh" activation used by Siglip (kept in f32 -> v5e-safe).
    return 0.5 * x * (1.0 + jnp.tanh(0.7978845608028654 * (x + 0.044715 * x * x * x)))


def encoder_layer_kernel(x_ref, mask_ref, vec_ref, mlpw_ref,
                         wqkv_ref, bqkv_ref, wo_ref, out_ref):
    B, S, D = x_ref.shape
    H, hd, F = NUM_HEADS, HEAD_DIM, INTERMEDIATE
    BH = B * H

    x = x_ref[...]                                    # (B, S, D)

    # -------- packed per-channel vectors (one (8,128) slab) --------
    ln1_g = vec_ref[0:1, :D]
    ln1_b = vec_ref[1:2, :D]
    ln2_g = vec_ref[2:3, :D]
    ln2_b = vec_ref[3:4, :D]
    bo = vec_ref[4:5, :D]
    b2 = vec_ref[5:6, :D]
    b1 = vec_ref[6:7, :F]

    # -------- LayerNorm 1 (whole (B,S,D) slab at once) --------
    mu = jnp.mean(x, axis=-1, keepdims=True)
    var = jnp.mean((x - mu) ** 2, axis=-1, keepdims=True)
    h = (x - mu) * jax.lax.rsqrt(var + LN_EPS) * ln1_g + ln1_b        # (B, S, D)

    # -------- fused, head-batched Q/K/V projection (single dot_general) -----
    # batch order of the flattened axis is (proj=3, batch=B, head=H); SCALE is
    # already folded into the q-weights/bias by the wrapper.
    h_b = jnp.broadcast_to(h[None, :, None], (3, B, H, S, D)).reshape(3 * BH, S, D)
    w_b = jnp.broadcast_to(wqkv_ref[...][:, None], (3, B, H, D, hd)).reshape(3 * BH, D, hd)
    b_b = jnp.broadcast_to(bqkv_ref[...][:, None], (3, B, H, 1, hd)).reshape(3 * BH, 1, hd)
    qkv = jnp.einsum("nsd,ndk->nsk", h_b, w_b,
                     preferred_element_type=jnp.float32) + b_b        # (3BH, S, hd)
    q = qkv[0:BH]                                                     # (BH, S, hd)
    k = qkv[BH:2 * BH]
    v = qkv[2 * BH:3 * BH]

    # -------- attention: one batched score matmul / softmax / PV matmul -----
    mask = jnp.broadcast_to(mask_ref[...], (B, H, S, S)).reshape(BH, S, S)
    s = jnp.einsum("nqd,nkd->nqk", q, k,
                   preferred_element_type=jnp.float32) + mask          # (BH, S, S)
    m = jnp.max(s, axis=-1, keepdims=True)
    e = jnp.exp(s - m)
    p = e * pl.reciprocal(jnp.sum(e, axis=-1, keepdims=True), approx=True)
    o = jnp.einsum("nqk,nkd->nqd", p, v,
                   preferred_element_type=jnp.float32)                 # (BH, S, hd)

    # -------- out-projection: one batched (S,hd)@(hd,D) + head reduce -------
    wo_b = jnp.broadcast_to(wo_ref[...][None], (B, H, hd, D)).reshape(BH, hd, D)
    attn = jnp.einsum("nqd,ndk->nqk", o, wo_b,
                      preferred_element_type=jnp.float32)              # (BH, S, D)
    attn = jnp.sum(attn.reshape(B, H, S, D), axis=1) + bo              # (B, S, D)

    h1 = x + attn                                                      # residual 1

    # -------- LayerNorm 2 + MLP on the flattened (B*S, D) slab --------------
    h1f = h1.reshape(B * S, D)
    mu2 = jnp.mean(h1f, axis=-1, keepdims=True)
    var2 = jnp.mean((h1f - mu2) ** 2, axis=-1, keepdims=True)
    g = (h1f - mu2) * jax.lax.rsqrt(var2 + LN_EPS) * ln2_g + ln2_b     # (B*S, D)

    w1 = mlpw_ref[0:D, 0:F]                                            # (D, F)
    w2 = mlpw_ref[D:D + F, 0:D]                                        # (F, D)
    z = jnp.dot(g, w1, preferred_element_type=jnp.float32) + b1
    z = _gelu_tanh(z)
    z = jnp.dot(z, w2, preferred_element_type=jnp.float32) + b2        # (B*S, D)

    out_ref[...] = (h1f + z).reshape(B, S, D)                          # residual 2


def siglip_encoder_layer(x, attention_mask, params):
    """x: (B, S, D) f32; attention_mask: (B, 1, S, S) additive f32."""
    B, S, D = x.shape
    H, hd, F = NUM_HEADS, HEAD_DIM, INTERMEDIATE
    f32 = jnp.float32

    # head-split projection weights: head h owns output columns [h*hd:(h+1)*hd]
    def head_w(w):                      # (D, H*hd) -> (H, D, hd)
        return jnp.transpose(w.reshape(D, H, hd), (1, 0, 2))

    def head_b(b):                      # (H*hd,) -> (H, 1, hd)
        return b.reshape(H, 1, hd)

    wqkv = jnp.stack([head_w(params["wq"] * SCALE),     # SCALE folded into q
                      head_w(params["wk"]),
                      head_w(params["wv"])]).astype(f32)          # (3, H, D, hd)
    bqkv = jnp.stack([head_b(params["bq"] * SCALE),
                      head_b(params["bk"]),
                      head_b(params["bv"])]).astype(f32)          # (3, H, 1, hd)
    wo_h = params["wo"].reshape(H, hd, D).astype(f32)             # (H, hd, D)

    # one (8,128) slab for every 1-D parameter (LN gains/biases + linear biases)
    vec = jnp.zeros((8, LANES), f32)
    vec = vec.at[0, :D].set(params["ln1_g"])
    vec = vec.at[1, :D].set(params["ln1_b"])
    vec = vec.at[2, :D].set(params["ln2_g"])
    vec = vec.at[3, :D].set(params["ln2_b"])
    vec = vec.at[4, :D].set(params["bo"])
    vec = vec.at[5, :D].set(params["b2"])
    vec = vec.at[6, :F].set(params["b1"])

    # one slab for both MLP weight matrices
    mlpw = jnp.zeros((D + F, max(D, F)), f32)
    mlpw = mlpw.at[:D, :F].set(params["w1"])
    mlpw = mlpw.at[D:, :D].set(params["w2"])

    # Single invocation (no grid): whole problem fits comfortably in VMEM, so
    # there is nothing to pipeline; default full-array blocks land in VMEM.
    return pl.pallas_call(
        encoder_layer_kernel,
        out_shape=jax.ShapeDtypeStruct((B, S, D), f32),
    )(x, attention_mask, vec, mlpw, wqkv, bqkv, wo_h)


# --------------------------- pure-JAX reference ------------------------------
def reference(x, mask, p):
    def ln(v, g, b):
        mu = jnp.mean(v, axis=-1, keepdims=True)
        var = jnp.mean((v - mu) ** 2, axis=-1, keepdims=True)
        return (v - mu) * jax.lax.rsqrt(var + LN_EPS) * g + b

    B, S, D = x.shape
    h = ln(x, p["ln1_g"], p["ln1_b"])
    q = (h @ p["wq"] + p["bq"]) * SCALE
    k = h @ p["wk"] + p["bk"]
    v = h @ p["wv"] + p["bv"]
    q = q.reshape(B, S, NUM_HEADS, HEAD_DIM).transpose(0, 2, 1, 3)
    k = k.reshape(B, S, NUM_HEADS, HEAD_DIM).transpose(0, 2, 1, 3)
    v = v.reshape(B, S, NUM_HEADS, HEAD_DIM).transpose(0, 2, 1, 3)
    s = jnp.einsum("bhqd,bhkd->bhqk", q, k) + mask
    pw = jax.nn.softmax(s, axis=-1)
    o = jnp.einsum("bhqk,bhkd->bhqd", pw, v).transpose(0, 2, 1, 3).reshape(B, S, D)
    o = o @ p["wo"] + p["bo"]
    h1 = x + o
    g = ln(h1, p["ln2_g"], p["ln2_b"])
    z = _gelu_tanh(g @ p["w1"] + p["b1"]) @ p["w2"] + p["b2"]
    return h1 + z


def make_params(key):
    keys = jax.random.split(key, 12)
    init = functools.partial(jax.random.normal, dtype=jnp.float32)
    s = 0.05
    return {
        "ln1_g": jnp.ones((HIDDEN,), jnp.float32),
        "ln1_b": jnp.zeros((HIDDEN,), jnp.float32),
        "wq": s * init(keys[0], (HIDDEN, HIDDEN)),
        "bq": s * init(keys[1], (HIDDEN,)),
        "wk": s * init(keys[2], (HIDDEN, HIDDEN)),
        "bk": s * init(keys[3], (HIDDEN,)),
        "wv": s * init(keys[4], (HIDDEN, HIDDEN)),
        "bv": s * init(keys[5], (HIDDEN,)),
        "wo": s * init(keys[6], (HIDDEN, HIDDEN)),
        "bo": s * init(keys[7], (HIDDEN,)),
        "ln2_g": jnp.ones((HIDDEN,), jnp.float32),
        "ln2_b": jnp.zeros((HIDDEN,), jnp.float32),
        "w1": s * init(keys[8], (HIDDEN, INTERMEDIATE)),
        "b1": s * init(keys[9], (INTERMEDIATE,)),
        "w2": s * init(keys[10], (INTERMEDIATE, HIDDEN)),
        "b2": s * init(keys[11], (HIDDEN,)),
    }


if __name__ == "__main__":
    key = jax.random.PRNGKey(0)
    kx, kp = jax.random.split(key)
    x = jax.random.normal(kx, (BATCH, SEQ, HIDDEN), dtype=jnp.float32)

    # additive attention mask (B, 1, S, S): mask out the last 2 key positions
    # (large negative), everything else unmasked — exercises the mask path.
    key_pos = jnp.arange(SEQ)
    base = jnp.where(key_pos < SEQ - 2, 0.0, -1e9).astype(jnp.float32)   # (S,)
    attn_mask = jnp.broadcast_to(base[None, None, None, :], (BATCH, 1, SEQ, SEQ))
    attn_mask = jnp.asarray(attn_mask, dtype=jnp.float32)

    params = make_params(kp)

    out = jax.block_until_ready(siglip_encoder_layer(x, attn_mask, params))
    ref = reference(x, attn_mask, params)

    assert out.shape == (BATCH, SEQ, HIDDEN)
    max_err = jnp.max(jnp.abs(out - ref))
    # slightly loosened tolerance: softmax uses pl.reciprocal(approx=True) (EUP)
    assert jnp.allclose(out, ref, atol=2e-3, rtol=2e-3), f"max abs err {max_err}"
    print("KERNEL_OK")
</pallas_src>

<mosaic_0001>
module attributes {stable_mosaic.version = 11 : i64} {
  func.func @encoder_layer_kernel(%arg0: memref<2x8x32xf32, #tpu.memory_space<vmem>>, %arg1: memref<2x1x8x8xf32, #tpu.memory_space<vmem>>, %arg2: memref<8x128xf32, #tpu.memory_space<vmem>>, %arg3: memref<96x64xf32, #tpu.memory_space<vmem>>, %arg4: memref<3x4x32x8xf32, #tpu.memory_space<vmem>>, %arg5: memref<3x4x1x8xf32, #tpu.memory_space<vmem>>, %arg6: memref<4x8x32xf32, #tpu.memory_space<vmem>>, %arg7: memref<2x8x32xf32, #tpu.memory_space<vmem>>) attributes {dimension_semantics = [], scalar_prefetch = 0 : i64, scratch_operands = 0 : i64, tpu.core_type = #tpu.core_type<tc>} {
    %c0 = arith.constant 0 : index
    %c0_0 = arith.constant 0 : index
    %c0_1 = arith.constant 0 : index
    %0 = vector.load %arg0[%c0, %c0_0, %c0_1] : memref<2x8x32xf32, #tpu.memory_space<vmem>>, vector<2x8x32xf32>
    %c0_2 = arith.constant 0 : index
    %c0_3 = arith.constant 0 : index
    %1 = vector.load %arg2[%c0_2, %c0_3] : memref<8x128xf32, #tpu.memory_space<vmem>>, vector<1x32xf32>
    %c1 = arith.constant 1 : index
    %c0_4 = arith.constant 0 : index
    %2 = vector.load %arg2[%c1, %c0_4] : memref<8x128xf32, #tpu.memory_space<vmem>>, vector<1x32xf32>
    %c2 = arith.constant 2 : index
    %c0_5 = arith.constant 0 : index
    %3 = vector.load %arg2[%c2, %c0_5] : memref<8x128xf32, #tpu.memory_space<vmem>>, vector<1x32xf32>
    %c3 = arith.constant 3 : index
    %c0_6 = arith.constant 0 : index
    %4 = vector.load %arg2[%c3, %c0_6] : memref<8x128xf32, #tpu.memory_space<vmem>>, vector<1x32xf32>
    %c4 = arith.constant 4 : index
    %c0_7 = arith.constant 0 : index
    %5 = vector.load %arg2[%c4, %c0_7] : memref<8x128xf32, #tpu.memory_space<vmem>>, vector<1x32xf32>
    %c5 = arith.constant 5 : index
    %c0_8 = arith.constant 0 : index
    %6 = vector.load %arg2[%c5, %c0_8] : memref<8x128xf32, #tpu.memory_space<vmem>>, vector<1x32xf32>
    %c6 = arith.constant 6 : index
    %c0_9 = arith.constant 0 : index
    %7 = vector.load %arg2[%c6, %c0_9] : memref<8x128xf32, #tpu.memory_space<vmem>>, vector<1x64xf32>
    %cst = arith.constant dense<0.000000e+00> : vector<2x8xf32>
    %8 = vector.multi_reduction <add>, %0, %cst [2] : vector<2x8x32xf32> to vector<2x8xf32>
    %9 = vector.shape_cast %8 : vector<2x8xf32> to vector<2x8x1xf32>
    %cst_10 = arith.constant 3.200000e+01 : f32
    %10 = vector.broadcast %cst_10 : f32 to vector<2x8x1xf32>
    %11 = arith.divf %9, %10 : vector<2x8x1xf32>
    %12 = vector.broadcast %11 : vector<2x8x1xf32> to vector<2x8x32xf32>
    %13 = arith.subf %0, %12 : vector<2x8x32xf32>
    %14 = arith.mulf %13, %13 : vector<2x8x32xf32>
    %cst_11 = arith.constant dense<0.000000e+00> : vector<2x8xf32>
    %15 = vector.multi_reduction <add>, %14, %cst_11 [2] : vector<2x8x32xf32> to vector<2x8xf32>
    %16 = vector.shape_cast %15 : vector<2x8xf32> to vector<2x8x1xf32>
    %cst_12 = arith.constant 3.200000e+01 : f32
    %17 = vector.broadcast %cst_12 : f32 to vector<2x8x1xf32>
    %18 = arith.divf %16, %17 : vector<2x8x1xf32>
    %19 = vector.broadcast %11 : vector<2x8x1xf32> to vector<2x8x32xf32>
    %20 = arith.subf %0, %19 : vector<2x8x32xf32>
    %cst_13 = arith.constant 9.99999997E-7 : f32
    %21 = vector.broadcast %cst_13 : f32 to vector<2x8x1xf32>
    %22 = arith.addf %18, %21 : vector<2x8x1xf32>
    %23 = math.rsqrt %22 : vector<2x8x1xf32>
    %24 = vector.broadcast %23 : vector<2x8x1xf32> to vector<2x8x32xf32>
    %25 = arith.mulf %20, %24 : vector<2x8x32xf32>
    %26 = vector.shape_cast %1 : vector<1x32xf32> to vector<1x1x32xf32>
    %27 = vector.broadcast %26 : vector<1x1x32xf32> to vector<2x8x32xf32>
    %28 = arith.mulf %25, %27 : vector<2x8x32xf32>
    %29 = vector.shape_cast %2 : vector<1x32xf32> to vector<1x1x32xf32>
    %30 = vector.broadcast %29 : vector<1x1x32xf32> to vector<2x8x32xf32>
    %31 = arith.addf %28, %30 : vector<2x8x32xf32>
    %32 = vector.shape_cast %31 : vector<2x8x32xf32> to vector<1x2x1x8x32xf32>
    %33 = vector.shape_cast %32 : vector<1x2x1x8x32xf32> to vector<1x2x1x8x32xf32>
    %34 = vector.broadcast %33 : vector<1x2x1x8x32xf32> to vector<3x2x4x8x32xf32>
    %35 = vector.shape_cast %34 : vector<3x2x4x8x32xf32> to vector<24x8x32xf32>
    %c0_14 = arith.constant 0 : index
    %c0_15 = arith.constant 0 : index
    %c0_16 = arith.constant 0 : index
    %c0_17 = arith.constant 0 : index
    %36 = vector.load %arg4[%c0_14, %c0_15, %c0_16, %c0_17] : memref<3x4x32x8xf32, #tpu.memory_space<vmem>>, vector<3x4x32x8xf32>
    %37 = vector.shape_cast %36 : vector<3x4x32x8xf32> to vector<3x1x4x32x8xf32>
    %38 = vector.shape_cast %37 : vector<3x1x4x32x8xf32> to vector<3x1x4x32x8xf32>
    %39 = vector.broadcast %38 : vector<3x1x4x32x8xf32> to vector<3x2x4x32x8xf32>
    %40 = vector.shape_cast %39 : vector<3x2x4x32x8xf32> to vector<24x32x8xf32>
    %c0_18 = arith.constant 0 : index
    %c0_19 = arith.constant 0 : index
    %c0_20 = arith.constant 0 : index
    %c0_21 = arith.constant 0 : index
    %41 = vector.load %arg5[%c0_18, %c0_19, %c0_20, %c0_21] : memref<3x4x1x8xf32, #tpu.memory_space<vmem>>, vector<3x4x1x8xf32>
    %42 = vector.shape_cast %41 : vector<3x4x1x8xf32> to vector<3x1x4x1x8xf32>
    %43 = vector.shape_cast %42 : vector<3x1x4x1x8xf32> to vector<3x1x4x1x8xf32>
    %44 = vector.broadcast %43 : vector<3x1x4x1x8xf32> to vector<3x2x4x1x8xf32>
    %45 = vector.shape_cast %44 : vector<3x2x4x1x8xf32> to vector<24x1x8xf32>
    "tpu.trace_start"() <{level = 10 : i32, message = "nsd,ndk->nsk"}> : () -> ()
    %cst_22 = arith.constant dense<0.000000e+00> : vector<24x8x8xf32>
    %46 = tpu.matmul %35, %40, %cst_22 {dimension_numbers = #tpu.dot_dimension_numbers<[2], [1], [1], [2], [0, 0, 0, 1, 1, 2], [0], [0]>} : vector<24x8x32xf32>, vector<24x32x8xf32>, vector<24x8x8xf32> -> vector<24x8x8xf32>
    "tpu.trace_stop"() : () -> ()
    %47 = vector.broadcast %45 : vector<24x1x8xf32> to vector<24x8x8xf32>
    %48 = arith.addf %46, %47 : vector<24x8x8xf32>
    %49 = vector.extract_strided_slice %48 {offsets = [0, 0, 0], sizes = [8, 8, 8], strides = [1, 1, 1]} : vector<24x8x8xf32> to vector<8x8x8xf32>
    %50 = vector.extract_strided_slice %48 {offsets = [8, 0, 0], sizes = [8, 8, 8], strides = [1, 1, 1]} : vector<24x8x8xf32> to vector<8x8x8xf32>
    %51 = vector.extract_strided_slice %48 {offsets = [16, 0, 0], sizes = [8, 8, 8], strides = [1, 1, 1]} : vector<24x8x8xf32> to vector<8x8x8xf32>
    %c0_23 = arith.constant 0 : index
    %c0_24 = arith.constant 0 : index
    %c0_25 = arith.constant 0 : index
    %c0_26 = arith.constant 0 : index
    %52 = vector.load %arg1[%c0_23, %c0_24, %c0_25, %c0_26] : memref<2x1x8x8xf32, #tpu.memory_space<vmem>>, vector<2x1x8x8xf32>
    %53 = vector.shape_cast %52 : vector<2x1x8x8xf32> to vector<2x1x8x8xf32>
    %54 = vector.broadcast %53 : vector<2x1x8x8xf32> to vector<2x4x8x8xf32>
    %55 = vector.shape_cast %54 : vector<2x4x8x8xf32> to vector<8x8x8xf32>
    "tpu.trace_start"() <{level = 10 : i32, message = "nqd,nkd->nqk"}> : () -> ()
    %cst_27 = arith.constant dense<0.000000e+00> : vector<8x8x8xf32>
    %56 = tpu.matmul %49, %50, %cst_27 {dimension_numbers = #tpu.dot_dimension_numbers<[2], [2], [1], [1], [0, 0, 0, 1, 1, 1], [0], [0]>} : vector<8x8x8xf32>, vector<8x8x8xf32>, vector<8x8x8xf32> -> vector<8x8x8xf32>
    "tpu.trace_stop"() : () -> ()
    %57 = arith.addf %56, %55 : vector<8x8x8xf32>
    %cst_28 = arith.constant dense<0xFF800000> : vector<8x8xf32>
    %58 = vector.multi_reduction <maximumf>, %57, %cst_28 [2] : vector<8x8x8xf32> to vector<8x8xf32>
    %59 = vector.shape_cast %58 : vector<8x8xf32> to vector<8x8x1xf32>
    %60 = vector.broadcast %59 : vector<8x8x1xf32> to vector<8x8x8xf32>
    %61 = arith.subf %57, %60 : vector<8x8x8xf32>
    %62 = math.exp %61 : vector<8x8x8xf32>
    %cst_29 = arith.constant dense<0.000000e+00> : vector<8x8xf32>
    %63 = vector.multi_reduction <add>, %62, %cst_29 [2] : vector<8x8x8xf32> to vector<8x8xf32>
    %64 = vector.shape_cast %63 : vector<8x8xf32> to vector<8x8x1xf32>
    %65 = tpu.reciprocal %64 {approx = true} : vector<8x8x1xf32> -> vector<8x8x1xf32>
    %66 = vector.broadcast %65 : vector<8x8x1xf32> to vector<8x8x8xf32>
    %67 = arith.mulf %62, %66 : vector<8x8x8xf32>
    "tpu.trace_start"() <{level = 10 : i32, message = "nqk,nkd->nqd"}> : () -> ()
    %cst_30 = arith.constant dense<0.000000e+00> : vector<8x8x8xf32>
    %68 = tpu.matmul %67, %51, %cst_30 {dimension_numbers = #tpu.dot_dimension_numbers<[2], [1], [1], [2], [0, 0, 0, 1, 1, 2], [0], [0]>} : vector<8x8x8xf32>, vector<8x8x8xf32>, vector<8x8x8xf32> -> vector<8x8x8xf32>
    "tpu.trace_stop"() : () -> ()
    %c0_31 = arith.constant 0 : index
    %c0_32 = arith.constant 0 : index
    %c0_33 = arith.constant 0 : index
    %69 = vector.load %arg6[%c0_31, %c0_32, %c0_33] : memref<4x8x32xf32, #tpu.memory_space<vmem>>, vector<4x8x32xf32>
    %70 = vector.shape_cast %69 : vector<4x8x32xf32> to vector<1x4x8x32xf32>
    %71 = vector.shape_cast %70 : vector<1x4x8x32xf32> to vector<1x4x8x32xf32>
    %72 = vector.broadcast %71 : vector<1x4x8x32xf32> to vector<2x4x8x32xf32>
    %73 = vector.shape_cast %72 : vector<2x4x8x32xf32> to vector<8x8x32xf32>
    "tpu.trace_start"() <{level = 10 : i32, message = "nqd,ndk->nqk"}> : () -> ()
    %cst_34 = arith.constant dense<0.000000e+00> : vector<8x8x32xf32>
    %74 = tpu.matmul %68, %73, %cst_34 {dimension_numbers = #tpu.dot_dimension_numbers<[2], [1], [1], [2], [0, 0, 0, 1, 1, 2], [0], [0]>} : vector<8x8x8xf32>, vector<8x8x32xf32>, vector<8x8x32xf32> -> vector<8x8x32xf32>
    "tpu.trace_stop"() : () -> ()
    %75 = vector.shape_cast %74 : vector<8x8x32xf32> to vector<2x4x8x32xf32>
    %cst_35 = arith.constant dense<0.000000e+00> : vector<2x8x32xf32>
    %76 = vector.multi_reduction <add>, %75, %cst_35 [1] : vector<2x4x8x32xf32> to vector<2x8x32xf32>
    %77 = vector.shape_cast %5 : vector<1x32xf32> to vector<1x1x32xf32>
    %78 = vector.broadcast %77 : vector<1x1x32xf32> to vector<2x8x32xf32>
    %79 = arith.addf %76, %78 : vector<2x8x32xf32>
    %80 = arith.addf %0, %79 : vector<2x8x32xf32>
    %81 = vector.shape_cast %80 : vector<2x8x32xf32> to vector<16x32xf32>
    %cst_36 = arith.constant dense<0.000000e+00> : vector<16xf32>
    %82 = vector.multi_reduction <add>, %81, %cst_36 [1] : vector<16x32xf32> to vector<16xf32>
    %83 = vector.shape_cast %82 : vector<16xf32> to vector<16x1xf32>
    %cst_37 = arith.constant 3.200000e+01 : f32
    %84 = vector.broadcast %cst_37 : f32 to vector<16x1xf32>
    %85 = arith.divf %83, %84 : vector<16x1xf32>
    %86 = vector.broadcast %85 : vector<16x1xf32> to vector<16x32xf32>
    %87 = arith.subf %81, %86 : vector<16x32xf32>
    %88 = arith.mulf %87, %87 : vector<16x32xf32>
    %cst_38 = arith.constant dense<0.000000e+00> : vector<16xf32>
    %89 = vector.multi_reduction <add>, %88, %cst_38 [1] : vector<16x32xf32> to vector<16xf32>
    %90 = vector.shape_cast %89 : vector<16xf32> to vector<16x1xf32>
    %cst_39 = arith.constant 3.200000e+01 : f32
    %91 = vector.broadcast %cst_39 : f32 to vector<16x1xf32>
    %92 = arith.divf %90, %91 : vector<16x1xf32>
    %93 = vector.broadcast %85 : vector<16x1xf32> to vector<16x32xf32>
    %94 = arith.subf %81, %93 : vector<16x32xf32>
    %cst_40 = arith.constant 9.99999997E-7 : f32
    %95 = vector.broadcast %cst_40 : f32 to vector<16x1xf32>
    %96 = arith.addf %92, %95 : vector<16x1xf32>
    %97 = math.rsqrt %96 : vector<16x1xf32>
    %98 = vector.broadcast %97 : vector<16x1xf32> to vector<16x32xf32>
    %99 = arith.mulf %94, %98 : vector<16x32xf32>
    %100 = vector.broadcast %3 : vector<1x32xf32> to vector<16x32xf32>
    %101 = arith.mulf %99, %100 : vector<16x32xf32>
    %102 = vector.broadcast %4 : vector<1x32xf32> to vector<16x32xf32>
    %103 = arith.addf %101, %102 : vector<16x32xf32>
    %c0_41 = arith.constant 0 : index
    %c0_42 = arith.constant 0 : index
    %104 = vector.load %arg3[%c0_41, %c0_42] : memref<96x64xf32, #tpu.memory_space<vmem>>, vector<32x64xf32>
    %c32 = arith.constant 32 : index
    %c0_43 = arith.constant 0 : index
    %105 = vector.load %arg3[%c32, %c0_43] : memref<96x64xf32, #tpu.memory_space<vmem>>, vector<64x32xf32>
    %cst_44 = arith.constant dense<0.000000e+00> : vector<16x64xf32>
    %106 = tpu.matmul %103, %104, %cst_44 {dimension_numbers = #tpu.dot_dimension_numbers<[1], [0], [0], [1], [0, 0, 1, 1], [], []>} : vector<16x32xf32>, vector<32x64xf32>, vector<16x64xf32> -> vector<16x64xf32>
    %107 = vector.broadcast %7 : vector<1x64xf32> to vector<16x64xf32>
    %108 = arith.addf %106, %107 : vector<16x64xf32>
    %cst_45 = arith.constant 5.000000e-01 : f32
    %109 = vector.broadcast %cst_45 : f32 to vector<16x64xf32>
    %110 = arith.mulf %109, %108 : vector<16x64xf32>
    %cst_46 = arith.constant 4.471500e-02 : f32
    %111 = vector.broadcast %cst_46 : f32 to vector<16x64xf32>
    %112 = arith.mulf %111, %108 : vector<16x64xf32>
    %113 = arith.mulf %112, %108 : vector<16x64xf32>
    %114 = arith.mulf %113, %108 : vector<16x64xf32>
    %115 = arith.addf %108, %114 : vector<16x64xf32>
    %cst_47 = arith.constant 0.797884583 : f32
    %116 = vector.broadcast %cst_47 : f32 to vector<16x64xf32>
    %117 = arith.mulf %116, %115 : vector<16x64xf32>
    %118 = math.tanh %117 : vector<16x64xf32>
    %cst_48 = arith.constant 1.000000e+00 : f32
    %119 = vector.broadcast %cst_48 : f32 to vector<16x64xf32>
    %120 = arith.addf %119, %118 : vector<16x64xf32>
    %121 = arith.mulf %110, %120 : vector<16x64xf32>
    %cst_49 = arith.constant dense<0.000000e+00> : vector<16x32xf32>
    %122 = tpu.matmul %121, %105, %cst_49 {dimension_numbers = #tpu.dot_dimension_numbers<[1], [0], [0], [1], [0, 0, 1, 1], [], []>} : vector<16x64xf32>, vector<64x32xf32>, vector<16x32xf32> -> vector<16x32xf32>
    %123 = vector.broadcast %6 : vector<1x32xf32> to vector<16x32xf32>
    %124 = arith.addf %122, %123 : vector<16x32xf32>
    %125 = arith.addf %81, %124 : vector<16x32xf32>
    %126 = vector.shape_cast %125 : vector<16x32xf32> to vector<2x8x32xf32>
    %c0_50 = arith.constant 0 : index
    %c0_51 = arith.constant 0 : index
    %c0_52 = arith.constant 0 : index
    %127 = vector.load %arg7[%c0_50, %c0_51, %c0_52] : memref<2x8x32xf32, #tpu.memory_space<vmem>>, vector<2x8x32xf32>
    tpu.vector_store %arg7[%c0_50, %c0_51, %c0_52], %126 {strides = array<i32>} : memref<2x8x32xf32, #tpu.memory_space<vmem>>, vector<2x8x32xf32>,
    return
  }
}

</mosaic_0001>

<llo_original>
// kernel: tpu_custom_call.1
$region0: #{tpu_custom_call.1}
  #allocation0 [shape = 'u32[]', space=smem, size = 0x4, offset = 0x4, fixed_abs, tag = 'smem constant byte address 0x4 - core index']
  #allocation1 [shape = 'u32[144,128]{1,0:T(1,128)}', space=vmem, size = 0x12000, scoped, tag = 'internal scratch']
  %s0 = inlined_call_operand.vmem [shape: f32[2,8,32], index: 0, kind: input, shape index: {}]
  %s1 = inlined_call_operand.vmem [shape: f32[2,1,8,8], index: 1, kind: input, shape index: {}]
  %s2 = inlined_call_operand.vmem [shape: f32[8,128], index: 2, kind: input, shape index: {}]
  %s3 = inlined_call_operand.vmem [shape: f32[96,64], index: 3, kind: input, shape index: {}]
  %s4 = inlined_call_operand.vmem [shape: f32[3,4,32,8], index: 4, kind: input, shape index: {}]
  %s5 = inlined_call_operand.vmem [shape: f32[3,4,1,8], index: 5, kind: input, shape index: {}]
  %s6 = inlined_call_operand.vmem [shape: f32[4,8,32], index: 6, kind: input, shape index: {}]
  %s7 = inlined_call_operand.hbm [shape: f32[2,8,32], index: 7, kind: output, shape index: {}]
  %s8 = sld [smem:[#allocation0]]
  $region38: #{tpu_custom_call.1} parent=0
    _
  %s10 = ssub.s32 1, %s8
  %s11 = scalar_select 0, %s10, %s8
  $region1: #{tpu_custom_call.1} parent=0
    #allocation2 [shape = 'u8[8192]{0}', space=vmem, size = 0x2000, scoped, tag = 'output window, operand 0, single buffered']
    #allocation3 [shape = 's32[1]{0}', space=sflag, size = 0x4, scoped, tag = 'scoped memory for tpu_custom_call.1']
    %12 = vsyncpa [#allocation3], 0
    // Predicated region
    $region2: #{tpu_custom_call.1} parent=1 // pred_check
      _
    $region3: #{tpu_custom_call.1} parent=1 // pred_check_branch
      %14 = sbr.rel (0) target = $region5
    $region4: #{tpu_custom_call.1} parent=1 // pred_region
      _
    $region5: #{tpu_custom_call.1} parent=1 // pred_fallthru
      _
    // Predicated region
    $region6: #{tpu_custom_call.1} parent=1 // pred_check
      _
    $region7: #{tpu_custom_call.1} parent=1 // pred_check_branch
      %16 = sbr.rel (0) target = $region9
    $region8: #{tpu_custom_call.1} parent=1 // pred_region
      _
    $region9: #{tpu_custom_call.1} parent=1 // pred_fallthru
      _
    // Predicated region
    $region10: #{tpu_custom_call.1} parent=1 // pred_check
      _
    $region11: #{tpu_custom_call.1} parent=1 // pred_check_branch
      %18 = sbr.rel (0) target = $region13
    $region12: #{tpu_custom_call.1} parent=1 // pred_region
      _
    $region13: #{tpu_custom_call.1} parent=1 // pred_fallthru
      _
    // Predicated region
    $region14: #{tpu_custom_call.1} parent=1 // pred_check
      _
    $region15: #{tpu_custom_call.1} parent=1 // pred_check_branch
      %20 = sbr.rel (0) target = $region17
    $region16: #{tpu_custom_call.1} parent=1 // pred_region
      _
    $region17: #{tpu_custom_call.1} parent=1 // pred_fallthru
      _
    // Predicated region
    $region18: #{tpu_custom_call.1} parent=1 // pred_check
      _
    $region19: #{tpu_custom_call.1} parent=1 // pred_check_branch
      %22 = sbr.rel (0) target = $region21
    $region20: #{tpu_custom_call.1} parent=1 // pred_region
      _
    $region21: #{tpu_custom_call.1} parent=1 // pred_fallthru
      _
    // Predicated region
    $region22: #{tpu_custom_call.1} parent=1 // pred_check
      _
    $region23: #{tpu_custom_call.1} parent=1 // pred_check_branch
      %24 = sbr.rel (0) target = $region25
    $region24: #{tpu_custom_call.1} parent=1 // pred_region
      _
    $region25: #{tpu_custom_call.1} parent=1 // pred_fallthru
      _
    // Predicated region
    $region26: #{tpu_custom_call.1} parent=1 // pred_check
      _
    $region27: #{tpu_custom_call.1} parent=1 // pred_check_branch
      %26 = sbr.rel (0) target = $region29
    $region28: #{tpu_custom_call.1} parent=1 // pred_region
      _
    $region29: #{tpu_custom_call.1} parent=1 // pred_fallthru
      _
    %v27 = vld [vmem:[%s0] sm:$0xff]
    %v28 = vld [vmem:[%s0 + $0x8] sm:$0xff]
    %v29 = vld [vmem:[%s2] sm:$0x1]
    %v30 = vld [vmem:[%s2 + $0x1] sm:$0x1]
    %v31 = vld [vmem:[%s2 + $0x2] sm:$0x1]
    %v32 = vld [vmem:[%s2 + $0x3] sm:$0x1]
    %v33 = vld [vmem:[%s2 + $0x4] sm:$0x1]
    %v34 = vld [vmem:[%s2 + $0x5] sm:$0x1]
    %v35 = vld [vmem:[%s2 + $0x6] sm:$0x1]
    %vm36 = vcmask 261120
    %v37 = vsel %vm36, %v27, 0.0
    %38 = vadd.xlane.f32.xlu0 %v37
    %v39 = vpop.xlane.xlu0 %38
    %v40 = vsel %vm36, %v28, 0.0
    %41 = vadd.xlane.f32.xlu0 %v40
    %v42 = vpop.xlane.xlu0 %41
    %v43 = vrcp.pop 32.0
    %v44 = vmul.f32 %v39, %v43
    %v45 = vmul.f32 %v42, %v43
    %v46 = vsub.f32 %v27, %v44
    %v47 = vsub.f32 %v28, %v45
    %v48 = vmul.f32 %v46, %v46
    %v49 = vmul.f32 %v47, %v47
    %v50 = vsel %vm36, %v48, 0.0
    %51 = vadd.xlane.f32.xlu0 %v50
    %v52 = vpop.xlane.xlu0 %51
    %v53 = vsel %vm36, %v49, 0.0
    %54 = vadd.xlane.f32.xlu0 %v53
    %v55 = vpop.xlane.xlu0 %54
    %v56 = vmul.f32 %v52, %v43
    %v57 = vmul.f32 %v55, %v43
    %v58 = vadd.f32 %v56, 1e-06
    %v59 = vadd.f32 %v57, 1e-06
    %v60 = vrsqrt.pop %v58
    %v61 = vrsqrt.pop %v59
    %v62 = vmul.f32 %v46, %v60
    %v63 = vmul.f32 %v47, %v61
    %v64 = vlaneseq
    %v65 = vshrl.u32 %v64, 7
    %v66 = vsub.s32 0, %v65
    %v67 = vrot.slane %v29, %v66
    %v68 = vmul.f32 %v62, %v67
    %v69 = vmul.f32 %v63, %v67
    %v70 = vlaneseq
    %v71 = vshrl.u32 %v70, 7
    %v72 = vsub.s32 0, %v71
    %v73 = vrot.slane %v30, %v72
    %v74 = vadd.f32 %v68, %v73
    %v75 = vadd.f32 %v69, %v73
    %v76 = vld [vmem:[%s4] sm:$0xff]
    %v77 = vld [vmem:[%s4 + $0x8] sm:$0xff]
    %v78 = vld [vmem:[%s4 + $0x10] sm:$0xff]
    %v79 = vld [vmem:[%s4 + $0x18] sm:$0xff]
    %v80 = vld [vmem:[%s4 + $0x20] sm:$0xff]
    %v81 = vld [vmem:[%s4 + $0x28] sm:$0xff]
    %v82 = vld [vmem:[%s4 + $0x30] sm:$0xff]
    %v83 = vld [vmem:[%s4 + $0x38] sm:$0xff]
    %v84 = vld [vmem:[%s4 + $0x40] sm:$0xff]
    %v85 = vld [vmem:[%s4 + $0x48] sm:$0xff]
    %v86 = vld [vmem:[%s4 + $0x50] sm:$0xff]
    %v87 = vld [vmem:[%s4 + $0x58] sm:$0xff]
    %v88 = vld [vmem:[%s4 + $0x60] sm:$0xff]
    %v89 = vld [vmem:[%s4 + $0x68] sm:$0xff]
    %v90 = vld [vmem:[%s4 + $0x70] sm:$0xff]
    %v91 = vld [vmem:[%s4 + $0x78] sm:$0xff]
    %v92 = vld [vmem:[%s4 + $0x80] sm:$0xff]
    %v93 = vld [vmem:[%s4 + $0x88] sm:$0xff]
    %v94 = vld [vmem:[%s4 + $0x90] sm:$0xff]
    %v95 = vld [vmem:[%s4 + $0x98] sm:$0xff]
    %v96 = vld [vmem:[%s4 + $0xa0] sm:$0xff]
    %v97 = vld [vmem:[%s4 + $0xa8] sm:$0xff]
    %v98 = vld [vmem:[%s4 + $0xb0] sm:$0xff]
    %v99 = vld [vmem:[%s4 + $0xb8] sm:$0xff]
    %v100 = vld [vmem:[%s4 + $0xc0] sm:$0xff]
    %v101 = vld [vmem:[%s4 + $0xc8] sm:$0xff]
    %v102 = vld [vmem:[%s4 + $0xd0] sm:$0xff]
    %v103 = vld [vmem:[%s4 + $0xd8] sm:$0xff]
    %v104 = vld [vmem:[%s4 + $0xe0] sm:$0xff]
    %v105 = vld [vmem:[%s4 + $0xe8] sm:$0xff]
    %v106 = vld [vmem:[%s4 + $0xf0] sm:$0xff]
    %v107 = vld [vmem:[%s4 + $0xf8] sm:$0xff]
    %v108 = vld [vmem:[%s4 + $0x100] sm:$0xff]
    %v109 = vld [vmem:[%s4 + $0x108] sm:$0xff]
    %v110 = vld [vmem:[%s4 + $0x110] sm:$0xff]
    %v111 = vld [vmem:[%s4 + $0x118] sm:$0xff]
    %v112 = vld [vmem:[%s4 + $0x120] sm:$0xff]
    %v113 = vld [vmem:[%s4 + $0x128] sm:$0xff]
    %v114 = vld [vmem:[%s4 + $0x130] sm:$0xff]
    %v115 = vld [vmem:[%s4 + $0x138] sm:$0xff]
    %v116 = vld [vmem:[%s4 + $0x140] sm:$0xff]
    %v117 = vld [vmem:[%s4 + $0x148] sm:$0xff]
    %v118 = vld [vmem:[%s4 + $0x150] sm:$0xff]
    %v119 = vld [vmem:[%s4 + $0x158] sm:$0xff]
    %v120 = vld [vmem:[%s4 + $0x160] sm:$0xff]
    %v121 = vld [vmem:[%s4 + $0x168] sm:$0xff]
    %v122 = vld [vmem:[%s4 + $0x170] sm:$0xff]
    %v123 = vld [vmem:[%s4 + $0x178] sm:$0xff]
    %v124 = vld [vmem:[%s5] sm:$0x1]
    %v125 = vld [vmem:[%s5 + $0x1] sm:$0x1]
    %v126 = vld [vmem:[%s5 + $0x2] sm:$0x1]
    %v127 = vld [vmem:[%s5 + $0x3] sm:$0x1]
    %v128 = vld [vmem:[%s5 + $0x4] sm:$0x1]
    %v129 = vld [vmem:[%s5 + $0x5] sm:$0x1]
    %v130 = vld [vmem:[%s5 + $0x6] sm:$0x1]
    %v131 = vld [vmem:[%s5 + $0x7] sm:$0x1]
    %v132 = vld [vmem:[%s5 + $0x8] sm:$0x1]
    %v133 = vld [vmem:[%s5 + $0x9] sm:$0x1]
    %v134 = vld [vmem:[%s5 + $0xa] sm:$0x1]
    %v135 = vld [vmem:[%s5 + $0xb] sm:$0x1]
    %v148 = vlaneseq
    %v149 = vshrl.u32 %v148, 7
    %v150 = vsub.s32 0, %v149
    %v151 = vrot.slane %v124, %v150
    %v152 = vlaneseq
    %v153 = vshrl.u32 %v152, 7
    %v154 = vsub.s32 0, %v153
    %v155 = vrot.slane %v125, %v154
    %v156 = vlaneseq
    %v157 = vshrl.u32 %v156, 7
    %v158 = vsub.s32 0, %v157
    %v159 = vrot.slane %v126, %v158
    %v160 = vlaneseq
    %v161 = vshrl.u32 %v160, 7
    %v162 = vsub.s32 0, %v161
    %v163 = vrot.slane %v127, %v162
    %v164 = vlaneseq
    %v165 = vshrl.u32 %v164, 7
    %v166 = vsub.s32 0, %v165
    %v167 = vrot.slane %v128, %v166
    %v168 = vlaneseq
    %v169 = vshrl.u32 %v168, 7
    %v170 = vsub.s32 0, %v169
    %v171 = vrot.slane %v129, %v170
    %v172 = vlaneseq
    %v173 = vshrl.u32 %v172, 7
    %v174 = vsub.s32 0, %v173
    %v175 = vrot.slane %v130, %v174
    %v176 = vlaneseq
    %v177 = vshrl.u32 %v176, 7
    %v178 = vsub.s32 0, %v177
    %v179 = vrot.slane %v131, %v178
    %v180 = vlaneseq
    %v181 = vshrl.u32 %v180, 7
    %v182 = vsub.s32 0, %v181
    %v183 = vrot.slane %v132, %v182
    %v184 = vlaneseq
    %v185 = vshrl.u32 %v184, 7
    %v186 = vsub.s32 0, %v185
    %v187 = vrot.slane %v133, %v186
    %v188 = vlaneseq
    %v189 = vshrl.u32 %v188, 7
    %v190 = vsub.s32 0, %v189
    %v191 = vrot.slane %v134, %v190
    %v192 = vlaneseq
    %v193 = vshrl.u32 %v192, 7
    %v194 = vsub.s32 0, %v193
    %v195 = vrot.slane %v135, %v194
    %v209 = vsel %vm36, %v74, 0
    %211 = vmatprep.subr.mxu0 0.0
    %212 = vmatpush1.msra.mxu0 %v76
    %213 = vmatprep.subr.mxu0 0.0
    %214 = vmatpush1.msra.mxu0 %v77
    %215 = vmatprep.subr.mxu0 0.0
    %216 = vmatpush1.msra.mxu0 %v78
    %217 = vmatprep.subr.mxu0 0.0
    %218 = vmatpush1.msra.mxu0 %v79
    %219 = vmatprep.subr.mxu0 0.0
    %220 = vmatpush1.msra.mxu0 0.0
    %221 = vmatprep.subr.mxu0 0.0
    %222 = vmatpush1.msra.mxu0 0.0
    %223 = vmatprep.subr.mxu0 0.0
    %224 = vmatpush1.msra.mxu0 0.0
    %225 = vmatprep.subr.mxu0 0.0
    %226 = vmatpush1.msra.mxu0 0.0
    %227 = vmatprep.subr.mxu0 0.0
    %228 = vmatpush1.msra.mxu0 0.0
    %229 = vmatprep.subr.mxu0 0.0
    %230 = vmatpush1.msra.mxu0 0.0
    %231 = vmatprep.subr.mxu0 0.0
    %232 = vmatpush1.msra.mxu0 0.0
    %233 = vmatprep.subr.mxu0 0.0
    %234 = vmatpush1.msra.mxu0 0.0
    %235 = vmatprep.subr.mxu0 0.0
    %236 = vmatpush1.msra.mxu0 0.0
    %237 = vmatprep.subr.mxu0 0.0
    %238 = vmatpush1.msra.mxu0 0.0
    %239 = vmatprep.subr.mxu0 0.0
    %240 = vmatpush1.msra.mxu0 0.0
    %241 = vmatprep.subr.mxu0 0.0
    %242 = vmatpush1.msra.mxu0 0.0
    %243 = vmatprep.subr.mxu0 0.0
    %244 = vmatpush1.msra.mxu0 0.0
    %245 = vmatprep.subr.mxu0 0.0
    %246 = vmatpush1.msra.mxu0 0.0
    %247 = vmatprep.subr.mxu0 0.0
    %248 = vmatpush1.msra.mxu0 0.0
    %249 = vmatprep.subr.mxu0 0.0
    %250 = vmatpush1.msra.mxu0 0.0
    %251 = vmatprep.subr.mxu0 0.0
    %252 = vmatpush1.msra.mxu0 0.0
    %253 = vmatprep.subr.mxu0 0.0
    %254 = vmatpush1.msra.mxu0 0.0
    %255 = vmatprep.subr.mxu0 0.0
    %256 = vmatpush1.msra.mxu0 0.0
    %257 = vmatprep.subr.mxu0 0.0
    %258 = vmatpush1.msra.mxu0 0.0
    %259 = vmatprep.subr.mxu0 0.0
    %260 = vmatpush1.msra.mxu0 0.0
    %261 = vmatprep.subr.mxu0 0.0
    %262 = vmatpush1.msra.mxu0 0.0
    %263 = vmatprep.subr.mxu0 0.0
    %264 = vmatpush1.msra.mxu0 0.0
    %265 = vmatprep.subr.mxu0 0.0
    %266 = vmatpush1.msra.mxu0 0.0
    %267 = vmatprep.subr.mxu0 0.0
    %268 = vmatpush1.msra.mxu0 0.0
    %269 = vmatprep.subr.mxu0 0.0
    %270 = vmatpush1.msra.mxu0 0.0
    %271 = vmatprep.subr.mxu0 0.0
    %272 = vmatpush1.msra.mxu0 0.0
    %273 = vmatprep.subr.mxu0 0.0
    %274 = vmatpush1.msra.mxu0 0.0
    %275 = vmatprep.mubr.f32.mxu0 0.0
    %276 = vmatmul.mubr.f32.gmra.mrb[0].mxu0 %v209
    %v277 = vpop.f32.mrb[0].mxu0
    %v278 = vadd.f32 %v151, %v277
    %v279 = vpop.f32.mrb[0].mxu0
    %280 = vdwg.mxu0
    %281 = vmatprep.subr.mxu0 0.0
    %282 = vmatpush1.msra.mxu0 %v80
    %283 = vmatprep.subr.mxu0 0.0
    %284 = vmatpush1.msra.mxu0 %v81
    %285 = vmatprep.subr.mxu0 0.0
    %286 = vmatpush1.msra.mxu0 %v82
    %287 = vmatprep.subr.mxu0 0.0
    %288 = vmatpush1.msra.mxu0 %v83
    %289 = vmatprep.subr.mxu0 0.0
    %290 = vmatpush1.msra.mxu0 0.0
    %291 = vmatprep.subr.mxu0 0.0
    %292 = vmatpush1.msra.mxu0 0.0
    %293 = vmatprep.subr.mxu0 0.0
    %294 = vmatpush1.msra.mxu0 0.0
    %295 = vmatprep.subr.mxu0 0.0
    %296 = vmatpush1.msra.mxu0 0.0
    %297 = vmatprep.subr.mxu0 0.0
    %298 = vmatpush1.msra.mxu0 0.0
    %299 = vmatprep.subr.mxu0 0.0
    %300 = vmatpush1.msra.mxu0 0.0
    %301 = vmatprep.subr.mxu0 0.0
    %302 = vmatpush1.msra.mxu0 0.0
    %303 = vmatprep.subr.mxu0 0.0
    %304 = vmatpush1.msra.mxu0 0.0
    %305 = vmatprep.subr.mxu0 0.0
    %306 = vmatpush1.msra.mxu0 0.0
    %307 = vmatprep.subr.mxu0 0.0
    %308 = vmatpush1.msra.mxu0 0.0
    %309 = vmatprep.subr.mxu0 0.0
    %310 = vmatpush1.msra.mxu0 0.0
    %311 = vmatprep.subr.mxu0 0.0
    %312 = vmatpush1.msra.mxu0 0.0
    %313 = vmatprep.subr.mxu0 0.0
    %314 = vmatpush1.msra.mxu0 0.0
    %315 = vmatprep.subr.mxu0 0.0
    %316 = vmatpush1.msra.mxu0 0.0
    %317 = vmatprep.subr.mxu0 0.0
    %318 = vmatpush1.msra.mxu0 0.0
    %319 = vmatprep.subr.mxu0 0.0
    %320 = vmatpush1.msra.mxu0 0.0
    %321 = vmatprep.subr.mxu0 0.0
    %322 = vmatpush1.msra.mxu0 0.0
    %323 = vmatprep.subr.mxu0 0.0
    %324 = vmatpush1.msra.mxu0 0.0
    %325 = vmatprep.subr.mxu0 0.0
    %326 = vmatpush1.msra.mxu0 0.0
    %327 = vmatprep.subr.mxu0 0.0
    %328 = vmatpush1.msra.mxu0 0.0
    %329 = vmatprep.subr.mxu0 0.0
    %330 = vmatpush1.msra.mxu0 0.0
    %331 = vmatprep.subr.mxu0 0.0
    %332 = vmatpush1.msra.mxu0 0.0
    %333 = vmatprep.subr.mxu0 0.0
    %334 = vmatpush1.msra.mxu0 0.0
    %335 = vmatprep.subr.mxu0 0.0
    %336 = vmatpush1.msra.mxu0 0.0
    %337 = vmatprep.subr.mxu0 0.0
    %338 = vmatpush1.msra.mxu0 0.0
    %339 = vmatprep.subr.mxu0 0.0
    %340 = vmatpush1.msra.mxu0 0.0
    %341 = vmatprep.subr.mxu0 0.0
    %342 = vmatpush1.msra.mxu0 0.0
    %343 = vmatprep.subr.mxu0 0.0
    %344 = vmatpush1.msra.mxu0 0.0
    %345 = vmatprep.mubr.f32.mxu0 0.0
    %346 = vmatmul.mubr.f32.gmra.mrb[0].mxu0 %v209
    %v347 = vpop.f32.mrb[0].mxu0
    %v348 = vadd.f32 %v155, %v347
    %v349 = vpop.f32.mrb[0].mxu0
    %350 = vdwg.mxu0
    %351 = vmatprep.subr.mxu0 0.0
    %352 = vmatpush1.msra.mxu0 %v84
    %353 = vmatprep.subr.mxu0 0.0
    %354 = vmatpush1.msra.mxu0 %v85
    %355 = vmatprep.subr.mxu0 0.0
    %356 = vmatpush1.msra.mxu0 %v86
    %357 = vmatprep.subr.mxu0 0.0
    %358 = vmatpush1.msra.mxu0 %v87
    %359 = vmatprep.subr.mxu0 0.0
    %360 = vmatpush1.msra.mxu0 0.0
    %361 = vmatprep.subr.mxu0 0.0
    %362 = vmatpush1.msra.mxu0 0.0
    %363 = vmatprep.subr.mxu0 0.0
    %364 = vmatpush1.msra.mxu0 0.0
    %365 = vmatprep.subr.mxu0 0.0
    %366 = vmatpush1.msra.mxu0 0.0
    %367 = vmatprep.subr.mxu0 0.0
    %368 = vmatpush1.msra.mxu0 0.0
    %369 = vmatprep.subr.mxu0 0.0
    %370 = vmatpush1.msra.mxu0 0.0
    %371 = vmatprep.subr.mxu0 0.0
    %372 = vmatpush1.msra.mxu0 0.0
    %373 = vmatprep.subr.mxu0 0.0
    %374 = vmatpush1.msra.mxu0 0.0
    %375 = vmatprep.subr.mxu0 0.0
    %376 = vmatpush1.msra.mxu0 0.0
    %377 = vmatprep.subr.mxu0 0.0
    %378 = vmatpush1.msra.mxu0 0.0
    %379 = vmatprep.subr.mxu0 0.0
    %380 = vmatpush1.msra.mxu0 0.0
    %381 = vmatprep.subr.mxu0 0.0
    %382 = vmatpush1.msra.mxu0 0.0
    %383 = vmatprep.subr.mxu0 0.0
    %384 = vmatpush1.msra.mxu0 0.0
    %385 = vmatprep.subr.mxu0 0.0
    %386 = vmatpush1.msra.mxu0 0.0
    %387 = vmatprep.subr.mxu0 0.0
    %388 = vmatpush1.msra.mxu0 0.0
    %389 = vmatprep.subr.mxu0 0.0
    %390 = vmatpush1.msra.mxu0 0.0
    %391 = vmatprep.subr.mxu0 0.0
    %392 = vmatpush1.msra.mxu0 0.0
    %393 = vmatprep.subr.mxu0 0.0
    %394 = vmatpush1.msra.mxu0 0.0
    %395 = vmatprep.subr.mxu0 0.0
    %396 = vmatpush1.msra.mxu0 0.0
    %397 = vmatprep.subr.mxu0 0.0
    %398 = vmatpush1.msra.mxu0 0.0
    %399 = vmatprep.subr.mxu0 0.0
    %400 = vmatpush1.msra.mxu0 0.0
    %401 = vmatprep.subr.mxu0 0.0
    %402 = vmatpush1.msra.mxu0 0.0
    %403 = vmatprep.subr.mxu0 0.0
    %404 = vmatpush1.msra.mxu0 0.0
    %405 = vmatprep.subr.mxu0 0.0
    %406 = vmatpush1.msra.mxu0 0.0
    %407 = vmatprep.subr.mxu0 0.0
    %408 = vmatpush1.msra.mxu0 0.0
    %409 = vmatprep.subr.mxu0 0.0
    %410 = vmatpush1.msra.mxu0 0.0
    %411 = vmatprep.subr.mxu0 0.0
    %412 = vmatpush1.msra.mxu0 0.0
    %413 = vmatprep.subr.mxu0 0.0
    %414 = vmatpush1.msra.mxu0 0.0
    %415 = vmatprep.mubr.f32.mxu0 0.0
    %416 = vmatmul.mubr.f32.gmra.mrb[0].mxu0 %v209
    %v417 = vpop.f32.mrb[0].mxu0
    %v418 = vadd.f32 %v159, %v417
    %v419 = vpop.f32.mrb[0].mxu0
    %420 = vdwg.mxu0
    %421 = vmatprep.subr.mxu0 0.0
    %422 = vmatpush1.msra.mxu0 %v88
    %423 = vmatprep.subr.mxu0 0.0
    %424 = vmatpush1.msra.mxu0 %v89
    %425 = vmatprep.subr.mxu0 0.0
    %426 = vmatpush1.msra.mxu0 %v90
    %427 = vmatprep.subr.mxu0 0.0
    %428 = vmatpush1.msra.mxu0 %v91
    %429 = vmatprep.subr.mxu0 0.0
    %430 = vmatpush1.msra.mxu0 0.0
    %431 = vmatprep.subr.mxu0 0.0
    %432 = vmatpush1.msra.mxu0 0.0
    %433 = vmatprep.subr.mxu0 0.0
    %434 = vmatpush1.msra.mxu0 0.0
    %435 = vmatprep.subr.mxu0 0.0
    %436 = vmatpush1.msra.mxu0 0.0
    %437 = vmatprep.subr.mxu0 0.0
    %438 = vmatpush1.msra.mxu0 0.0
    %439 = vmatprep.subr.mxu0 0.0
    %440 = vmatpush1.msra.mxu0 0.0
    %441 = vmatprep.subr.mxu0 0.0
    %442 = vmatpush1.msra.mxu0 0.0
    %443 = vmatprep.subr.mxu0 0.0
    %444 = vmatpush1.msra.mxu0 0.0
    %445 = vmatprep.subr.mxu0 0.0
    %446 = vmatpush1.msra.mxu0 0.0
    %447 = vmatprep.subr.mxu0 0.0
    %448 = vmatpush1.msra.mxu0 0.0
    %449 = vmatprep.subr.mxu0 0.0
    %450 = vmatpush1.msra.mxu0 0.0
    %451 = vmatprep.subr.mxu0 0.0
    %452 = vmatpush1.msra.mxu0 0.0
    %453 = vmatprep.subr.mxu0 0.0
    %454 = vmatpush1.msra.mxu0 0.0
    %455 = vmatprep.subr.mxu0 0.0
    %456 = vmatpush1.msra.mxu0 0.0
    %457 = vmatprep.subr.mxu0 0.0
    %458 = vmatpush1.msra.mxu0 0.0
    %459 = vmatprep.subr.mxu0 0.0
    %460 = vmatpush1.msra.mxu0 0.0
    %461 = vmatprep.subr.mxu0 0.0
    %462 = vmatpush1.msra.mxu0 0.0
    %463 = vmatprep.subr.mxu0 0.0
    %464 = vmatpush1.msra.mxu0 0.0
    %465 = vmatprep.subr.mxu0 0.0
    %466 = vmatpush1.msra.mxu0 0.0
    %467 = vmatprep.subr.mxu0 0.0
    %468 = vmatpush1.msra.mxu0 0.0
    %469 = vmatprep.subr.mxu0 0.0
    %470 = vmatpush1.msra.mxu0 0.0
    %471 = vmatprep.subr.mxu0 0.0
    %472 = vmatpush1.msra.mxu0 0.0
    %473 = vmatprep.subr.mxu0 0.0
    %474 = vmatpush1.msra.mxu0 0.0
    %475 = vmatprep.subr.mxu0 0.0
    %476 = vmatpush1.msra.mxu0 0.0
    %477 = vmatprep.subr.mxu0 0.0
    %478 = vmatpush1.msra.mxu0 0.0
    %479 = vmatprep.subr.mxu0 0.0
    %480 = vmatpush1.msra.mxu0 0.0
    %481 = vmatprep.subr.mxu0 0.0
    %482 = vmatpush1.msra.mxu0 0.0
    %483 = vmatprep.subr.mxu0 0.0
    %484 = vmatpush1.msra.mxu0 0.0
    %485 = vmatprep.mubr.f32.mxu0 0.0
    %486 = vmatmul.mubr.f32.gmra.mrb[0].mxu0 %v209
    %v487 = vpop.f32.mrb[0].mxu0
    %v488 = vadd.f32 %v163, %v487
    %v489 = vpop.f32.mrb[0].mxu0
    %490 = vdwg.mxu0
    %v492 = vsel %vm36, %v75, 0
    %494 = vmatprep.subr.mxu0 0.0
    %495 = vmatpush1.msra.mxu0 %v76
    %496 = vmatprep.subr.mxu0 0.0
    %497 = vmatpush1.msra.mxu0 %v77
    %498 = vmatprep.subr.mxu0 0.0
    %499 = vmatpush1.msra.mxu0 %v78
    %500 = vmatprep.subr.mxu0 0.0
    %501 = vmatpush1.msra.mxu0 %v79
    %502 = vmatprep.subr.mxu0 0.0
    %503 = vmatpush1.msra.mxu0 0.0
    %504 = vmatprep.subr.mxu0 0.0
    %505 = vmatpush1.msra.mxu0 0.0
    %506 = vmatprep.subr.mxu0 0.0
    %507 = vmatpush1.msra.mxu0 0.0
    %508 = vmatprep.subr.mxu0 0.0
    %509 = vmatpush1.msra.mxu0 0.0
    %510 = vmatprep.subr.mxu0 0.0
    %511 = vmatpush1.msra.mxu0 0.0
    %512 = vmatprep.subr.mxu0 0.0
    %513 = vmatpush1.msra.mxu0 0.0
    %514 = vmatprep.subr.mxu0 0.0
    %515 = vmatpush1.msra.mxu0 0.0
    %516 = vmatprep.subr.mxu0 0.0
    %517 = vmatpush1.msra.mxu0 0.0
    %518 = vmatprep.subr.mxu0 0.0
    %519 = vmatpush1.msra.mxu0 0.0
    %520 = vmatprep.subr.mxu0 0.0
    %521 = vmatpush1.msra.mxu0 0.0
    %522 = vmatprep.subr.mxu0 0.0
    %523 = vmatpush1.msra.mxu0 0.0
    %524 = vmatprep.subr.mxu0 0.0
    %525 = vmatpush1.msra.mxu0 0.0
    %526 = vmatprep.subr.mxu0 0.0
    %527 = vmatpush1.msra.mxu0 0.0
    %528 = vmatprep.subr.mxu0 0.0
    %529 = vmatpush1.msra.mxu0 0.0
    %530 = vmatprep.subr.mxu0 0.0
    %531 = vmatpush1.msra.mxu0 0.0
    %532 = vmatprep.subr.mxu0 0.0
    %533 = vmatpush1.msra.mxu0 0.0
    %534 = vmatprep.subr.mxu0 0.0
    %535 = vmatpush1.msra.mxu0 0.0
    %536 = vmatprep.subr.mxu0 0.0
    %537 = vmatpush1.msra.mxu0 0.0
    %538 = vmatprep.subr.mxu0 0.0
    %539 = vmatpush1.msra.mxu0 0.0
    %540 = vmatprep.subr.mxu0 0.0
    %541 = vmatpush1.msra.mxu0 0.0
    %542 = vmatprep.subr.mxu0 0.0
    %543 = vmatpush1.msra.mxu0 0.0
    %544 = vmatprep.subr.mxu0 0.0
    %545 = vmatpush1.msra.mxu0 0.0
    %546 = vmatprep.subr.mxu0 0.0
    %547 = vmatpush1.msra.mxu0 0.0
    %548 = vmatprep.subr.mxu0 0.0
    %549 = vmatpush1.msra.mxu0 0.0
    %550 = vmatprep.subr.mxu0 0.0
    %551 = vmatpush1.msra.mxu0 0.0
    %552 = vmatprep.subr.mxu0 0.0
    %553 = vmatpush1.msra.mxu0 0.0
    %554 = vmatprep.subr.mxu0 0.0
    %555 = vmatpush1.msra.mxu0 0.0
    %556 = vmatprep.subr.mxu0 0.0
    %557 = vmatpush1.msra.mxu0 0.0
    %558 = vmatprep.mubr.f32.mxu0 0.0
    %559 = vmatmul.mubr.f32.gmra.mrb[0].mxu0 %v492
    %v560 = vpop.f32.mrb[0].mxu0
    %v561 = vadd.f32 %v151, %v560
    %v562 = vpop.f32.mrb[0].mxu0
    %563 = vdwg.mxu0
    %564 = vmatprep.subr.mxu0 0.0
    %565 = vmatpush1.msra.mxu0 %v80
    %566 = vmatprep.subr.mxu0 0.0
    %567 = vmatpush1.msra.mxu0 %v81
    %568 = vmatprep.subr.mxu0 0.0
    %569 = vmatpush1.msra.mxu0 %v82
    %570 = vmatprep.subr.mxu0 0.0
    %571 = vmatpush1.msra.mxu0 %v83
    %572 = vmatprep.subr.mxu0 0.0
    %573 = vmatpush1.msra.mxu0 0.0
    %574 = vmatprep.subr.mxu0 0.0
    %575 = vmatpush1.msra.mxu0 0.0
    %576 = vmatprep.subr.mxu0 0.0
    %577 = vmatpush1.msra.mxu0 0.0
    %578 = vmatprep.subr.mxu0 0.0
    %579 = vmatpush1.msra.mxu0 0.0
    %580 = vmatprep.subr.mxu0 0.0
    %581 = vmatpush1.msra.mxu0 0.0
    %582 = vmatprep.subr.mxu0 0.0
    %583 = vmatpush1.msra.mxu0 0.0
    %584 = vmatprep.subr.mxu0 0.0
    %585 = vmatpush1.msra.mxu0 0.0
    %586 = vmatprep.subr.mxu0 0.0
    %587 = vmatpush1.msra.mxu0 0.0
    %588 = vmatprep.subr.mxu0 0.0
    %589 = vmatpush1.msra.mxu0 0.0
    %590 = vmatprep.subr.mxu0 0.0
    %591 = vmatpush1.msra.mxu0 0.0
    %592 = vmatprep.subr.mxu0 0.0
    %593 = vmatpush1.msra.mxu0 0.0
    %594 = vmatprep.subr.mxu0 0.0
    %595 = vmatpush1.msra.mxu0 0.0
    %596 = vmatprep.subr.mxu0 0.0
    %597 = vmatpush1.msra.mxu0 0.0
    %598 = vmatprep.subr.mxu0 0.0
    %599 = vmatpush1.msra.mxu0 0.0
    %600 = vmatprep.subr.mxu0 0.0
    %601 = vmatpush1.msra.mxu0 0.0
    %602 = vmatprep.subr.mxu0 0.0
    %603 = vmatpush1.msra.mxu0 0.0
    %604 = vmatprep.subr.mxu0 0.0
    %605 = vmatpush1.msra.mxu0 0.0
    %606 = vmatprep.subr.mxu0 0.0
    %607 = vmatpush1.msra.mxu0 0.0
    %608 = vmatprep.subr.mxu0 0.0
    %609 = vmatpush1.msra.mxu0 0.0
    %610 = vmatprep.subr.mxu0 0.0
    %611 = vmatpush1.msra.mxu0 0.0
    %612 = vmatprep.subr.mxu0 0.0
    %613 = vmatpush1.msra.mxu0 0.0
    %614 = vmatprep.subr.mxu0 0.0
    %615 = vmatpush1.msra.mxu0 0.0
    %616 = vmatprep.subr.mxu0 0.0
    %617 = vmatpush1.msra.mxu0 0.0
    %618 = vmatprep.subr.mxu0 0.0
    %619 = vmatpush1.msra.mxu0 0.0
    %620 = vmatprep.subr.mxu0 0.0
    %621 = vmatpush1.msra.mxu0 0.0
    %622 = vmatprep.subr.mxu0 0.0
    %623 = vmatpush1.msra.mxu0 0.0
    %624 = vmatprep.subr.mxu0 0.0
    %625 = vmatpush1.msra.mxu0 0.0
    %626 = vmatprep.subr.mxu0 0.0
    %627 = vmatpush1.msra.mxu0 0.0
    %628 = vmatprep.mubr.f32.mxu0 0.0
    %629 = vmatmul.mubr.f32.gmra.mrb[0].mxu0 %v492
    %v630 = vpop.f32.mrb[0].mxu0
    %v631 = vadd.f32 %v155, %v630
    %v632 = vpop.f32.mrb[0].mxu0
    %633 = vdwg.mxu0
    %634 = vmatprep.subr.mxu0 0.0
    %635 = vmatpush1.msra.mxu0 %v84
    %636 = vmatprep.subr.mxu0 0.0
    %637 = vmatpush1.msra.mxu0 %v85
    %638 = vmatprep.subr.mxu0 0.0
    %639 = vmatpush1.msra.mxu0 %v86
    %640 = vmatprep.subr.mxu0 0.0
    %641 = vmatpush1.msra.mxu0 %v87
    %642 = vmatprep.subr.mxu0 0.0
    %643 = vmatpush1.msra.mxu0 0.0
    %644 = vmatprep.subr.mxu0 0.0
    %645 = vmatpush1.msra.mxu0 0.0
    %646 = vmatprep.subr.mxu0 0.0
    %647 = vmatpush1.msra.mxu0 0.0
    %648 = vmatprep.subr.mxu0 0.0
    %649 = vmatpush1.msra.mxu0 0.0
    %650 = vmatprep.subr.mxu0 0.0
    %651 = vmatpush1.msra.mxu0 0.0
    %652 = vmatprep.subr.mxu0 0.0
    %653 = vmatpush1.msra.mxu0 0.0
    %654 = vmatprep.subr.mxu0 0.0
    %655 = vmatpush1.msra.mxu0 0.0
    %656 = vmatprep.subr.mxu0 0.0
    %657 = vmatpush1.msra.mxu0 0.0
    %658 = vmatprep.subr.mxu0 0.0
    %659 = vmatpush1.msra.mxu0 0.0
    %660 = vmatprep.subr.mxu0 0.0
    %661 = vmatpush1.msra.mxu0 0.0
    %662 = vmatprep.subr.mxu0 0.0
    %663 = vmatpush1.msra.mxu0 0.0
    %664 = vmatprep.subr.mxu0 0.0
    %665 = vmatpush1.msra.mxu0 0.0
    %666 = vmatprep.subr.mxu0 0.0
    %667 = vmatpush1.msra.mxu0 0.0
    %668 = vmatprep.subr.mxu0 0.0
    %669 = vmatpush1.msra.mxu0 0.0
    %670 = vmatprep.subr.mxu0 0.0
    %671 = vmatpush1.msra.mxu0 0.0
    %672 = vmatprep.subr.mxu0 0.0
    %673 = vmatpush1.msra.mxu0 0.0
    %674 = vmatprep.subr.mxu0 0.0
    %675 = vmatpush1.msra.mxu0 0.0
    %676 = vmatprep.subr.mxu0 0.0
    %677 = vmatpush1.msra.mxu0 0.0
    %678 = vmatprep.subr.mxu0 0.0
    %679 = vmatpush1.msra.mxu0 0.0
    %680 = vmatprep.subr.mxu0 0.0
    %681 = vmatpush1.msra.mxu0 0.0
    %682 = vmatprep.subr.mxu0 0.0
    %683 = vmatpush1.msra.mxu0 0.0
    %684 = vmatprep.subr.mxu0 0.0
    %685 = vmatpush1.msra.mxu0 0.0
    %686 = vmatprep.subr.mxu0 0.0
    %687 = vmatpush1.msra.mxu0 0.0
    %688 = vmatprep.subr.mxu0 0.0
    %689 = vmatpush1.msra.mxu0 0.0
    %690 = vmatprep.subr.mxu0 0.0
    %691 = vmatpush1.msra.mxu0 0.0
    %692 = vmatprep.subr.mxu0 0.0
    %693 = vmatpush1.msra.mxu0 0.0
    %694 = vmatprep.subr.mxu0 0.0
    %695 = vmatpush1.msra.mxu0 0.0
    %696 = vmatprep.subr.mxu0 0.0
    %697 = vmatpush1.msra.mxu0 0.0
    %698 = vmatprep.mubr.f32.mxu0 0.0
    %699 = vmatmul.mubr.f32.gmra.mrb[0].mxu0 %v492
    %v700 = vpop.f32.mrb[0].mxu0
    %v701 = vadd.f32 %v159, %v700
    %v702 = vpop.f32.mrb[0].mxu0
    %703 = vdwg.mxu0
    %704 = vmatprep.subr.mxu0 0.0
    %705 = vmatpush1.msra.mxu0 %v88
    %706 = vmatprep.subr.mxu0 0.0
    %707 = vmatpush1.msra.mxu0 %v89
    %708 = vmatprep.subr.mxu0 0.0
    %709 = vmatpush1.msra.mxu0 %v90
    %710 = vmatprep.subr.mxu0 0.0
    %711 = vmatpush1.msra.mxu0 %v91
    %712 = vmatprep.subr.mxu0 0.0
    %713 = vmatpush1.msra.mxu0 0.0
    %714 = vmatprep.subr.mxu0 0.0
    %715 = vmatpush1.msra.mxu0 0.0
    %716 = vmatprep.subr.mxu0 0.0
    %717 = vmatpush1.msra.mxu0 0.0
    %718 = vmatprep.subr.mxu0 0.0
    %719 = vmatpush1.msra.mxu0 0.0
    %720 = vmatprep.subr.mxu0 0.0
    %721 = vmatpush1.msra.mxu0 0.0
    %722 = vmatprep.subr.mxu0 0.0
    %723 = vmatpush1.msra.mxu0 0.0
    %724 = vmatprep.subr.mxu0 0.0
    %725 = vmatpush1.msra.mxu0 0.0
    %726 = vmatprep.subr.mxu0 0.0
    %727 = vmatpush1.msra.mxu0 0.0
    %728 = vmatprep.subr.mxu0 0.0
    %729 = vmatpush1.msra.mxu0 0.0
    %730 = vmatprep.subr.mxu0 0.0
    %731 = vmatpush1.msra.mxu0 0.0
    %732 = vmatprep.subr.mxu0 0.0
    %733 = vmatpush1.msra.mxu0 0.0
    %734 = vmatprep.subr.mxu0 0.0
    %735 = vmatpush1.msra.mxu0 0.0
    %736 = vmatprep.subr.mxu0 0.0
    %737 = vmatpush1.msra.mxu0 0.0
    %738 = vmatprep.subr.mxu0 0.0
    %739 = vmatpush1.msra.mxu0 0.0
    %740 = vmatprep.subr.mxu0 0.0
    %741 = vmatpush1.msra.mxu0 0.0
    %742 = vmatprep.subr.mxu0 0.0
    %743 = vmatpush1.msra.mxu0 0.0
    %744 = vmatprep.subr.mxu0 0.0
    %745 = vmatpush1.msra.mxu0 0.0
    %746 = vmatprep.subr.mxu0 0.0
    %747 = vmatpush1.msra.mxu0 0.0
    %748 = vmatprep.subr.mxu0 0.0
    %749 = vmatpush1.msra.mxu0 0.0
    %750 = vmatprep.subr.mxu0 0.0
    %751 = vmatpush1.msra.mxu0 0.0
    %752 = vmatprep.subr.mxu0 0.0
    %753 = vmatpush1.msra.mxu0 0.0
    %754 = vmatprep.subr.mxu0 0.0
    %755 = vmatpush1.msra.mxu0 0.0
    %756 = vmatprep.subr.mxu0 0.0
    %757 = vmatpush1.msra.mxu0 0.0
    %758 = vmatprep.subr.mxu0 0.0
    %759 = vmatpush1.msra.mxu0 0.0
    %760 = vmatprep.subr.mxu0 0.0
    %761 = vmatpush1.msra.mxu0 0.0
    %762 = vmatprep.subr.mxu0 0.0
    %763 = vmatpush1.msra.mxu0 0.0
    %764 = vmatprep.subr.mxu0 0.0
    %765 = vmatpush1.msra.mxu0 0.0
    %766 = vmatprep.subr.mxu0 0.0
    %767 = vmatpush1.msra.mxu0 0.0
    %768 = vmatprep.mubr.f32.mxu0 0.0
    %769 = vmatmul.mubr.f32.gmra.mrb[0].mxu0 %v492
    %v770 = vpop.f32.mrb[0].mxu0
    %v771 = vadd.f32 %v163, %v770
    %v772 = vpop.f32.mrb[0].mxu0
    %773 = vdwg.mxu0
    %774 = vmatprep.subr.mxu0 0.0
    %775 = vmatpush1.msra.mxu0 %v92
    %776 = vmatprep.subr.mxu0 0.0
    %777 = vmatpush1.msra.mxu0 %v93
    %778 = vmatprep.subr.mxu0 0.0
    %779 = vmatpush1.msra.mxu0 %v94
    %780 = vmatprep.subr.mxu0 0.0
    %781 = vmatpush1.msra.mxu0 %v95
    %782 = vmatprep.subr.mxu0 0.0
    %783 = vmatpush1.msra.mxu0 0.0
    %784 = vmatprep.subr.mxu0 0.0
    %785 = vmatpush1.msra.mxu0 0.0
    %786 = vmatprep.subr.mxu0 0.0
    %787 = vmatpush1.msra.mxu0 0.0
    %788 = vmatprep.subr.mxu0 0.0
    %789 = vmatpush1.msra.mxu0 0.0
    %790 = vmatprep.subr.mxu0 0.0
    %791 = vmatpush1.msra.mxu0 0.0
    %792 = vmatprep.subr.mxu0 0.0
    %793 = vmatpush1.msra.mxu0 0.0
    %794 = vmatprep.subr.mxu0 0.0
    %795 = vmatpush1.msra.mxu0 0.0
    %796 = vmatprep.subr.mxu0 0.0
    %797 = vmatpush1.msra.mxu0 0.0
    %798 = vmatprep.subr.mxu0 0.0
    %799 = vmatpush1.msra.mxu0 0.0
    %800 = vmatprep.subr.mxu0 0.0
    %801 = vmatpush1.msra.mxu0 0.0
    %802 = vmatprep.subr.mxu0 0.0
    %803 = vmatpush1.msra.mxu0 0.0
    %804 = vmatprep.subr.mxu0 0.0
    %805 = vmatpush1.msra.mxu0 0.0
    %806 = vmatprep.subr.mxu0 0.0
    %807 = vmatpush1.msra.mxu0 0.0
    %808 = vmatprep.subr.mxu0 0.0
    %809 = vmatpush1.msra.mxu0 0.0
    %810 = vmatprep.subr.mxu0 0.0
    %811 = vmatpush1.msra.mxu0 0.0
    %812 = vmatprep.subr.mxu0 0.0
    %813 = vmatpush1.msra.mxu0 0.0
    %814 = vmatprep.subr.mxu0 0.0
    %815 = vmatpush1.msra.mxu0 0.0
    %816 = vmatprep.subr.mxu0 0.0
    %817 = vmatpush1.msra.mxu0 0.0
    %818 = vmatprep.subr.mxu0 0.0
    %819 = vmatpush1.msra.mxu0 0.0
    %820 = vmatprep.subr.mxu0 0.0
    %821 = vmatpush1.msra.mxu0 0.0
    %822 = vmatprep.subr.mxu0 0.0
    %823 = vmatpush1.msra.mxu0 0.0
    %824 = vmatprep.subr.mxu0 0.0
    %825 = vmatpush1.msra.mxu0 0.0
    %826 = vmatprep.subr.mxu0 0.0
    %827 = vmatpush1.msra.mxu0 0.0
    %828 = vmatprep.subr.mxu0 0.0
    %829 = vmatpush1.msra.mxu0 0.0
    %830 = vmatprep.subr.mxu0 0.0
    %831 = vmatpush1.msra.mxu0 0.0
    %832 = vmatprep.subr.mxu0 0.0
    %833 = vmatpush1.msra.mxu0 0.0
    %834 = vmatprep.subr.mxu0 0.0
    %835 = vmatpush1.msra.mxu0 0.0
    %836 = vmatprep.subr.mxu0 0.0
    %837 = vmatpush1.msra.mxu0 0.0
    %838 = vmatprep.mubr.f32.mxu0 0.0
    %839 = vmatmul.mubr.f32.gmra.mrb[0].mxu0 %v209
    %v840 = vpop.f32.mrb[0].mxu0
    %v841 = vadd.f32 %v167, %v840
    %v842 = vpop.f32.mrb[0].mxu0
    %843 = vdwg.mxu0
    %844 = vmatprep.subr.mxu0 0.0
    %845 = vmatpush1.msra.mxu0 %v96
    %846 = vmatprep.subr.mxu0 0.0
    %847 = vmatpush1.msra.mxu0 %v97
    %848 = vmatprep.subr.mxu0 0.0
    %849 = vmatpush1.msra.mxu0 %v98
    %850 = vmatprep.subr.mxu0 0.0
    %851 = vmatpush1.msra.mxu0 %v99
    %852 = vmatprep.subr.mxu0 0.0
    %853 = vmatpush1.msra.mxu0 0.0
    %854 = vmatprep.subr.mxu0 0.0
    %855 = vmatpush1.msra.mxu0 0.0
    %856 = vmatprep.subr.mxu0 0.0
    %857 = vmatpush1.msra.mxu0 0.0
    %858 = vmatprep.subr.mxu0 0.0
    %859 = vmatpush1.msra.mxu0 0.0
    %860 = vmatprep.subr.mxu0 0.0
    %861 = vmatpush1.msra.mxu0 0.0
    %862 = vmatprep.subr.mxu0 0.0
    %863 = vmatpush1.msra.mxu0 0.0
    %864 = vmatprep.subr.mxu0 0.0
    %865 = vmatpush1.msra.mxu0 0.0
    %866 = vmatprep.subr.mxu0 0.0
    %867 = vmatpush1.msra.mxu0 0.0
    %868 = vmatprep.subr.mxu0 0.0
    %869 = vmatpush1.msra.mxu0 0.0
    %870 = vmatprep.subr.mxu0 0.0
    %871 = vmatpush1.msra.mxu0 0.0
    %872 = vmatprep.subr.mxu0 0.0
    %873 = vmatpush1.msra.mxu0 0.0
    %874 = vmatprep.subr.mxu0 0.0
    %875 = vmatpush1.msra.mxu0 0.0
    %876 = vmatprep.subr.mxu0 0.0
    %877 = vmatpush1.msra.mxu0 0.0
    %878 = vmatprep.subr.mxu0 0.0
    %879 = vmatpush1.msra.mxu0 0.0
    %880 = vmatprep.subr.mxu0 0.0
    %881 = vmatpush1.msra.mxu0 0.0
    %882 = vmatprep.subr.mxu0 0.0
    %883 = vmatpush1.msra.mxu0 0.0
    %884 = vmatprep.subr.mxu0 0.0
    %885 = vmatpush1.msra.mxu0 0.0
    %886 = vmatprep.subr.mxu0 0.0
    %887 = vmatpush1.msra.mxu0 0.0
    %888 = vmatprep.subr.mxu0 0.0
    %889 = vmatpush1.msra.mxu0 0.0
    %890 = vmatprep.subr.mxu0 0.0
    %891 = vmatpush1.msra.mxu0 0.0
    %892 = vmatprep.subr.mxu0 0.0
    %893 = vmatpush1.msra.mxu0 0.0
    %894 = vmatprep.subr.mxu0 0.0
    %895 = vmatpush1.msra.mxu0 0.0
    %896 = vmatprep.subr.mxu0 0.0
    %897 = vmatpush1.msra.mxu0 0.0
    %898 = vmatprep.subr.mxu0 0.0
    %899 = vmatpush1.msra.mxu0 0.0
    %900 = vmatprep.subr.mxu0 0.0
    %901 = vmatpush1.msra.mxu0 0.0
    %902 = vmatprep.subr.mxu0 0.0
    %903 = vmatpush1.msra.mxu0 0.0
    %904 = vmatprep.subr.mxu0 0.0
    %905 = vmatpush1.msra.mxu0 0.0
    %906 = vmatprep.subr.mxu0 0.0
    %907 = vmatpush1.msra.mxu0 0.0
    %908 = vmatprep.mubr.f32.mxu0 0.0
    %909 = vmatmul.mubr.f32.gmra.mrb[0].mxu0 %v209
    %v910 = vpop.f32.mrb[0].mxu0
    %v911 = vadd.f32 %v171, %v910
    %v912 = vpop.f32.mrb[0].mxu0
    %913 = vdwg.mxu0
    %914 = vmatprep.subr.mxu0 0.0
    %915 = vmatpush1.msra.mxu0 %v100
    %916 = vmatprep.subr.mxu0 0.0
    %917 = vmatpush1.msra.mxu0 %v101
    %918 = vmatprep.subr.mxu0 0.0
    %919 = vmatpush1.msra.mxu0 %v102
    %920 = vmatprep.subr.mxu0 0.0
    %921 = vmatpush1.msra.mxu0 %v103
    %922 = vmatprep.subr.mxu0 0.0
    %923 = vmatpush1.msra.mxu0 0.0
    %924 = vmatprep.subr.mxu0 0.0
    %925 = vmatpush1.msra.mxu0 0.0
    %926 = vmatprep.subr.mxu0 0.0
    %927 = vmatpush1.msra.mxu0 0.0
    %928 = vmatprep.subr.mxu0 0.0
    %929 = vmatpush1.msra.mxu0 0.0
    %930 = vmatprep.subr.mxu0 0.0
    %931 = vmatpush1.msra.mxu0 0.0
    %932 = vmatprep.subr.mxu0 0.0
    %933 = vmatpush1.msra.mxu0 0.0
    %934 = vmatprep.subr.mxu0 0.0
    %935 = vmatpush1.msra.mxu0 0.0
    %936 = vmatprep.subr.mxu0 0.0
    %937 = vmatpush1.msra.mxu0 0.0
    %938 = vmatprep.subr.mxu0 0.0
    %939 = vmatpush1.msra.mxu0 0.0
    %940 = vmatprep.subr.mxu0 0.0
    %941 = vmatpush1.msra.mxu0 0.0
    %942 = vmatprep.subr.mxu0 0.0
    %943 = vmatpush1.msra.mxu0 0.0
    %944 = vmatprep.subr.mxu0 0.0
    %945 = vmatpush1.msra.mxu0 0.0
    %946 = vmatprep.subr.mxu0 0.0
    %947 = vmatpush1.msra.mxu0 0.0
    %948 = vmatprep.subr.mxu0 0.0
    %949 = vmatpush1.msra.mxu0 0.0
    %950 = vmatprep.subr.mxu0 0.0
    %951 = vmatpush1.msra.mxu0 0.0
    %952 = vmatprep.subr.mxu0 0.0
    %953 = vmatpush1.msra.mxu0 0.0
    %954 = vmatprep.subr.mxu0 0.0
    %955 = vmatpush1.msra.mxu0 0.0
    %956 = vmatprep.subr.mxu0 0.0
    %957 = vmatpush1.msra.mxu0 0.0
    %958 = vmatprep.subr.mxu0 0.0
    %959 = vmatpush1.msra.mxu0 0.0
    %960 = vmatprep.subr.mxu0 0.0
    %961 = vmatpush1.msra.mxu0 0.0
    %962 = vmatprep.subr.mxu0 0.0
    %963 = vmatpush1.msra.mxu0 0.0
    %964 = vmatprep.subr.mxu0 0.0
    %965 = vmatpush1.msra.mxu0 0.0
    %966 = vmatprep.subr.mxu0 0.0
    %967 = vmatpush1.msra.mxu0 0.0
    %968 = vmatprep.subr.mxu0 0.0
    %969 = vmatpush1.msra.mxu0 0.0
    %970 = vmatprep.subr.mxu0 0.0
    %971 = vmatpush1.msra.mxu0 0.0
    %972 = vmatprep.subr.mxu0 0.0
    %973 = vmatpush1.msra.mxu0 0.0
    %974 = vmatprep.subr.mxu0 0.0
    %975 = vmatpush1.msra.mxu0 0.0
    %976 = vmatprep.subr.mxu0 0.0
    %977 = vmatpush1.msra.mxu0 0.0
    %978 = vmatprep.mubr.f32.mxu0 0.0
    %979 = vmatmul.mubr.f32.gmra.mrb[0].mxu0 %v209
    %v980 = vpop.f32.mrb[0].mxu0
    %v981 = vadd.f32 %v175, %v980
    %v982 = vpop.f32.mrb[0].mxu0
    %983 = vdwg.mxu0
    %984 = vmatprep.subr.mxu0 0.0
    %985 = vmatpush1.msra.mxu0 %v104
    %986 = vmatprep.subr.mxu0 0.0
    %987 = vmatpush1.msra.mxu0 %v105
    %988 = vmatprep.subr.mxu0 0.0
    %989 = vmatpush1.msra.mxu0 %v106
    %990 = vmatprep.subr.mxu0 0.0
    %991 = vmatpush1.msra.mxu0 %v107
    %992 = vmatprep.subr.mxu0 0.0
    %993 = vmatpush1.msra.mxu0 0.0
    %994 = vmatprep.subr.mxu0 0.0
    %995 = vmatpush1.msra.mxu0 0.0
    %996 = vmatprep.subr.mxu0 0.0
    %997 = vmatpush1.msra.mxu0 0.0
    %998 = vmatprep.subr.mxu0 0.0
    %999 = vmatpush1.msra.mxu0 0.0
    %1000 = vmatprep.subr.mxu0 0.0
    %1001 = vmatpush1.msra.mxu0 0.0
    %1002 = vmatprep.subr.mxu0 0.0
    %1003 = vmatpush1.msra.mxu0 0.0
    %1004 = vmatprep.subr.mxu0 0.0
    %1005 = vmatpush1.msra.mxu0 0.0
    %1006 = vmatprep.subr.mxu0 0.0
    %1007 = vmatpush1.msra.mxu0 0.0
    %1008 = vmatprep.subr.mxu0 0.0
    %1009 = vmatpush1.msra.mxu0 0.0
    %1010 = vmatprep.subr.mxu0 0.0
    %1011 = vmatpush1.msra.mxu0 0.0
    %1012 = vmatprep.subr.mxu0 0.0
    %1013 = vmatpush1.msra.mxu0 0.0
    %1014 = vmatprep.subr.mxu0 0.0
    %1015 = vmatpush1.msra.mxu0 0.0
    %1016 = vmatprep.subr.mxu0 0.0
    %1017 = vmatpush1.msra.mxu0 0.0
    %1018 = vmatprep.subr.mxu0 0.0
    %1019 = vmatpush1.msra.mxu0 0.0
    %1020 = vmatprep.subr.mxu0 0.0
    %1021 = vmatpush1.msra.mxu0 0.0
    %1022 = vmatprep.subr.mxu0 0.0
    %1023 = vmatpush1.msra.mxu0 0.0
    %1024 = vmatprep.subr.mxu0 0.0
    %1025 = vmatpush1.msra.mxu0 0.0
    %1026 = vmatprep.subr.mxu0 0.0
    %1027 = vmatpush1.msra.mxu0 0.0
    %1028 = vmatprep.subr.mxu0 0.0
    %1029 = vmatpush1.msra.mxu0 0.0
    %1030 = vmatprep.subr.mxu0 0.0
    %1031 = vmatpush1.msra.mxu0 0.0
    %1032 = vmatprep.subr.mxu0 0.0
    %1033 = vmatpush1.msra.mxu0 0.0
    %1034 = vmatprep.subr.mxu0 0.0
    %1035 = vmatpush1.msra.mxu0 0.0
    %1036 = vmatprep.subr.mxu0 0.0
    %1037 = vmatpush1.msra.mxu0 0.0
    %1038 = vmatprep.subr.mxu0 0.0
    %1039 = vmatpush1.msra.mxu0 0.0
    %1040 = vmatprep.subr.mxu0 0.0
    %1041 = vmatpush1.msra.mxu0 0.0
    %1042 = vmatprep.subr.mxu0 0.0
    %1043 = vmatpush1.msra.mxu0 0.0
    %1044 = vmatprep.subr.mxu0 0.0
    %1045 = vmatpush1.msra.mxu0 0.0
    %1046 = vmatprep.subr.mxu0 0.0
    %1047 = vmatpush1.msra.mxu0 0.0
    %1048 = vmatprep.mubr.f32.mxu0 0.0
    %1049 = vmatmul.mubr.f32.gmra.mrb[0].mxu0 %v209
    %v1050 = vpop.f32.mrb[0].mxu0
    %v1051 = vadd.f32 %v179, %v1050
    %v1052 = vpop.f32.mrb[0].mxu0
    %1053 = vdwg.mxu0
    %1054 = vmatprep.subr.mxu0 0.0
    %1055 = vmatpush1.msra.mxu0 %v92
    %1056 = vmatprep.subr.mxu0 0.0
    %1057 = vmatpush1.msra.mxu0 %v93
    %1058 = vmatprep.subr.mxu0 0.0
    %1059 = vmatpush1.msra.mxu0 %v94
    %1060 = vmatprep.subr.mxu0 0.0
    %1061 = vmatpush1.msra.mxu0 %v95
    %1062 = vmatprep.subr.mxu0 0.0
    %1063 = vmatpush1.msra.mxu0 0.0
    %1064 = vmatprep.subr.mxu0 0.0
    %1065 = vmatpush1.msra.mxu0 0.0
    %1066 = vmatprep.subr.mxu0 0.0
    %1067 = vmatpush1.msra.mxu0 0.0
    %1068 = vmatprep.subr.mxu0 0.0
    %1069 = vmatpush1.msra.mxu0 0.0
    %1070 = vmatprep.subr.mxu0 0.0
    %1071 = vmatpush1.msra.mxu0 0.0
    %1072 = vmatprep.subr.mxu0 0.0
    %1073 = vmatpush1.msra.mxu0 0.0
    %1074 = vmatprep.subr.mxu0 0.0
    %1075 = vmatpush1.msra.mxu0 0.0
    %1076 = vmatprep.subr.mxu0 0.0
    %1077 = vmatpush1.msra.mxu0 0.0
    %1078 = vmatprep.subr.mxu0 0.0
    %1079 = vmatpush1.msra.mxu0 0.0
    %1080 = vmatprep.subr.mxu0 0.0
    %1081 = vmatpush1.msra.mxu0 0.0
    %1082 = vmatprep.subr.mxu0 0.0
    %1083 = vmatpush1.msra.mxu0 0.0
    %1084 = vmatprep.subr.mxu0 0.0
    %1085 = vmatpush1.msra.mxu0 0.0
    %1086 = vmatprep.subr.mxu0 0.0
    %1087 = vmatpush1.msra.mxu0 0.0
    %1088 = vmatprep.subr.mxu0 0.0
    %1089 = vmatpush1.msra.mxu0 0.0
    %1090 = vmatprep.subr.mxu0 0.0
    %1091 = vmatpush1.msra.mxu0 0.0
    %1092 = vmatprep.subr.mxu0 0.0
    %1093 = vmatpush1.msra.mxu0 0.0
    %1094 = vmatprep.subr.mxu0 0.0
    %1095 = vmatpush1.msra.mxu0 0.0
    %1096 = vmatprep.subr.mxu0 0.0
    %1097 = vmatpush1.msra.mxu0 0.0
    %1098 = vmatprep.subr.mxu0 0.0
    %1099 = vmatpush1.msra.mxu0 0.0
    %1100 = vmatprep.subr.mxu0 0.0
    %1101 = vmatpush1.msra.mxu0 0.0
    %1102 = vmatprep.subr.mxu0 0.0
    %1103 = vmatpush1.msra.mxu0 0.0
    %1104 = vmatprep.subr.mxu0 0.0
    %1105 = vmatpush1.msra.mxu0 0.0
    %1106 = vmatprep.subr.mxu0 0.0
    %1107 = vmatpush1.msra.mxu0 0.0
    %1108 = vmatprep.subr.mxu0 0.0
    %1109 = vmatpush1.msra.mxu0 0.0
    %1110 = vmatprep.subr.mxu0 0.0
    %1111 = vmatpush1.msra.mxu0 0.0
    %1112 = vmatprep.subr.mxu0 0.0
    %1113 = vmatpush1.msra.mxu0 0.0
    %1114 = vmatprep.subr.mxu0 0.0
    %1115 = vmatpush1.msra.mxu0 0.0
    %1116 = vmatprep.subr.mxu0 0.0
    %1117 = vmatpush1.msra.mxu0 0.0
    %1118 = vmatprep.mubr.f32.mxu0 0.0
    %1119 = vmatmul.mubr.f32.gmra.mrb[0].mxu0 %v492
    %v1120 = vpop.f32.mrb[0].mxu0
    %v1121 = vadd.f32 %v167, %v1120
    %v1122 = vpop.f32.mrb[0].mxu0
    %1123 = vdwg.mxu0
    %1124 = vmatprep.subr.mxu0 0.0
    %1125 = vmatpush1.msra.mxu0 %v96
    %1126 = vmatprep.subr.mxu0 0.0
    %1127 = vmatpush1.msra.mxu0 %v97
    %1128 = vmatprep.subr.mxu0 0.0
    %1129 = vmatpush1.msra.mxu0 %v98
    %1130 = vmatprep.subr.mxu0 0.0
    %1131 = vmatpush1.msra.mxu0 %v99
    %1132 = vmatprep.subr.mxu0 0.0
    %1133 = vmatpush1.msra.mxu0 0.0
    %1134 = vmatprep.subr.mxu0 0.0
    %1135 = vmatpush1.msra.mxu0 0.0
    %1136 = vmatprep.subr.mxu0 0.0
    %1137 = vmatpush1.msra.mxu0 0.0
    %1138 = vmatprep.subr.mxu0 0.0
    %1139 = vmatpush1.msra.mxu0 0.0
    %1140 = vmatprep.subr.mxu0 0.0
    %1141 = vmatpush1.msra.mxu0 0.0
    %1142 = vmatprep.subr.mxu0 0.0
    %1143 = vmatpush1.msra.mxu0 0.0
    %1144 = vmatprep.subr.mxu0 0.0
    %1145 = vmatpush1.msra.mxu0 0.0
    %1146 = vmatprep.subr.mxu0 0.0
    %1147 = vmatpush1.msra.mxu0 0.0
    %1148 = vmatprep.subr.mxu0 0.0
    %1149 = vmatpush1.msra.mxu0 0.0
    %1150 = vmatprep.subr.mxu0 0.0
    %1151 = vmatpush1.msra.mxu0 0.0
    %1152 = vmatprep.subr.mxu0 0.0
    %1153 = vmatpush1.msra.mxu0 0.0
    %1154 = vmatprep.subr.mxu0 0.0
    %1155 = vmatpush1.msra.mxu0 0.0
    %1156 = vmatprep.subr.mxu0 0.0
    %1157 = vmatpush1.msra.mxu0 0.0
    %1158 = vmatprep.subr.mxu0 0.0
    %1159 = vmatpush1.msra.mxu0 0.0
    %1160 = vmatprep.subr.mxu0 0.0
    %1161 = vmatpush1.msra.mxu0 0.0
    %1162 = vmatprep.subr.mxu0 0.0
    %1163 = vmatpush1.msra.mxu0 0.0
    %1164 = vmatprep.subr.mxu0 0.0
    %1165 = vmatpush1.msra.mxu0 0.0
    %1166 = vmatprep.subr.mxu0 0.0
    %1167 = vmatpush1.msra.mxu0 0.0
    %1168 = vmatprep.subr.mxu0 0.0
    %1169 = vmatpush1.msra.mxu0 0.0
    %1170 = vmatprep.subr.mxu0 0.0
    %1171 = vmatpush1.msra.mxu0 0.0
    %1172 = vmatprep.subr.mxu0 0.0
    %1173 = vmatpush1.msra.mxu0 0.0
    %1174 = vmatprep.subr.mxu0 0.0
    %1175 = vmatpush1.msra.mxu0 0.0
    %1176 = vmatprep.subr.mxu0 0.0
    %1177 = vmatpush1.msra.mxu0 0.0
    %1178 = vmatprep.subr.mxu0 0.0
    %1179 = vmatpush1.msra.mxu0 0.0
    %1180 = vmatprep.subr.mxu0 0.0
    %1181 = vmatpush1.msra.mxu0 0.0
    %1182 = vmatprep.subr.mxu0 0.0
    %1183 = vmatpush1.msra.mxu0 0.0
    %1184 = vmatprep.subr.mxu0 0.0
    %1185 = vmatpush1.msra.mxu0 0.0
    %1186 = vmatprep.subr.mxu0 0.0
    %1187 = vmatpush1.msra.mxu0 0.0
    %1188 = vmatprep.mubr.f32.mxu0 0.0
    %1189 = vmatmul.mubr.f32.gmra.mrb[0].mxu0 %v492
    %v1190 = vpop.f32.mrb[0].mxu0
    %v1191 = vadd.f32 %v171, %v1190
    %v1192 = vpop.f32.mrb[0].mxu0
    %1193 = vdwg.mxu0
    %1194 = vmatprep.subr.mxu0 0.0
    %1195 = vmatpush1.msra.mxu0 %v100
    %1196 = vmatprep.subr.mxu0 0.0
    %1197 = vmatpush1.msra.mxu0 %v101
    %1198 = vmatprep.subr.mxu0 0.0
    %1199 = vmatpush1.msra.mxu0 %v102
    %1200 = vmatprep.subr.mxu0 0.0
    %1201 = vmatpush1.msra.mxu0 %v103
    %1202 = vmatprep.subr.mxu0 0.0
    %1203 = vmatpush1.msra.mxu0 0.0
    %1204 = vmatprep.subr.mxu0 0.0
    %1205 = vmatpush1.msra.mxu0 0.0
    %1206 = vmatprep.subr.mxu0 0.0
    %1207 = vmatpush1.msra.mxu0 0.0
    %1208 = vmatprep.subr.mxu0 0.0
    %1209 = vmatpush1.msra.mxu0 0.0
    %1210 = vmatprep.subr.mxu0 0.0
    %1211 = vmatpush1.msra.mxu0 0.0
    %1212 = vmatprep.subr.mxu0 0.0
    %1213 = vmatpush1.msra.mxu0 0.0
    %1214 = vmatprep.subr.mxu0 0.0
    %1215 = vmatpush1.msra.mxu0 0.0
    %1216 = vmatprep.subr.mxu0 0.0
    %1217 = vmatpush1.msra.mxu0 0.0
    %1218 = vmatprep.subr.mxu0 0.0
    %1219 = vmatpush1.msra.mxu0 0.0
    %1220 = vmatprep.subr.mxu0 0.0
    %1221 = vmatpush1.msra.mxu0 0.0
    %1222 = vmatprep.subr.mxu0 0.0
    %1223 = vmatpush1.msra.mxu0 0.0
    %1224 = vmatprep.subr.mxu0 0.0
    %1225 = vmatpush1.msra.mxu0 0.0
    %1226 = vmatprep.subr.mxu0 0.0
    %1227 = vmatpush1.msra.mxu0 0.0
    %1228 = vmatprep.subr.mxu0 0.0
    %1229 = vmatpush1.msra.mxu0 0.0
    %1230 = vmatprep.subr.mxu0 0.0
    %1231 = vmatpush1.msra.mxu0 0.0
    %1232 = vmatprep.subr.mxu0 0.0
    %1233 = vmatpush1.msra.mxu0 0.0
    %1234 = vmatprep.subr.mxu0 0.0
    %1235 = vmatpush1.msra.mxu0 0.0
    %1236 = vmatprep.subr.mxu0 0.0
    %1237 = vmatpush1.msra.mxu0 0.0
    %1238 = vmatprep.subr.mxu0 0.0
    %1239 = vmatpush1.msra.mxu0 0.0
    %1240 = vmatprep.subr.mxu0 0.0
    %1241 = vmatpush1.msra.mxu0 0.0
    %1242 = vmatprep.subr.mxu0 0.0
    %1243 = vmatpush1.msra.mxu0 0.0
    %1244 = vmatprep.subr.mxu0 0.0
    %1245 = vmatpush1.msra.mxu0 0.0
    %1246 = vmatprep.subr.mxu0 0.0
    %1247 = vmatpush1.msra.mxu0 0.0
    %1248 = vmatprep.subr.mxu0 0.0
    %1249 = vmatpush1.msra.mxu0 0.0
    %1250 = vmatprep.subr.mxu0 0.0
    %1251 = vmatpush1.msra.mxu0 0.0
    %1252 = vmatprep.subr.mxu0 0.0
    %1253 = vmatpush1.msra.mxu0 0.0
    %1254 = vmatprep.subr.mxu0 0.0
    %1255 = vmatpush1.msra.mxu0 0.0
    %1256 = vmatprep.subr.mxu0 0.0
    %1257 = vmatpush1.msra.mxu0 0.0
    %1258 = vmatprep.mubr.f32.mxu0 0.0
    %1259 = vmatmul.mubr.f32.gmra.mrb[0].mxu0 %v492
    %v1260 = vpop.f32.mrb[0].mxu0
    %v1261 = vadd.f32 %v175, %v1260
    %v1262 = vpop.f32.mrb[0].mxu0
    %1263 = vdwg.mxu0
    %1264 = vmatprep.subr.mxu0 0.0
    %1265 = vmatpush1.msra.mxu0 %v104
    %1266 = vmatprep.subr.mxu0 0.0
    %1267 = vmatpush1.msra.mxu0 %v105
    %1268 = vmatprep.subr.mxu0 0.0
    %1269 = vmatpush1.msra.mxu0 %v106
    %1270 = vmatprep.subr.mxu0 0.0
    %1271 = vmatpush1.msra.mxu0 %v107
    %1272 = vmatprep.subr.mxu0 0.0
    %1273 = vmatpush1.msra.mxu0 0.0
    %1274 = vmatprep.subr.mxu0 0.0
    %1275 = vmatpush1.msra.mxu0 0.0
    %1276 = vmatprep.subr.mxu0 0.0
    %1277 = vmatpush1.msra.mxu0 0.0
    %1278 = vmatprep.subr.mxu0 0.0
    %1279 = vmatpush1.msra.mxu0 0.0
    %1280 = vmatprep.subr.mxu0 0.0
    %1281 = vmatpush1.msra.mxu0 0.0
    %1282 = vmatprep.subr.mxu0 0.0
    %1283 = vmatpush1.msra.mxu0 0.0
    %1284 = vmatprep.subr.mxu0 0.0
    %1285 = vmatpush1.msra.mxu0 0.0
    %1286 = vmatprep.subr.mxu0 0.0
    %1287 = vmatpush1.msra.mxu0 0.0
    %1288 = vmatprep.subr.mxu0 0.0
    %1289 = vmatpush1.msra.mxu0 0.0
    %1290 = vmatprep.subr.mxu0 0.0
    %1291 = vmatpush1.msra.mxu0 0.0
    %1292 = vmatprep.subr.mxu0 0.0
    %1293 = vmatpush1.msra.mxu0 0.0
    %1294 = vmatprep.subr.mxu0 0.0
    %1295 = vmatpush1.msra.mxu0 0.0
    %1296 = vmatprep.subr.mxu0 0.0
    %1297 = vmatpush1.msra.mxu0 0.0
    %1298 = vmatprep.subr.mxu0 0.0
    %1299 = vmatpush1.msra.mxu0 0.0
    %1300 = vmatprep.subr.mxu0 0.0
    %1301 = vmatpush1.msra.mxu0 0.0
    %1302 = vmatprep.subr.mxu0 0.0
    %1303 = vmatpush1.msra.mxu0 0.0
    %1304 = vmatprep.subr.mxu0 0.0
    %1305 = vmatpush1.msra.mxu0 0.0
    %1306 = vmatprep.subr.mxu0 0.0
    %1307 = vmatpush1.msra.mxu0 0.0
    %1308 = vmatprep.subr.mxu0 0.0
    %1309 = vmatpush1.msra.mxu0 0.0
    %1310 = vmatprep.subr.mxu0 0.0
    %1311 = vmatpush1.msra.mxu0 0.0
    %1312 = vmatprep.subr.mxu0 0.0
    %1313 = vmatpush1.msra.mxu0 0.0
    %1314 = vmatprep.subr.mxu0 0.0
    %1315 = vmatpush1.msra.mxu0 0.0
    %1316 = vmatprep.subr.mxu0 0.0
    %1317 = vmatpush1.msra.mxu0 0.0
    %1318 = vmatprep.subr.mxu0 0.0
    %1319 = vmatpush1.msra.mxu0 0.0
    %1320 = vmatprep.subr.mxu0 0.0
    %1321 = vmatpush1.msra.mxu0 0.0
    %1322 = vmatprep.subr.mxu0 0.0
    %1323 = vmatpush1.msra.mxu0 0.0
    %1324 = vmatprep.subr.mxu0 0.0
    %1325 = vmatpush1.msra.mxu0 0.0
    %1326 = vmatprep.subr.mxu0 0.0
    %1327 = vmatpush1.msra.mxu0 0.0
    %1328 = vmatprep.mubr.f32.mxu0 0.0
    %1329 = vmatmul.mubr.f32.gmra.mrb[0].mxu0 %v492
    %v1330 = vpop.f32.mrb[0].mxu0
    %v1331 = vadd.f32 %v179, %v1330
    %v1332 = vpop.f32.mrb[0].mxu0
    %1333 = vdwg.mxu0
    %1334 = vmatprep.subr.mxu0 0.0
    %1335 = vmatpush1.msra.mxu0 %v108
    %1336 = vmatprep.subr.mxu0 0.0
    %1337 = vmatpush1.msra.mxu0 %v109
    %1338 = vmatprep.subr.mxu0 0.0
    %1339 = vmatpush1.msra.mxu0 %v110
    %1340 = vmatprep.subr.mxu0 0.0
    %1341 = vmatpush1.msra.mxu0 %v111
    %1342 = vmatprep.subr.mxu0 0.0
    %1343 = vmatpush1.msra.mxu0 0.0
    %1344 = vmatprep.subr.mxu0 0.0
    %1345 = vmatpush1.msra.mxu0 0.0
    %1346 = vmatprep.subr.mxu0 0.0
    %1347 = vmatpush1.msra.mxu0 0.0
    %1348 = vmatprep.subr.mxu0 0.0
    %1349 = vmatpush1.msra.mxu0 0.0
    %1350 = vmatprep.subr.mxu0 0.0
    %1351 = vmatpush1.msra.mxu0 0.0
    %1352 = vmatprep.subr.mxu0 0.0
    %1353 = vmatpush1.msra.mxu0 0.0
    %1354 = vmatprep.subr.mxu0 0.0
    %1355 = vmatpush1.msra.mxu0 0.0
    %1356 = vmatprep.subr.mxu0 0.0
    %1357 = vmatpush1.msra.mxu0 0.0
    %1358 = vmatprep.subr.mxu0 0.0
    %1359 = vmatpush1.msra.mxu0 0.0
    %1360 = vmatprep.subr.mxu0 0.0
    %1361 = vmatpush1.msra.mxu0 0.0
    %1362 = vmatprep.subr.mxu0 0.0
    %1363 = vmatpush1.msra.mxu0 0.0
    %1364 = vmatprep.subr.mxu0 0.0
    %1365 = vmatpush1.msra.mxu0 0.0
    %1366 = vmatprep.subr.mxu0 0.0
    %1367 = vmatpush1.msra.mxu0 0.0
    %1368 = vmatprep.subr.mxu0 0.0
    %1369 = vmatpush1.msra.mxu0 0.0
    %1370 = vmatprep.subr.mxu0 0.0
    %1371 = vmatpush1.msra.mxu0 0.0
    %1372 = vmatprep.subr.mxu0 0.0
    %1373 = vmatpush1.msra.mxu0 0.0
    %1374 = vmatprep.subr.mxu0 0.0
    %1375 = vmatpush1.msra.mxu0 0.0
    %1376 = vmatprep.subr.mxu0 0.0
    %1377 = vmatpush1.msra.mxu0 0.0
    %1378 = vmatprep.subr.mxu0 0.0
    %1379 = vmatpush1.msra.mxu0 0.0
    %1380 = vmatprep.subr.mxu0 0.0
    %1381 = vmatpush1.msra.mxu0 0.0
    %1382 = vmatprep.subr.mxu0 0.0
    %1383 = vmatpush1.msra.mxu0 0.0
    %1384 = vmatprep.subr.mxu0 0.0
    %1385 = vmatpush1.msra.mxu0 0.0
    %1386 = vmatprep.subr.mxu0 0.0
    %1387 = vmatpush1.msra.mxu0 0.0
    %1388 = vmatprep.subr.mxu0 0.0
    %1389 = vmatpush1.msra.mxu0 0.0
    %1390 = vmatprep.subr.mxu0 0.0
    %1391 = vmatpush1.msra.mxu0 0.0
    %1392 = vmatprep.subr.mxu0 0.0
    %1393 = vmatpush1.msra.mxu0 0.0
    %1394 = vmatprep.subr.mxu0 0.0
    %1395 = vmatpush1.msra.mxu0 0.0
    %1396 = vmatprep.subr.mxu0 0.0
    %1397 = vmatpush1.msra.mxu0 0.0
    %1398 = vmatprep.mubr.f32.mxu0 0.0
    %1399 = vmatmul.mubr.f32.gmra.mrb[0].mxu0 %v209
    %v1400 = vpop.f32.mrb[0].mxu0
    %v1401 = vadd.f32 %v183, %v1400
    %v1402 = vpop.f32.mrb[0].mxu0
    %1403 = vdwg.mxu0
    %1404 = vmatprep.subr.mxu0 0.0
    %1405 = vmatpush1.msra.mxu0 %v112
    %1406 = vmatprep.subr.mxu0 0.0
    %1407 = vmatpush1.msra.mxu0 %v113
    %1408 = vmatprep.subr.mxu0 0.0
    %1409 = vmatpush1.msra.mxu0 %v114
    %1410 = vmatprep.subr.mxu0 0.0
    %1411 = vmatpush1.msra.mxu0 %v115
    %1412 = vmatprep.subr.mxu0 0.0
    %1413 = vmatpush1.msra.mxu0 0.0
    %1414 = vmatprep.subr.mxu0 0.0
    %1415 = vmatpush1.msra.mxu0 0.0
    %1416 = vmatprep.subr.mxu0 0.0
    %1417 = vmatpush1.msra.mxu0 0.0
    %1418 = vmatprep.subr.mxu0 0.0
    %1419 = vmatpush1.msra.mxu0 0.0
    %1420 = vmatprep.subr.mxu0 0.0
    %1421 = vmatpush1.msra.mxu0 0.0
    %1422 = vmatprep.subr.mxu0 0.0
    %1423 = vmatpush1.msra.mxu0 0.0
    %1424 = vmatprep.subr.mxu0 0.0
    %1425 = vmatpush1.msra.mxu0 0.0
    %1426 = vmatprep.subr.mxu0 0.0
    %1427 = vmatpush1.msra.mxu0 0.0
    %1428 = vmatprep.subr.mxu0 0.0
    %1429 = vmatpush1.msra.mxu0 0.0
    %1430 = vmatprep.subr.mxu0 0.0
    %1431 = vmatpush1.msra.mxu0 0.0
    %1432 = vmatprep.subr.mxu0 0.0
    %1433 = vmatpush1.msra.mxu0 0.0
    %1434 = vmatprep.subr.mxu0 0.0
    %1435 = vmatpush1.msra.mxu0 0.0
    %1436 = vmatprep.subr.mxu0 0.0
    %1437 = vmatpush1.msra.mxu0 0.0
    %1438 = vmatprep.subr.mxu0 0.0
    %1439 = vmatpush1.msra.mxu0 0.0
    %1440 = vmatprep.subr.mxu0 0.0
    %1441 = vmatpush1.msra.mxu0 0.0
    %1442 = vmatprep.subr.mxu0 0.0
    %1443 = vmatpush1.msra.mxu0 0.0
    %1444 = vmatprep.subr.mxu0 0.0
    %1445 = vmatpush1.msra.mxu0 0.0
    %1446 = vmatprep.subr.mxu0 0.0
    %1447 = vmatpush1.msra.mxu0 0.0
    %1448 = vmatprep.subr.mxu0 0.0
    %1449 = vmatpush1.msra.mxu0 0.0
    %1450 = vmatprep.subr.mxu0 0.0
    %1451 = vmatpush1.msra.mxu0 0.0
    %1452 = vmatprep.subr.mxu0 0.0
    %1453 = vmatpush1.msra.mxu0 0.0
    %1454 = vmatprep.subr.mxu0 0.0
    %1455 = vmatpush1.msra.mxu0 0.0
    %1456 = vmatprep.subr.mxu0 0.0
    %1457 = vmatpush1.msra.mxu0 0.0
    %1458 = vmatprep.subr.mxu0 0.0
    %1459 = vmatpush1.msra.mxu0 0.0
    %1460 = vmatprep.subr.mxu0 0.0
    %1461 = vmatpush1.msra.mxu0 0.0
    %1462 = vmatprep.subr.mxu0 0.0
    %1463 = vmatpush1.msra.mxu0 0.0
    %1464 = vmatprep.subr.mxu0 0.0
    %1465 = vmatpush1.msra.mxu0 0.0
    %1466 = vmatprep.subr.mxu0 0.0
    %1467 = vmatpush1.msra.mxu0 0.0
    %1468 = vmatprep.mubr.f32.mxu0 0.0
    %1469 = vmatmul.mubr.f32.gmra.mrb[0].mxu0 %v209
    %v1470 = vpop.f32.mrb[0].mxu0
    %v1471 = vadd.f32 %v187, %v1470
    %v1472 = vpop.f32.mrb[0].mxu0
    %1473 = vdwg.mxu0
    %1474 = vmatprep.subr.mxu0 0.0
    %1475 = vmatpush1.msra.mxu0 %v116
    %1476 = vmatprep.subr.mxu0 0.0
    %1477 = vmatpush1.msra.mxu0 %v117
    %1478 = vmatprep.subr.mxu0 0.0
    %1479 = vmatpush1.msra.mxu0 %v118
    %1480 = vmatprep.subr.mxu0 0.0
    %1481 = vmatpush1.msra.mxu0 %v119
    %1482 = vmatprep.subr.mxu0 0.0
    %1483 = vmatpush1.msra.mxu0 0.0
    %1484 = vmatprep.subr.mxu0 0.0
    %1485 = vmatpush1.msra.mxu0 0.0
    %1486 = vmatprep.subr.mxu0 0.0
    %1487 = vmatpush1.msra.mxu0 0.0
    %1488 = vmatprep.subr.mxu0 0.0
    %1489 = vmatpush1.msra.mxu0 0.0
    %1490 = vmatprep.subr.mxu0 0.0
    %1491 = vmatpush1.msra.mxu0 0.0
    %1492 = vmatprep.subr.mxu0 0.0
    %1493 = vmatpush1.msra.mxu0 0.0
    %1494 = vmatprep.subr.mxu0 0.0
    %1495 = vmatpush1.msra.mxu0 0.0
    %1496 = vmatprep.subr.mxu0 0.0
    %1497 = vmatpush1.msra.mxu0 0.0
    %1498 = vmatprep.subr.mxu0 0.0
    %1499 = vmatpush1.msra.mxu0 0.0
    %1500 = vmatprep.subr.mxu0 0.0
    %1501 = vmatpush1.msra.mxu0 0.0
    %1502 = vmatprep.subr.mxu0 0.0
    %1503 = vmatpush1.msra.mxu0 0.0
    %1504 = vmatprep.subr.mxu0 0.0
    %1505 = vmatpush1.msra.mxu0 0.0
    %1506 = vmatprep.subr.mxu0 0.0
    %1507 = vmatpush1.msra.mxu0 0.0
    %1508 = vmatprep.subr.mxu0 0.0
    %1509 = vmatpush1.msra.mxu0 0.0
    %1510 = vmatprep.subr.mxu0 0.0
    %1511 = vmatpush1.msra.mxu0 0.0
    %1512 = vmatprep.subr.mxu0 0.0
    %1513 = vmatpush1.msra.mxu0 0.0
    %1514 = vmatprep.subr.mxu0 0.0
    %1515 = vmatpush1.msra.mxu0 0.0
    %1516 = vmatprep.subr.mxu0 0.0
    %1517 = vmatpush1.msra.mxu0 0.0
    %1518 = vmatprep.subr.mxu0 0.0
    %1519 = vmatpush1.msra.mxu0 0.0
    %1520 = vmatprep.subr.mxu0 0.0
    %1521 = vmatpush1.msra.mxu0 0.0
    %1522 = vmatprep.subr.mxu0 0.0
    %1523 = vmatpush1.msra.mxu0 0.0
    %1524 = vmatprep.subr.mxu0 0.0
    %1525 = vmatpush1.msra.mxu0 0.0
    %1526 = vmatprep.subr.mxu0 0.0
    %1527 = vmatpush1.msra.mxu0 0.0
    %1528 = vmatprep.subr.mxu0 0.0
    %1529 = vmatpush1.msra.mxu0 0.0
    %1530 = vmatprep.subr.mxu0 0.0
    %1531 = vmatpush1.msra.mxu0 0.0
    %1532 = vmatprep.subr.mxu0 0.0
    %1533 = vmatpush1.msra.mxu0 0.0
    %1534 = vmatprep.subr.mxu0 0.0
    %1535 = vmatpush1.msra.mxu0 0.0
    %1536 = vmatprep.subr.mxu0 0.0
    %1537 = vmatpush1.msra.mxu0 0.0
    %1538 = vmatprep.mubr.f32.mxu0 0.0
    %1539 = vmatmul.mubr.f32.gmra.mrb[0].mxu0 %v209
    %v1540 = vpop.f32.mrb[0].mxu0
    %v1541 = vadd.f32 %v191, %v1540
    %v1542 = vpop.f32.mrb[0].mxu0
    %1543 = vdwg.mxu0
    %1544 = vmatprep.subr.mxu0 0.0
    %1545 = vmatpush1.msra.mxu0 %v120
    %1546 = vmatprep.subr.mxu0 0.0
    %1547 = vmatpush1.msra.mxu0 %v121
    %1548 = vmatprep.subr.mxu0 0.0
    %1549 = vmatpush1.msra.mxu0 %v122
    %1550 = vmatprep.subr.mxu0 0.0
    %1551 = vmatpush1.msra.mxu0 %v123
    %1552 = vmatprep.subr.mxu0 0.0
    %1553 = vmatpush1.msra.mxu0 0.0
    %1554 = vmatprep.subr.mxu0 0.0
    %1555 = vmatpush1.msra.mxu0 0.0
    %1556 = vmatprep.subr.mxu0 0.0
    %1557 = vmatpush1.msra.mxu0 0.0
    %1558 = vmatprep.subr.mxu0 0.0
    %1559 = vmatpush1.msra.mxu0 0.0
    %1560 = vmatprep.subr.mxu0 0.0
    %1561 = vmatpush1.msra.mxu0 0.0
    %1562 = vmatprep.subr.mxu0 0.0
    %1563 = vmatpush1.msra.mxu0 0.0
    %1564 = vmatprep.subr.mxu0 0.0
    %1565 = vmatpush1.msra.mxu0 0.0
    %1566 = vmatprep.subr.mxu0 0.0
    %1567 = vmatpush1.msra.mxu0 0.0
    %1568 = vmatprep.subr.mxu0 0.0
    %1569 = vmatpush1.msra.mxu0 0.0
    %1570 = vmatprep.subr.mxu0 0.0
    %1571 = vmatpush1.msra.mxu0 0.0
    %1572 = vmatprep.subr.mxu0 0.0
    %1573 = vmatpush1.msra.mxu0 0.0
    %1574 = vmatprep.subr.mxu0 0.0
    %1575 = vmatpush1.msra.mxu0 0.0
    %1576 = vmatprep.subr.mxu0 0.0
    %1577 = vmatpush1.msra.mxu0 0.0
    %1578 = vmatprep.subr.mxu0 0.0
    %1579 = vmatpush1.msra.mxu0 0.0
    %1580 = vmatprep.subr.mxu0 0.0
    %1581 = vmatpush1.msra.mxu0 0.0
    %1582 = vmatprep.subr.mxu0 0.0
    %1583 = vmatpush1.msra.mxu0 0.0
    %1584 = vmatprep.subr.mxu0 0.0
    %1585 = vmatpush1.msra.mxu0 0.0
    %1586 = vmatprep.subr.mxu0 0.0
    %1587 = vmatpush1.msra.mxu0 0.0
    %1588 = vmatprep.subr.mxu0 0.0
    %1589 = vmatpush1.msra.mxu0 0.0
    %1590 = vmatprep.subr.mxu0 0.0
    %1591 = vmatpush1.msra.mxu0 0.0
    %1592 = vmatprep.subr.mxu0 0.0
    %1593 = vmatpush1.msra.mxu0 0.0
    %1594 = vmatprep.subr.mxu0 0.0
    %1595 = vmatpush1.msra.mxu0 0.0
    %1596 = vmatprep.subr.mxu0 0.0
    %1597 = vmatpush1.msra.mxu0 0.0
    %1598 = vmatprep.subr.mxu0 0.0
    %1599 = vmatpush1.msra.mxu0 0.0
    %1600 = vmatprep.subr.mxu0 0.0
    %1601 = vmatpush1.msra.mxu0 0.0
    %1602 = vmatprep.subr.mxu0 0.0
    %1603 = vmatpush1.msra.mxu0 0.0
    %1604 = vmatprep.subr.mxu0 0.0
    %1605 = vmatpush1.msra.mxu0 0.0
    %1606 = vmatprep.subr.mxu0 0.0
    %1607 = vmatpush1.msra.mxu0 0.0
    %1608 = vmatprep.mubr.f32.mxu0 0.0
    %1609 = vmatmul.mubr.f32.gmra.mrb[0].mxu0 %v209
    %v1610 = vpop.f32.mrb[0].mxu0
    %v1611 = vadd.f32 %v195, %v1610
    %v1612 = vpop.f32.mrb[0].mxu0
    %1613 = vdwg.mxu0
    %1614 = vmatprep.subr.mxu0 0.0
    %1615 = vmatpush1.msra.mxu0 %v108
    %1616 = vmatprep.subr.mxu0 0.0
    %1617 = vmatpush1.msra.mxu0 %v109
    %1618 = vmatprep.subr.mxu0 0.0
    %1619 = vmatpush1.msra.mxu0 %v110
    %1620 = vmatprep.subr.mxu0 0.0
    %1621 = vmatpush1.msra.mxu0 %v111
    %1622 = vmatprep.subr.mxu0 0.0
    %1623 = vmatpush1.msra.mxu0 0.0
    %1624 = vmatprep.subr.mxu0 0.0
    %1625 = vmatpush1.msra.mxu0 0.0
    %1626 = vmatprep.subr.mxu0 0.0
    %1627 = vmatpush1.msra.mxu0 0.0
    %1628 = vmatprep.subr.mxu0 0.0
    %1629 = vmatpush1.msra.mxu0 0.0
    %1630 = vmatprep.subr.mxu0 0.0
    %1631 = vmatpush1.msra.mxu0 0.0
    %1632 = vmatprep.subr.mxu0 0.0
    %1633 = vmatpush1.msra.mxu0 0.0
    %1634 = vmatprep.subr.mxu0 0.0
    %1635 = vmatpush1.msra.mxu0 0.0
    %1636 = vmatprep.subr.mxu0 0.0
    %1637 = vmatpush1.msra.mxu0 0.0
    %1638 = vmatprep.subr.mxu0 0.0
    %1639 = vmatpush1.msra.mxu0 0.0
    %1640 = vmatprep.subr.mxu0 0.0
    %1641 = vmatpush1.msra.mxu0 0.0
    %1642 = vmatprep.subr.mxu0 0.0
    %1643 = vmatpush1.msra.mxu0 0.0
    %1644 = vmatprep.subr.mxu0 0.0
    %1645 = vmatpush1.msra.mxu0 0.0
    %1646 = vmatprep.subr.mxu0 0.0
    %1647 = vmatpush1.msra.mxu0 0.0
    %1648 = vmatprep.subr.mxu0 0.0
    %1649 = vmatpush1.msra.mxu0 0.0
    %1650 = vmatprep.subr.mxu0 0.0
    %1651 = vmatpush1.msra.mxu0 0.0
    %1652 = vmatprep.subr.mxu0 0.0
    %1653 = vmatpush1.msra.mxu0 0.0
    %1654 = vmatprep.subr.mxu0 0.0
    %1655 = vmatpush1.msra.mxu0 0.0
    %1656 = vmatprep.subr.mxu0 0.0
    %1657 = vmatpush1.msra.mxu0 0.0
    %1658 = vmatprep.subr.mxu0 0.0
    %1659 = vmatpush1.msra.mxu0 0.0
    %1660 = vmatprep.subr.mxu0 0.0
    %1661 = vmatpush1.msra.mxu0 0.0
    %1662 = vmatprep.subr.mxu0 0.0
    %1663 = vmatpush1.msra.mxu0 0.0
    %1664 = vmatprep.subr.mxu0 0.0
    %1665 = vmatpush1.msra.mxu0 0.0
    %1666 = vmatprep.subr.mxu0 0.0
    %1667 = vmatpush1.msra.mxu0 0.0
    %1668 = vmatprep.subr.mxu0 0.0
    %1669 = vmatpush1.msra.mxu0 0.0
    %1670 = vmatprep.subr.mxu0 0.0
    %1671 = vmatpush1.msra.mxu0 0.0
    %1672 = vmatprep.subr.mxu0 0.0
    %1673 = vmatpush1.msra.mxu0 0.0
    %1674 = vmatprep.subr.mxu0 0.0
    %1675 = vmatpush1.msra.mxu0 0.0
    %1676 = vmatprep.subr.mxu0 0.0
    %1677 = vmatpush1.msra.mxu0 0.0
    %1678 = vmatprep.mubr.f32.mxu0 0.0
    %1679 = vmatmul.mubr.f32.gmra.mrb[0].mxu0 %v492
    %v1680 = vpop.f32.mrb[0].mxu0
    %v1681 = vadd.f32 %v183, %v1680
    %v1682 = vpop.f32.mrb[0].mxu0
    %1683 = vdwg.mxu0
    %1684 = vmatprep.subr.mxu0 0.0
    %1685 = vmatpush1.msra.mxu0 %v112
    %1686 = vmatprep.subr.mxu0 0.0
    %1687 = vmatpush1.msra.mxu0 %v113
    %1688 = vmatprep.subr.mxu0 0.0
    %1689 = vmatpush1.msra.mxu0 %v114
    %1690 = vmatprep.subr.mxu0 0.0
    %1691 = vmatpush1.msra.mxu0 %v115
    %1692 = vmatprep.subr.mxu0 0.0
    %1693 = vmatpush1.msra.mxu0 0.0
    %1694 = vmatprep.subr.mxu0 0.0
    %1695 = vmatpush1.msra.mxu0 0.0
    %1696 = vmatprep.subr.mxu0 0.0
    %1697 = vmatpush1.msra.mxu0 0.0
    %1698 = vmatprep.subr.mxu0 0.0
    %1699 = vmatpush1.msra.mxu0 0.0
    %1700 = vmatprep.subr.mxu0 0.0
    %1701 = vmatpush1.msra.mxu0 0.0
    %1702 = vmatprep.subr.mxu0 0.0
    %1703 = vmatpush1.msra.mxu0 0.0
    %1704 = vmatprep.subr.mxu0 0.0
    %1705 = vmatpush1.msra.mxu0 0.0
    %1706 = vmatprep.subr.mxu0 0.0
    %1707 = vmatpush1.msra.mxu0 0.0
    %1708 = vmatprep.subr.mxu0 0.0
    %1709 = vmatpush1.msra.mxu0 0.0
    %1710 = vmatprep.subr.mxu0 0.0
    %1711 = vmatpush1.msra.mxu0 0.0
    %1712 = vmatprep.subr.mxu0 0.0
    %1713 = vmatpush1.msra.mxu0 0.0
    %1714 = vmatprep.subr.mxu0 0.0
    %1715 = vmatpush1.msra.mxu0 0.0
    %1716 = vmatprep.subr.mxu0 0.0
    %1717 = vmatpush1.msra.mxu0 0.0
    %1718 = vmatprep.subr.mxu0 0.0
    %1719 = vmatpush1.msra.mxu0 0.0
    %1720 = vmatprep.subr.mxu0 0.0
    %1721 = vmatpush1.msra.mxu0 0.0
    %1722 = vmatprep.subr.mxu0 0.0
    %1723 = vmatpush1.msra.mxu0 0.0
    %1724 = vmatprep.subr.mxu0 0.0
    %1725 = vmatpush1.msra.mxu0 0.0
    %1726 = vmatprep.subr.mxu0 0.0
    %1727 = vmatpush1.msra.mxu0 0.0
    %1728 = vmatprep.subr.mxu0 0.0
    %1729 = vmatpush1.msra.mxu0 0.0
    %1730 = vmatprep.subr.mxu0 0.0
    %1731 = vmatpush1.msra.mxu0 0.0
    %1732 = vmatprep.subr.mxu0 0.0
    %1733 = vmatpush1.msra.mxu0 0.0
    %1734 = vmatprep.subr.mxu0 0.0
    %1735 = vmatpush1.msra.mxu0 0.0
    %1736 = vmatprep.subr.mxu0 0.0
    %1737 = vmatpush1.msra.mxu0 0.0
    %1738 = vmatprep.subr.mxu0 0.0
    %1739 = vmatpush1.msra.mxu0 0.0
    %1740 = vmatprep.subr.mxu0 0.0
    %1741 = vmatpush1.msra.mxu0 0.0
    %1742 = vmatprep.subr.mxu0 0.0
    %1743 = vmatpush1.msra.mxu0 0.0
    %1744 = vmatprep.subr.mxu0 0.0
    %1745 = vmatpush1.msra.mxu0 0.0
    %1746 = vmatprep.subr.mxu0 0.0
    %1747 = vmatpush1.msra.mxu0 0.0
    %1748 = vmatprep.mubr.f32.mxu0 0.0
    %1749 = vmatmul.mubr.f32.gmra.mrb[0].mxu0 %v492
    %v1750 = vpop.f32.mrb[0].mxu0
    %v1751 = vadd.f32 %v187, %v1750
    %v1752 = vpop.f32.mrb[0].mxu0
    %1753 = vdwg.mxu0
    %1754 = vmatprep.subr.mxu0 0.0
    %1755 = vmatpush1.msra.mxu0 %v116
    %1756 = vmatprep.subr.mxu0 0.0
    %1757 = vmatpush1.msra.mxu0 %v117
    %1758 = vmatprep.subr.mxu0 0.0
    %1759 = vmatpush1.msra.mxu0 %v118
    %1760 = vmatprep.subr.mxu0 0.0
    %1761 = vmatpush1.msra.mxu0 %v119
    %1762 = vmatprep.subr.mxu0 0.0
    %1763 = vmatpush1.msra.mxu0 0.0
    %1764 = vmatprep.subr.mxu0 0.0
    %1765 = vmatpush1.msra.mxu0 0.0
    %1766 = vmatprep.subr.mxu0 0.0
    %1767 = vmatpush1.msra.mxu0 0.0
    %1768 = vmatprep.subr.mxu0 0.0
    %1769 = vmatpush1.msra.mxu0 0.0
    %1770 = vmatprep.subr.mxu0 0.0
    %1771 = vmatpush1.msra.mxu0 0.0
    %1772 = vmatprep.subr.mxu0 0.0
    %1773 = vmatpush1.msra.mxu0 0.0
    %1774 = vmatprep.subr.mxu0 0.0
    %1775 = vmatpush1.msra.mxu0 0.0
    %1776 = vmatprep.subr.mxu0 0.0
    %1777 = vmatpush1.msra.mxu0 0.0
    %1778 = vmatprep.subr.mxu0 0.0
    %1779 = vmatpush1.msra.mxu0 0.0
    %1780 = vmatprep.subr.mxu0 0.0
    %1781 = vmatpush1.msra.mxu0 0.0
    %1782 = vmatprep.subr.mxu0 0.0
    %1783 = vmatpush1.msra.mxu0 0.0
    %1784 = vmatprep.subr.mxu0 0.0
    %1785 = vmatpush1.msra.mxu0 0.0
    %1786 = vmatprep.subr.mxu0 0.0
    %1787 = vmatpush1.msra.mxu0 0.0
    %1788 = vmatprep.subr.mxu0 0.0
    %1789 = vmatpush1.msra.mxu0 0.0
    %1790 = vmatprep.subr.mxu0 0.0
    %1791 = vmatpush1.msra.mxu0 0.0
    %1792 = vmatprep.subr.mxu0 0.0
    %1793 = vmatpush1.msra.mxu0 0.0
    %1794 = vmatprep.subr.mxu0 0.0
    %1795 = vmatpush1.msra.mxu0 0.0
    %1796 = vmatprep.subr.mxu0 0.0
    %1797 = vmatpush1.msra.mxu0 0.0
    %1798 = vmatprep.subr.mxu0 0.0
    %1799 = vmatpush1.msra.mxu0 0.0
    %1800 = vmatprep.subr.mxu0 0.0
    %1801 = vmatpush1.msra.mxu0 0.0
    %1802 = vmatprep.subr.mxu0 0.0
    %1803 = vmatpush1.msra.mxu0 0.0
    %1804 = vmatprep.subr.mxu0 0.0
    %1805 = vmatpush1.msra.mxu0 0.0
    %1806 = vmatprep.subr.mxu0 0.0
    %1807 = vmatpush1.msra.mxu0 0.0
    %1808 = vmatprep.subr.mxu0 0.0
    %1809 = vmatpush1.msra.mxu0 0.0
    %1810 = vmatprep.subr.mxu0 0.0
    %1811 = vmatpush1.msra.mxu0 0.0
    %1812 = vmatprep.subr.mxu0 0.0
    %1813 = vmatpush1.msra.mxu0 0.0
    %1814 = vmatprep.subr.mxu0 0.0
    %1815 = vmatpush1.msra.mxu0 0.0
    %1816 = vmatprep.subr.mxu0 0.0
    %1817 = vmatpush1.msra.mxu0 0.0
    %1818 = vmatprep.mubr.f32.mxu0 0.0
    %1819 = vmatmul.mubr.f32.gmra.mrb[0].mxu0 %v492
    %v1820 = vpop.f32.mrb[0].mxu0
    %v1821 = vadd.f32 %v191, %v1820
    %v1822 = vpop.f32.mrb[0].mxu0
    %1823 = vdwg.mxu0
    %1824 = vmatprep.subr.mxu0 0.0
    %1825 = vmatpush1.msra.mxu0 %v120
    %1826 = vmatprep.subr.mxu0 0.0
    %1827 = vmatpush1.msra.mxu0 %v121
    %1828 = vmatprep.subr.mxu0 0.0
    %1829 = vmatpush1.msra.mxu0 %v122
    %1830 = vmatprep.subr.mxu0 0.0
    %1831 = vmatpush1.msra.mxu0 %v123
    %1832 = vmatprep.subr.mxu0 0.0
    %1833 = vmatpush1.msra.mxu0 0.0
    %1834 = vmatprep.subr.mxu0 0.0
    %1835 = vmatpush1.msra.mxu0 0.0
    %1836 = vmatprep.subr.mxu0 0.0
    %1837 = vmatpush1.msra.mxu0 0.0
    %1838 = vmatprep.subr.mxu0 0.0
    %1839 = vmatpush1.msra.mxu0 0.0
    %1840 = vmatprep.subr.mxu0 0.0
    %1841 = vmatpush1.msra.mxu0 0.0
    %1842 = vmatprep.subr.mxu0 0.0
    %1843 = vmatpush1.msra.mxu0 0.0
    %1844 = vmatprep.subr.mxu0 0.0
    %1845 = vmatpush1.msra.mxu0 0.0
    %1846 = vmatprep.subr.mxu0 0.0
    %1847 = vmatpush1.msra.mxu0 0.0
    %1848 = vmatprep.subr.mxu0 0.0
    %1849 = vmatpush1.msra.mxu0 0.0
    %1850 = vmatprep.subr.mxu0 0.0
    %1851 = vmatpush1.msra.mxu0 0.0
    %1852 = vmatprep.subr.mxu0 0.0
    %1853 = vmatpush1.msra.mxu0 0.0
    %1854 = vmatprep.subr.mxu0 0.0
    %1855 = vmatpush1.msra.mxu0 0.0
    %1856 = vmatprep.subr.mxu0 0.0
    %1857 = vmatpush1.msra.mxu0 0.0
    %1858 = vmatprep.subr.mxu0 0.0
    %1859 = vmatpush1.msra.mxu0 0.0
    %1860 = vmatprep.subr.mxu0 0.0
    %1861 = vmatpush1.msra.mxu0 0.0
    %1862 = vmatprep.subr.mxu0 0.0
    %1863 = vmatpush1.msra.mxu0 0.0
    %1864 = vmatprep.subr.mxu0 0.0
    %1865 = vmatpush1.msra.mxu0 0.0
    %1866 = vmatprep.subr.mxu0 0.0
    %1867 = vmatpush1.msra.mxu0 0.0
    %1868 = vmatprep.subr.mxu0 0.0
    %1869 = vmatpush1.msra.mxu0 0.0
    %1870 = vmatprep.subr.mxu0 0.0
    %1871 = vmatpush1.msra.mxu0 0.0
    %1872 = vmatprep.subr.mxu0 0.0
    %1873 = vmatpush1.msra.mxu0 0.0
    %1874 = vmatprep.subr.mxu0 0.0
    %1875 = vmatpush1.msra.mxu0 0.0
    %1876 = vmatprep.subr.mxu0 0.0
    %1877 = vmatpush1.msra.mxu0 0.0
    %1878 = vmatprep.subr.mxu0 0.0
    %1879 = vmatpush1.msra.mxu0 0.0
    %1880 = vmatprep.subr.mxu0 0.0
    %1881 = vmatpush1.msra.mxu0 0.0
    %1882 = vmatprep.subr.mxu0 0.0
    %1883 = vmatpush1.msra.mxu0 0.0
    %1884 = vmatprep.subr.mxu0 0.0
    %1885 = vmatpush1.msra.mxu0 0.0
    %1886 = vmatprep.subr.mxu0 0.0
    %1887 = vmatpush1.msra.mxu0 0.0
    %1888 = vmatprep.mubr.f32.mxu0 0.0
    %1889 = vmatmul.mubr.f32.gmra.mrb[0].mxu0 %v492
    %v1890 = vpop.f32.mrb[0].mxu0
    %v1891 = vadd.f32 %v195, %v1890
    %v1892 = vpop.f32.mrb[0].mxu0
    %1893 = vdwg.mxu0
    %v1894 = vld [vmem:[%s1] sm:$0xff]
    %v1895 = vld [vmem:[%s1 + $0x8] sm:$0xff]
    %vm1896 = vcmask 64512
    %v1898 = vsel %vm1896, %v278, 0
    %v1901 = vsel %vm1896, %v841, 0
    %1903 = vmatprep.subr.mxu0 0.0
    %1904 = vmatpush1.xpose.msra.mxu0 %v1901
    %1905 = vmatprep.subr.mxu0 0.0
    %1906 = vmatpush1.xpose.msra.mxu0 0.0
    %1907 = vmatprep.subr.mxu0 0.0
    %1908 = vmatpush1.xpose.msra.mxu0 0.0
    %1909 = vmatprep.subr.mxu0 0.0
    %1910 = vmatpush1.xpose.msra.mxu0 0.0
    %1911 = vmatprep.subr.mxu0 0.0
    %1912 = vmatpush1.xpose.msra.mxu0 0.0
    %1913 = vmatprep.subr.mxu0 0.0
    %1914 = vmatpush1.xpose.msra.mxu0 0.0
    %1915 = vmatprep.subr.mxu0 0.0
    %1916 = vmatpush1.xpose.msra.mxu0 0.0
    %1917 = vmatprep.subr.mxu0 0.0
    %1918 = vmatpush1.xpose.msra.mxu0 0.0
    %1919 = vmatprep.subr.mxu0 0.0
    %1920 = vmatpush1.xpose.msra.mxu0 0.0
    %1921 = vmatprep.subr.mxu0 0.0
    %1922 = vmatpush1.xpose.msra.mxu0 0.0
    %1923 = vmatprep.subr.mxu0 0.0
    %1924 = vmatpush1.xpose.msra.mxu0 0.0
    %1925 = vmatprep.subr.mxu0 0.0
    %1926 = vmatpush1.xpose.msra.mxu0 0.0
    %1927 = vmatprep.subr.mxu0 0.0
    %1928 = vmatpush1.xpose.msra.mxu0 0.0
    %1929 = vmatprep.subr.mxu0 0.0
    %1930 = vmatpush1.xpose.msra.mxu0 0.0
    %1931 = vmatprep.subr.mxu0 0.0
    %1932 = vmatpush1.xpose.msra.mxu0 0.0
    %1933 = vmatprep.subr.mxu0 0.0
    %1934 = vmatpush1.xpose.msra.mxu0 0.0
    %1935 = vmatprep.subr.mxu0 0.0
    %1936 = vmatpush1.xpose.msra.mxu0 0.0
    %1937 = vmatprep.subr.mxu0 0.0
    %1938 = vmatpush1.xpose.msra.mxu0 0.0
    %1939 = vmatprep.subr.mxu0 0.0
    %1940 = vmatpush1.xpose.msra.mxu0 0.0
    %1941 = vmatprep.subr.mxu0 0.0
    %1942 = vmatpush1.xpose.msra.mxu0 0.0
    %1943 = vmatprep.subr.mxu0 0.0
    %1944 = vmatpush1.xpose.msra.mxu0 0.0
    %1945 = vmatprep.subr.mxu0 0.0
    %1946 = vmatpush1.xpose.msra.mxu0 0.0
    %1947 = vmatprep.subr.mxu0 0.0
    %1948 = vmatpush1.xpose.msra.mxu0 0.0
    %1949 = vmatprep.subr.mxu0 0.0
    %1950 = vmatpush1.xpose.msra.mxu0 0.0
    %1951 = vmatprep.subr.mxu0 0.0
    %1952 = vmatpush1.xpose.msra.mxu0 0.0
    %1953 = vmatprep.subr.mxu0 0.0
    %1954 = vmatpush1.xpose.msra.mxu0 0.0
    %1955 = vmatprep.subr.mxu0 0.0
    %1956 = vmatpush1.xpose.msra.mxu0 0.0
    %1957 = vmatprep.subr.mxu0 0.0
    %1958 = vmatpush1.xpose.msra.mxu0 0.0
    %1959 = vmatprep.subr.mxu0 0.0
    %1960 = vmatpush1.xpose.msra.mxu0 0.0
    %1961 = vmatprep.subr.mxu0 0.0
    %1962 = vmatpush1.xpose.msra.mxu0 0.0
    %1963 = vmatprep.subr.mxu0 0.0
    %1964 = vmatpush1.xpose.msra.mxu0 0.0
    %1965 = vmatprep.subr.mxu0 0.0
    %1966 = vmatpush1.xpose.msra.mxu0 0.0
    %1967 = vmatprep.mubr.f32.mxu0 0.0
    %1968 = vmatmul.mubr.f32.gmra.mrb[0].mxu0 %v1898
    %v1969 = vpop.f32.mrb[0].mxu0
    %v1970 = vadd.f32 %v1894, %v1969
    %v1971 = vpop.f32.mrb[0].mxu0
    %1972 = vdwg.mxu0
    %v1974 = vsel %vm1896, %v348, 0
    %v1977 = vsel %vm1896, %v911, 0
    %1979 = vmatprep.subr.mxu0 0.0
    %1980 = vmatpush1.xpose.msra.mxu0 %v1977
    %1981 = vmatprep.subr.mxu0 0.0
    %1982 = vmatpush1.xpose.msra.mxu0 0.0
    %1983 = vmatprep.subr.mxu0 0.0
    %1984 = vmatpush1.xpose.msra.mxu0 0.0
    %1985 = vmatprep.subr.mxu0 0.0
    %1986 = vmatpush1.xpose.msra.mxu0 0.0
    %1987 = vmatprep.subr.mxu0 0.0
    %1988 = vmatpush1.xpose.msra.mxu0 0.0
    %1989 = vmatprep.subr.mxu0 0.0
    %1990 = vmatpush1.xpose.msra.mxu0 0.0
    %1991 = vmatprep.subr.mxu0 0.0
    %1992 = vmatpush1.xpose.msra.mxu0 0.0
    %1993 = vmatprep.subr.mxu0 0.0
    %1994 = vmatpush1.xpose.msra.mxu0 0.0
    %1995 = vmatprep.subr.mxu0 0.0
    %1996 = vmatpush1.xpose.msra.mxu0 0.0
    %1997 = vmatprep.subr.mxu0 0.0
    %1998 = vmatpush1.xpose.msra.mxu0 0.0
    %1999 = vmatprep.subr.mxu0 0.0
    %2000 = vmatpush1.xpose.msra.mxu0 0.0
    %2001 = vmatprep.subr.mxu0 0.0
    %2002 = vmatpush1.xpose.msra.mxu0 0.0
    %2003 = vmatprep.subr.mxu0 0.0
    %2004 = vmatpush1.xpose.msra.mxu0 0.0
    %2005 = vmatprep.subr.mxu0 0.0
    %2006 = vmatpush1.xpose.msra.mxu0 0.0
    %2007 = vmatprep.subr.mxu0 0.0
    %2008 = vmatpush1.xpose.msra.mxu0 0.0
    %2009 = vmatprep.subr.mxu0 0.0
    %2010 = vmatpush1.xpose.msra.mxu0 0.0
    %2011 = vmatprep.subr.mxu0 0.0
    %2012 = vmatpush1.xpose.msra.mxu0 0.0
    %2013 = vmatprep.subr.mxu0 0.0
    %2014 = vmatpush1.xpose.msra.mxu0 0.0
    %2015 = vmatprep.subr.mxu0 0.0
    %2016 = vmatpush1.xpose.msra.mxu0 0.0
    %2017 = vmatprep.subr.mxu0 0.0
    %2018 = vmatpush1.xpose.msra.mxu0 0.0
    %2019 = vmatprep.subr.mxu0 0.0
    %2020 = vmatpush1.xpose.msra.mxu0 0.0
    %2021 = vmatprep.subr.mxu0 0.0
    %2022 = vmatpush1.xpose.msra.mxu0 0.0
    %2023 = vmatprep.subr.mxu0 0.0
    %2024 = vmatpush1.xpose.msra.mxu0 0.0
    %2025 = vmatprep.subr.mxu0 0.0
    %2026 = vmatpush1.xpose.msra.mxu0 0.0
    %2027 = vmatprep.subr.mxu0 0.0
    %2028 = vmatpush1.xpose.msra.mxu0 0.0
    %2029 = vmatprep.subr.mxu0 0.0
    %2030 = vmatpush1.xpose.msra.mxu0 0.0
    %2031 = vmatprep.subr.mxu0 0.0
    %2032 = vmatpush1.xpose.msra.mxu0 0.0
    %2033 = vmatprep.subr.mxu0 0.0
    %2034 = vmatpush1.xpose.msra.mxu0 0.0
    %2035 = vmatprep.subr.mxu0 0.0
    %2036 = vmatpush1.xpose.msra.mxu0 0.0
    %2037 = vmatprep.subr.mxu0 0.0
    %2038 = vmatpush1.xpose.msra.mxu0 0.0
    %2039 = vmatprep.subr.mxu0 0.0
    %2040 = vmatpush1.xpose.msra.mxu0 0.0
    %2041 = vmatprep.subr.mxu0 0.0
    %2042 = vmatpush1.xpose.msra.mxu0 0.0
    %2043 = vmatprep.mubr.f32.mxu0 0.0
    %2044 = vmatmul.mubr.f32.gmra.mrb[0].mxu0 %v1974
    %v2045 = vpop.f32.mrb[0].mxu0
    %v2046 = vadd.f32 %v1894, %v2045
    %v2047 = vpop.f32.mrb[0].mxu0
    %2048 = vdwg.mxu0
    %v2050 = vsel %vm1896, %v418, 0
    %v2053 = vsel %vm1896, %v981, 0
    %2055 = vmatprep.subr.mxu0 0.0
    %2056 = vmatpush1.xpose.msra.mxu0 %v2053
    %2057 = vmatprep.subr.mxu0 0.0
    %2058 = vmatpush1.xpose.msra.mxu0 0.0
    %2059 = vmatprep.subr.mxu0 0.0
    %2060 = vmatpush1.xpose.msra.mxu0 0.0
    %2061 = vmatprep.subr.mxu0 0.0
    %2062 = vmatpush1.xpose.msra.mxu0 0.0
    %2063 = vmatprep.subr.mxu0 0.0
    %2064 = vmatpush1.xpose.msra.mxu0 0.0
    %2065 = vmatprep.subr.mxu0 0.0
    %2066 = vmatpush1.xpose.msra.mxu0 0.0
    %2067 = vmatprep.subr.mxu0 0.0
    %2068 = vmatpush1.xpose.msra.mxu0 0.0
    %2069 = vmatprep.subr.mxu0 0.0
    %2070 = vmatpush1.xpose.msra.mxu0 0.0
    %2071 = vmatprep.subr.mxu0 0.0
    %2072 = vmatpush1.xpose.msra.mxu0 0.0
    %2073 = vmatprep.subr.mxu0 0.0
    %2074 = vmatpush1.xpose.msra.mxu0 0.0
    %2075 = vmatprep.subr.mxu0 0.0
    %2076 = vmatpush1.xpose.msra.mxu0 0.0
    %2077 = vmatprep.subr.mxu0 0.0
    %2078 = vmatpush1.xpose.msra.mxu0 0.0
    %2079 = vmatprep.subr.mxu0 0.0
    %2080 = vmatpush1.xpose.msra.mxu0 0.0
    %2081 = vmatprep.subr.mxu0 0.0
    %2082 = vmatpush1.xpose.msra.mxu0 0.0
    %2083 = vmatprep.subr.mxu0 0.0
    %2084 = vmatpush1.xpose.msra.mxu0 0.0
    %2085 = vmatprep.subr.mxu0 0.0
    %2086 = vmatpush1.xpose.msra.mxu0 0.0
    %2087 = vmatprep.subr.mxu0 0.0
    %2088 = vmatpush1.xpose.msra.mxu0 0.0
    %2089 = vmatprep.subr.mxu0 0.0
    %2090 = vmatpush1.xpose.msra.mxu0 0.0
    %2091 = vmatprep.subr.mxu0 0.0
    %2092 = vmatpush1.xpose.msra.mxu0 0.0
    %2093 = vmatprep.subr.mxu0 0.0
    %2094 = vmatpush1.xpose.msra.mxu0 0.0
    %2095 = vmatprep.subr.mxu0 0.0
    %2096 = vmatpush1.xpose.msra.mxu0 0.0
    %2097 = vmatprep.subr.mxu0 0.0
    %2098 = vmatpush1.xpose.msra.mxu0 0.0
    %2099 = vmatprep.subr.mxu0 0.0
    %2100 = vmatpush1.xpose.msra.mxu0 0.0
    %2101 = vmatprep.subr.mxu0 0.0
    %2102 = vmatpush1.xpose.msra.mxu0 0.0
    %2103 = vmatprep.subr.mxu0 0.0
    %2104 = vmatpush1.xpose.msra.mxu0 0.0
    %2105 = vmatprep.subr.mxu0 0.0
    %2106 = vmatpush1.xpose.msra.mxu0 0.0
    %2107 = vmatprep.subr.mxu0 0.0
    %2108 = vmatpush1.xpose.msra.mxu0 0.0
    %2109 = vmatprep.subr.mxu0 0.0
    %2110 = vmatpush1.xpose.msra.mxu0 0.0
    %2111 = vmatprep.subr.mxu0 0.0
    %2112 = vmatpush1.xpose.msra.mxu0 0.0
    %2113 = vmatprep.subr.mxu0 0.0
    %2114 = vmatpush1.xpose.msra.mxu0 0.0
    %2115 = vmatprep.subr.mxu0 0.0
    %2116 = vmatpush1.xpose.msra.mxu0 0.0
    %2117 = vmatprep.subr.mxu0 0.0
    %2118 = vmatpush1.xpose.msra.mxu0 0.0
    %2119 = vmatprep.mubr.f32.mxu0 0.0
    %2120 = vmatmul.mubr.f32.gmra.mrb[0].mxu0 %v2050
    %v2121 = vpop.f32.mrb[0].mxu0
    %v2122 = vadd.f32 %v1894, %v2121
    %v2123 = vpop.f32.mrb[0].mxu0
    %2124 = vdwg.mxu0
    %v2126 = vsel %vm1896, %v488, 0
    %v2129 = vsel %vm1896, %v1051, 0
    %2131 = vmatprep.subr.mxu0 0.0
    %2132 = vmatpush1.xpose.msra.mxu0 %v2129
    %2133 = vmatprep.subr.mxu0 0.0
    %2134 = vmatpush1.xpose.msra.mxu0 0.0
    %2135 = vmatprep.subr.mxu0 0.0
    %2136 = vmatpush1.xpose.msra.mxu0 0.0
    %2137 = vmatprep.subr.mxu0 0.0
    %2138 = vmatpush1.xpose.msra.mxu0 0.0
    %2139 = vmatprep.subr.mxu0 0.0
    %2140 = vmatpush1.xpose.msra.mxu0 0.0
    %2141 = vmatprep.subr.mxu0 0.0
    %2142 = vmatpush1.xpose.msra.mxu0 0.0
    %2143 = vmatprep.subr.mxu0 0.0
    %2144 = vmatpush1.xpose.msra.mxu0 0.0
    %2145 = vmatprep.subr.mxu0 0.0
    %2146 = vmatpush1.xpose.msra.mxu0 0.0
    %2147 = vmatprep.subr.mxu0 0.0
    %2148 = vmatpush1.xpose.msra.mxu0 0.0
    %2149 = vmatprep.subr.mxu0 0.0
    %2150 = vmatpush1.xpose.msra.mxu0 0.0
    %2151 = vmatprep.subr.mxu0 0.0
    %2152 = vmatpush1.xpose.msra.mxu0 0.0
    %2153 = vmatprep.subr.mxu0 0.0
    %2154 = vmatpush1.xpose.msra.mxu0 0.0
    %2155 = vmatprep.subr.mxu0 0.0
    %2156 = vmatpush1.xpose.msra.mxu0 0.0
    %2157 = vmatprep.subr.mxu0 0.0
    %2158 = vmatpush1.xpose.msra.mxu0 0.0
    %2159 = vmatprep.subr.mxu0 0.0
    %2160 = vmatpush1.xpose.msra.mxu0 0.0
    %2161 = vmatprep.subr.mxu0 0.0
    %2162 = vmatpush1.xpose.msra.mxu0 0.0
    %2163 = vmatprep.subr.mxu0 0.0
    %2164 = vmatpush1.xpose.msra.mxu0 0.0
    %2165 = vmatprep.subr.mxu0 0.0
    %2166 = vmatpush1.xpose.msra.mxu0 0.0
    %2167 = vmatprep.subr.mxu0 0.0
    %2168 = vmatpush1.xpose.msra.mxu0 0.0
    %2169 = vmatprep.subr.mxu0 0.0
    %2170 = vmatpush1.xpose.msra.mxu0 0.0
    %2171 = vmatprep.subr.mxu0 0.0
    %2172 = vmatpush1.xpose.msra.mxu0 0.0
    %2173 = vmatprep.subr.mxu0 0.0
    %2174 = vmatpush1.xpose.msra.mxu0 0.0
    %2175 = vmatprep.subr.mxu0 0.0
    %2176 = vmatpush1.xpose.msra.mxu0 0.0
    %2177 = vmatprep.subr.mxu0 0.0
    %2178 = vmatpush1.xpose.msra.mxu0 0.0
    %2179 = vmatprep.subr.mxu0 0.0
    %2180 = vmatpush1.xpose.msra.mxu0 0.0
    %2181 = vmatprep.subr.mxu0 0.0
    %2182 = vmatpush1.xpose.msra.mxu0 0.0
    %2183 = vmatprep.subr.mxu0 0.0
    %2184 = vmatpush1.xpose.msra.mxu0 0.0
    %2185 = vmatprep.subr.mxu0 0.0
    %2186 = vmatpush1.xpose.msra.mxu0 0.0
    %2187 = vmatprep.subr.mxu0 0.0
    %2188 = vmatpush1.xpose.msra.mxu0 0.0
    %2189 = vmatprep.subr.mxu0 0.0
    %2190 = vmatpush1.xpose.msra.mxu0 0.0
    %2191 = vmatprep.subr.mxu0 0.0
    %2192 = vmatpush1.xpose.msra.mxu0 0.0
    %2193 = vmatprep.subr.mxu0 0.0
    %2194 = vmatpush1.xpose.msra.mxu0 0.0
    %2195 = vmatprep.mubr.f32.mxu0 0.0
    %2196 = vmatmul.mubr.f32.gmra.mrb[0].mxu0 %v2126
    %v2197 = vpop.f32.mrb[0].mxu0
    %v2198 = vadd.f32 %v1894, %v2197
    %v2199 = vpop.f32.mrb[0].mxu0
    %2200 = vdwg.mxu0
    %v2202 = vsel %vm1896, %v561, 0
    %v2205 = vsel %vm1896, %v1121, 0
    %2207 = vmatprep.subr.mxu0 0.0
    %2208 = vmatpush1.xpose.msra.mxu0 %v2205
    %2209 = vmatprep.subr.mxu0 0.0
    %2210 = vmatpush1.xpose.msra.mxu0 0.0
    %2211 = vmatprep.subr.mxu0 0.0
    %2212 = vmatpush1.xpose.msra.mxu0 0.0
    %2213 = vmatprep.subr.mxu0 0.0
    %2214 = vmatpush1.xpose.msra.mxu0 0.0
    %2215 = vmatprep.subr.mxu0 0.0
    %2216 = vmatpush1.xpose.msra.mxu0 0.0
    %2217 = vmatprep.subr.mxu0 0.0
    %2218 = vmatpush1.xpose.msra.mxu0 0.0
    %2219 = vmatprep.subr.mxu0 0.0
    %2220 = vmatpush1.xpose.msra.mxu0 0.0
    %2221 = vmatprep.subr.mxu0 0.0
    %2222 = vmatpush1.xpose.msra.mxu0 0.0
    %2223 = vmatprep.subr.mxu0 0.0
    %2224 = vmatpush1.xpose.msra.mxu0 0.0
    %2225 = vmatprep.subr.mxu0 0.0
    %2226 = vmatpush1.xpose.msra.mxu0 0.0
    %2227 = vmatprep.subr.mxu0 0.0
    %2228 = vmatpush1.xpose.msra.mxu0 0.0
    %2229 = vmatprep.subr.mxu0 0.0
    %2230 = vmatpush1.xpose.msra.mxu0 0.0
    %2231 = vmatprep.subr.mxu0 0.0
    %2232 = vmatpush1.xpose.msra.mxu0 0.0
    %2233 = vmatprep.subr.mxu0 0.0
    %2234 = vmatpush1.xpose.msra.mxu0 0.0
    %2235 = vmatprep.subr.mxu0 0.0
    %2236 = vmatpush1.xpose.msra.mxu0 0.0
    %2237 = vmatprep.subr.mxu0 0.0
    %2238 = vmatpush1.xpose.msra.mxu0 0.0
    %2239 = vmatprep.subr.mxu0 0.0
    %2240 = vmatpush1.xpose.msra.mxu0 0.0
    %2241 = vmatprep.subr.mxu0 0.0
    %2242 = vmatpush1.xpose.msra.mxu0 0.0
    %2243 = vmatprep.subr.mxu0 0.0
    %2244 = vmatpush1.xpose.msra.mxu0 0.0
    %2245 = vmatprep.subr.mxu0 0.0
    %2246 = vmatpush1.xpose.msra.mxu0 0.0
    %2247 = vmatprep.subr.mxu0 0.0
    %2248 = vmatpush1.xpose.msra.mxu0 0.0
    %2249 = vmatprep.subr.mxu0 0.0
    %2250 = vmatpush1.xpose.msra.mxu0 0.0
    %2251 = vmatprep.subr.mxu0 0.0
    %2252 = vmatpush1.xpose.msra.mxu0 0.0
    %2253 = vmatprep.subr.mxu0 0.0
    %2254 = vmatpush1.xpose.msra.mxu0 0.0
    %2255 = vmatprep.subr.mxu0 0.0
    %2256 = vmatpush1.xpose.msra.mxu0 0.0
    %2257 = vmatprep.subr.mxu0 0.0
    %2258 = vmatpush1.xpose.msra.mxu0 0.0
    %2259 = vmatprep.subr.mxu0 0.0
    %2260 = vmatpush1.xpose.msra.mxu0 0.0
    %2261 = vmatprep.subr.mxu0 0.0
    %2262 = vmatpush1.xpose.msra.mxu0 0.0
    %2263 = vmatprep.subr.mxu0 0.0
    %2264 = vmatpush1.xpose.msra.mxu0 0.0
    %2265 = vmatprep.subr.mxu0 0.0
    %2266 = vmatpush1.xpose.msra.mxu0 0.0
    %2267 = vmatprep.subr.mxu0 0.0
    %2268 = vmatpush1.xpose.msra.mxu0 0.0
    %2269 = vmatprep.subr.mxu0 0.0
    %2270 = vmatpush1.xpose.msra.mxu0 0.0
    %2271 = vmatprep.mubr.f32.mxu0 0.0
    %2272 = vmatmul.mubr.f32.gmra.mrb[0].mxu0 %v2202
    %v2273 = vpop.f32.mrb[0].mxu0
    %v2274 = vadd.f32 %v1895, %v2273
    %v2275 = vpop.f32.mrb[0].mxu0
    %2276 = vdwg.mxu0
    %v2278 = vsel %vm1896, %v631, 0
    %v2281 = vsel %vm1896, %v1191, 0
    %2283 = vmatprep.subr.mxu0 0.0
    %2284 = vmatpush1.xpose.msra.mxu0 %v2281
    %2285 = vmatprep.subr.mxu0 0.0
    %2286 = vmatpush1.xpose.msra.mxu0 0.0
    %2287 = vmatprep.subr.mxu0 0.0
    %2288 = vmatpush1.xpose.msra.mxu0 0.0
    %2289 = vmatprep.subr.mxu0 0.0
    %2290 = vmatpush1.xpose.msra.mxu0 0.0
    %2291 = vmatprep.subr.mxu0 0.0
    %2292 = vmatpush1.xpose.msra.mxu0 0.0
    %2293 = vmatprep.subr.mxu0 0.0
    %2294 = vmatpush1.xpose.msra.mxu0 0.0
    %2295 = vmatprep.subr.mxu0 0.0
    %2296 = vmatpush1.xpose.msra.mxu0 0.0
    %2297 = vmatprep.subr.mxu0 0.0
    %2298 = vmatpush1.xpose.msra.mxu0 0.0
    %2299 = vmatprep.subr.mxu0 0.0
    %2300 = vmatpush1.xpose.msra.mxu0 0.0
    %2301 = vmatprep.subr.mxu0 0.0
    %2302 = vmatpush1.xpose.msra.mxu0 0.0
    %2303 = vmatprep.subr.mxu0 0.0
    %2304 = vmatpush1.xpose.msra.mxu0 0.0
    %2305 = vmatprep.subr.mxu0 0.0
    %2306 = vmatpush1.xpose.msra.mxu0 0.0
    %2307 = vmatprep.subr.mxu0 0.0
    %2308 = vmatpush1.xpose.msra.mxu0 0.0
    %2309 = vmatprep.subr.mxu0 0.0
    %2310 = vmatpush1.xpose.msra.mxu0 0.0
    %2311 = vmatprep.subr.mxu0 0.0
    %2312 = vmatpush1.xpose.msra.mxu0 0.0
    %2313 = vmatprep.subr.mxu0 0.0
    %2314 = vmatpush1.xpose.msra.mxu0 0.0
    %2315 = vmatprep.subr.mxu0 0.0
    %2316 = vmatpush1.xpose.msra.mxu0 0.0
    %2317 = vmatprep.subr.mxu0 0.0
    %2318 = vmatpush1.xpose.msra.mxu0 0.0
    %2319 = vmatprep.subr.mxu0 0.0
    %2320 = vmatpush1.xpose.msra.mxu0 0.0
    %2321 = vmatprep.subr.mxu0 0.0
    %2322 = vmatpush1.xpose.msra.mxu0 0.0
    %2323 = vmatprep.subr.mxu0 0.0
    %2324 = vmatpush1.xpose.msra.mxu0 0.0
    %2325 = vmatprep.subr.mxu0 0.0
    %2326 = vmatpush1.xpose.msra.mxu0 0.0
    %2327 = vmatprep.subr.mxu0 0.0
    %2328 = vmatpush1.xpose.msra.mxu0 0.0
    %2329 = vmatprep.subr.mxu0 0.0
    %2330 = vmatpush1.xpose.msra.mxu0 0.0
    %2331 = vmatprep.subr.mxu0 0.0
    %2332 = vmatpush1.xpose.msra.mxu0 0.0
    %2333 = vmatprep.subr.mxu0 0.0
    %2334 = vmatpush1.xpose.msra.mxu0 0.0
    %2335 = vmatprep.subr.mxu0 0.0
    %2336 = vmatpush1.xpose.msra.mxu0 0.0
    %2337 = vmatprep.subr.mxu0 0.0
    %2338 = vmatpush1.xpose.msra.mxu0 0.0
    %2339 = vmatprep.subr.mxu0 0.0
    %2340 = vmatpush1.xpose.msra.mxu0 0.0
    %2341 = vmatprep.subr.mxu0 0.0
    %2342 = vmatpush1.xpose.msra.mxu0 0.0
    %2343 = vmatprep.subr.mxu0 0.0
    %2344 = vmatpush1.xpose.msra.mxu0 0.0
    %2345 = vmatprep.subr.mxu0 0.0
    %2346 = vmatpush1.xpose.msra.mxu0 0.0
    %2347 = vmatprep.mubr.f32.mxu0 0.0
    %2348 = vmatmul.mubr.f32.gmra.mrb[0].mxu0 %v2278
    %v2349 = vpop.f32.mrb[0].mxu0
    %v2350 = vadd.f32 %v1895, %v2349
    %v2351 = vpop.f32.mrb[0].mxu0
    %2352 = vdwg.mxu0
    %v2354 = vsel %vm1896, %v701, 0
    %v2357 = vsel %vm1896, %v1261, 0
    %2359 = vmatprep.subr.mxu0 0.0
    %2360 = vmatpush1.xpose.msra.mxu0 %v2357
    %2361 = vmatprep.subr.mxu0 0.0
    %2362 = vmatpush1.xpose.msra.mxu0 0.0
    %2363 = vmatprep.subr.mxu0 0.0
    %2364 = vmatpush1.xpose.msra.mxu0 0.0
    %2365 = vmatprep.subr.mxu0 0.0
    %2366 = vmatpush1.xpose.msra.mxu0 0.0
    %2367 = vmatprep.subr.mxu0 0.0
    %2368 = vmatpush1.xpose.msra.mxu0 0.0
    %2369 = vmatprep.subr.mxu0 0.0
    %2370 = vmatpush1.xpose.msra.mxu0 0.0
    %2371 = vmatprep.subr.mxu0 0.0
    %2372 = vmatpush1.xpose.msra.mxu0 0.0
    %2373 = vmatprep.subr.mxu0 0.0
    %2374 = vmatpush1.xpose.msra.mxu0 0.0
    %2375 = vmatprep.subr.mxu0 0.0
    %2376 = vmatpush1.xpose.msra.mxu0 0.0
    %2377 = vmatprep.subr.mxu0 0.0
    %2378 = vmatpush1.xpose.msra.mxu0 0.0
    %2379 = vmatprep.subr.mxu0 0.0
    %2380 = vmatpush1.xpose.msra.mxu0 0.0
    %2381 = vmatprep.subr.mxu0 0.0
    %2382 = vmatpush1.xpose.msra.mxu0 0.0
    %2383 = vmatprep.subr.mxu0 0.0
    %2384 = vmatpush1.xpose.msra.mxu0 0.0
    %2385 = vmatprep.subr.mxu0 0.0
    %2386 = vmatpush1.xpose.msra.mxu0 0.0
    %2387 = vmatprep.subr.mxu0 0.0
    %2388 = vmatpush1.xpose.msra.mxu0 0.0
    %2389 = vmatprep.subr.mxu0 0.0
    %2390 = vmatpush1.xpose.msra.mxu0 0.0
    %2391 = vmatprep.subr.mxu0 0.0
    %2392 = vmatpush1.xpose.msra.mxu0 0.0
    %2393 = vmatprep.subr.mxu0 0.0
    %2394 = vmatpush1.xpose.msra.mxu0 0.0
    %2395 = vmatprep.subr.mxu0 0.0
    %2396 = vmatpush1.xpose.msra.mxu0 0.0
    %2397 = vmatprep.subr.mxu0 0.0
    %2398 = vmatpush1.xpose.msra.mxu0 0.0
    %2399 = vmatprep.subr.mxu0 0.0
    %2400 = vmatpush1.xpose.msra.mxu0 0.0
    %2401 = vmatprep.subr.mxu0 0.0
    %2402 = vmatpush1.xpose.msra.mxu0 0.0
    %2403 = vmatprep.subr.mxu0 0.0
    %2404 = vmatpush1.xpose.msra.mxu0 0.0
    %2405 = vmatprep.subr.mxu0 0.0
    %2406 = vmatpush1.xpose.msra.mxu0 0.0
    %2407 = vmatprep.subr.mxu0 0.0
    %2408 = vmatpush1.xpose.msra.mxu0 0.0
    %2409 = vmatprep.subr.mxu0 0.0
    %2410 = vmatpush1.xpose.msra.mxu0 0.0
    %2411 = vmatprep.subr.mxu0 0.0
    %2412 = vmatpush1.xpose.msra.mxu0 0.0
    %2413 = vmatprep.subr.mxu0 0.0
    %2414 = vmatpush1.xpose.msra.mxu0 0.0
    %2415 = vmatprep.subr.mxu0 0.0
    %2416 = vmatpush1.xpose.msra.mxu0 0.0
    %2417 = vmatprep.subr.mxu0 0.0
    %2418 = vmatpush1.xpose.msra.mxu0 0.0
    %2419 = vmatprep.subr.mxu0 0.0
    %2420 = vmatpush1.xpose.msra.mxu0 0.0
    %2421 = vmatprep.subr.mxu0 0.0
    %2422 = vmatpush1.xpose.msra.mxu0 0.0
    %2423 = vmatprep.mubr.f32.mxu0 0.0
    %2424 = vmatmul.mubr.f32.gmra.mrb[0].mxu0 %v2354
    %v2425 = vpop.f32.mrb[0].mxu0
    %v2426 = vadd.f32 %v1895, %v2425
    %v2427 = vpop.f32.mrb[0].mxu0
    %2428 = vdwg.mxu0
    %v2430 = vsel %vm1896, %v771, 0
    %v2433 = vsel %vm1896, %v1331, 0
    %2435 = vmatprep.subr.mxu0 0.0
    %2436 = vmatpush1.xpose.msra.mxu0 %v2433
    %2437 = vmatprep.subr.mxu0 0.0
    %2438 = vmatpush1.xpose.msra.mxu0 0.0
    %2439 = vmatprep.subr.mxu0 0.0
    %2440 = vmatpush1.xpose.msra.mxu0 0.0
    %2441 = vmatprep.subr.mxu0 0.0
    %2442 = vmatpush1.xpose.msra.mxu0 0.0
    %2443 = vmatprep.subr.mxu0 0.0
    %2444 = vmatpush1.xpose.msra.mxu0 0.0
    %2445 = vmatprep.subr.mxu0 0.0
    %2446 = vmatpush1.xpose.msra.mxu0 0.0
    %2447 = vmatprep.subr.mxu0 0.0
    %2448 = vmatpush1.xpose.msra.mxu0 0.0
    %2449 = vmatprep.subr.mxu0 0.0
    %2450 = vmatpush1.xpose.msra.mxu0 0.0
    %2451 = vmatprep.subr.mxu0 0.0
    %2452 = vmatpush1.xpose.msra.mxu0 0.0
    %2453 = vmatprep.subr.mxu0 0.0
    %2454 = vmatpush1.xpose.msra.mxu0 0.0
    %2455 = vmatprep.subr.mxu0 0.0
    %2456 = vmatpush1.xpose.msra.mxu0 0.0
    %2457 = vmatprep.subr.mxu0 0.0
    %2458 = vmatpush1.xpose.msra.mxu0 0.0
    %2459 = vmatprep.subr.mxu0 0.0
    %2460 = vmatpush1.xpose.msra.mxu0 0.0
    %2461 = vmatprep.subr.mxu0 0.0
    %2462 = vmatpush1.xpose.msra.mxu0 0.0
    %2463 = vmatprep.subr.mxu0 0.0
    %2464 = vmatpush1.xpose.msra.mxu0 0.0
    %2465 = vmatprep.subr.mxu0 0.0
    %2466 = vmatpush1.xpose.msra.mxu0 0.0
    %2467 = vmatprep.subr.mxu0 0.0
    %2468 = vmatpush1.xpose.msra.mxu0 0.0
    %2469 = vmatprep.subr.mxu0 0.0
    %2470 = vmatpush1.xpose.msra.mxu0 0.0
    %2471 = vmatprep.subr.mxu0 0.0
    %2472 = vmatpush1.xpose.msra.mxu0 0.0
    %2473 = vmatprep.subr.mxu0 0.0
    %2474 = vmatpush1.xpose.msra.mxu0 0.0
    %2475 = vmatprep.subr.mxu0 0.0
    %2476 = vmatpush1.xpose.msra.mxu0 0.0
    %2477 = vmatprep.subr.mxu0 0.0
    %2478 = vmatpush1.xpose.msra.mxu0 0.0
    %2479 = vmatprep.subr.mxu0 0.0
    %2480 = vmatpush1.xpose.msra.mxu0 0.0
    %2481 = vmatprep.subr.mxu0 0.0
    %2482 = vmatpush1.xpose.msra.mxu0 0.0
    %2483 = vmatprep.subr.mxu0 0.0
    %2484 = vmatpush1.xpose.msra.mxu0 0.0
    %2485 = vmatprep.subr.mxu0 0.0
    %2486 = vmatpush1.xpose.msra.mxu0 0.0
    %2487 = vmatprep.subr.mxu0 0.0
    %2488 = vmatpush1.xpose.msra.mxu0 0.0
    %2489 = vmatprep.subr.mxu0 0.0
    %2490 = vmatpush1.xpose.msra.mxu0 0.0
    %2491 = vmatprep.subr.mxu0 0.0
    %2492 = vmatpush1.xpose.msra.mxu0 0.0
    %2493 = vmatprep.subr.mxu0 0.0
    %2494 = vmatpush1.xpose.msra.mxu0 0.0
    %2495 = vmatprep.subr.mxu0 0.0
    %2496 = vmatpush1.xpose.msra.mxu0 0.0
    %2497 = vmatprep.subr.mxu0 0.0
    %2498 = vmatpush1.xpose.msra.mxu0 0.0
    %2499 = vmatprep.mubr.f32.mxu0 0.0
    %2500 = vmatmul.mubr.f32.gmra.mrb[0].mxu0 %v2430
    %v2501 = vpop.f32.mrb[0].mxu0
    %v2502 = vadd.f32 %v1895, %v2501
    %v2503 = vpop.f32.mrb[0].mxu0
    %2504 = vdwg.mxu0
    %v2505 = vsel %vm1896, %v1970, -inf
    %2506 = vmax.xlane.f32.xlu0 %v2505
    %v2507 = vpop.xlane.xlu0 %2506
    %v2508 = vsel %vm1896, %v2046, -inf
    %2509 = vmax.xlane.f32.xlu0 %v2508
    %v2510 = vpop.xlane.xlu0 %2509
    %v2511 = vsel %vm1896, %v2122, -inf
    %2512 = vmax.xlane.f32.xlu0 %v2511
    %v2513 = vpop.xlane.xlu0 %2512
    %v2514 = vsel %vm1896, %v2198, -inf
    %2515 = vmax.xlane.f32.xlu0 %v2514
    %v2516 = vpop.xlane.xlu0 %2515
    %v2517 = vsel %vm1896, %v2274, -inf
    %2518 = vmax.xlane.f32.xlu0 %v2517
    %v2519 = vpop.xlane.xlu0 %2518
    %v2520 = vsel %vm1896, %v2350, -inf
    %2521 = vmax.xlane.f32.xlu0 %v2520
    %v2522 = vpop.xlane.xlu0 %2521
    %v2523 = vsel %vm1896, %v2426, -inf
    %2524 = vmax.xlane.f32.xlu0 %v2523
    %v2525 = vpop.xlane.xlu0 %2524
    %v2526 = vsel %vm1896, %v2502, -inf
    %2527 = vmax.xlane.f32.xlu0 %v2526
    %v2528 = vpop.xlane.xlu0 %2527
    %v2529 = vsub.f32 %v1970, %v2507
    %v2530 = vsub.f32 %v2046, %v2510
    %v2531 = vsub.f32 %v2122, %v2513
    %v2532 = vsub.f32 %v2198, %v2516
    %v2533 = vsub.f32 %v2274, %v2519
    %v2534 = vsub.f32 %v2350, %v2522
    %v2535 = vsub.f32 %v2426, %v2525
    %v2536 = vsub.f32 %v2502, %v2528
    %v2537 = vmul.f32 %v2529, 1.442695
    %v2538 = vpow.pop %v2537
    %v2539 = vmul.f32 %v2530, 1.442695
    %v2540 = vpow.pop %v2539
    %v2541 = vmul.f32 %v2531, 1.442695
    %v2542 = vpow.pop %v2541
    %v2543 = vmul.f32 %v2532, 1.442695
    %v2544 = vpow.pop %v2543
    %v2545 = vmul.f32 %v2533, 1.442695
    %v2546 = vpow.pop %v2545
    %v2547 = vmul.f32 %v2534, 1.442695
    %v2548 = vpow.pop %v2547
    %v2549 = vmul.f32 %v2535, 1.442695
    %v2550 = vpow.pop %v2549
    %v2551 = vmul.f32 %v2536, 1.442695
    %v2552 = vpow.pop %v2551
    %v2553 = vsel %vm1896, %v2538, 0.0
    %2554 = vadd.xlane.f32.xlu0 %v2553
    %v2555 = vpop.xlane.xlu0 %2554
    %v2556 = vsel %vm1896, %v2540, 0.0
    %2557 = vadd.xlane.f32.xlu0 %v2556
    %v2558 = vpop.xlane.xlu0 %2557
    %v2559 = vsel %vm1896, %v2542, 0.0
    %2560 = vadd.xlane.f32.xlu0 %v2559
    %v2561 = vpop.xlane.xlu0 %2560
    %v2562 = vsel %vm1896, %v2544, 0.0
    %2563 = vadd.xlane.f32.xlu0 %v2562
    %v2564 = vpop.xlane.xlu0 %2563
    %v2565 = vsel %vm1896, %v2546, 0.0
    %2566 = vadd.xlane.f32.xlu0 %v2565
    %v2567 = vpop.xlane.xlu0 %2566
    %v2568 = vsel %vm1896, %v2548, 0.0
    %2569 = vadd.xlane.f32.xlu0 %v2568
    %v2570 = vpop.xlane.xlu0 %2569
    %v2571 = vsel %vm1896, %v2550, 0.0
    %2572 = vadd.xlane.f32.xlu0 %v2571
    %v2573 = vpop.xlane.xlu0 %2572
    %v2574 = vsel %vm1896, %v2552, 0.0
    %2575 = vadd.xlane.f32.xlu0 %v2574
    %v2576 = vpop.xlane.xlu0 %2575
    %v2577 = vrcp.pop %v2555
    %v2578 = vrcp.pop %v2558
    %v2579 = vrcp.pop %v2561
    %v2580 = vrcp.pop %v2564
    %v2581 = vrcp.pop %v2567
    %v2582 = vrcp.pop %v2570
    %v2583 = vrcp.pop %v2573
    %v2584 = vrcp.pop %v2576
    %v2585 = vmul.f32 %v2538, %v2577
    %v2586 = vmul.f32 %v2540, %v2578
    %v2587 = vmul.f32 %v2542, %v2579
    %v2588 = vmul.f32 %v2544, %v2580
    %v2589 = vmul.f32 %v2546, %v2581
    %v2590 = vmul.f32 %v2548, %v2582
    %v2591 = vmul.f32 %v2550, %v2583
    %v2592 = vmul.f32 %v2552, %v2584
    %v2594 = vsel %vm1896, %v2585, 0
    %2596 = vmatprep.subr.mxu0 0.0
    %2597 = vmatpush1.msra.mxu0 %v1401
    %2598 = vmatprep.subr.mxu0 0.0
    %2599 = vmatpush1.msra.mxu0 0.0
    %2600 = vmatprep.subr.mxu0 0.0
    %2601 = vmatpush1.msra.mxu0 0.0
    %2602 = vmatprep.subr.mxu0 0.0
    %2603 = vmatpush1.msra.mxu0 0.0
    %2604 = vmatprep.subr.mxu0 0.0
    %2605 = vmatpush1.msra.mxu0 0.0
    %2606 = vmatprep.subr.mxu0 0.0
    %2607 = vmatpush1.msra.mxu0 0.0
    %2608 = vmatprep.subr.mxu0 0.0
    %2609 = vmatpush1.msra.mxu0 0.0
    %2610 = vmatprep.subr.mxu0 0.0
    %2611 = vmatpush1.msra.mxu0 0.0
    %2612 = vmatprep.subr.mxu0 0.0
    %2613 = vmatpush1.msra.mxu0 0.0
    %2614 = vmatprep.subr.mxu0 0.0
    %2615 = vmatpush1.msra.mxu0 0.0
    %2616 = vmatprep.subr.mxu0 0.0
    %2617 = vmatpush1.msra.mxu0 0.0
    %2618 = vmatprep.subr.mxu0 0.0
    %2619 = vmatpush1.msra.mxu0 0.0
    %2620 = vmatprep.subr.mxu0 0.0
    %2621 = vmatpush1.msra.mxu0 0.0
    %2622 = vmatprep.subr.mxu0 0.0
    %2623 = vmatpush1.msra.mxu0 0.0
    %2624 = vmatprep.subr.mxu0 0.0
    %2625 = vmatpush1.msra.mxu0 0.0
    %2626 = vmatprep.subr.mxu0 0.0
    %2627 = vmatpush1.msra.mxu0 0.0
    %2628 = vmatprep.subr.mxu0 0.0
    %2629 = vmatpush1.msra.mxu0 0.0
    %2630 = vmatprep.subr.mxu0 0.0
    %2631 = vmatpush1.msra.mxu0 0.0
    %2632 = vmatprep.subr.mxu0 0.0
    %2633 = vmatpush1.msra.mxu0 0.0
    %2634 = vmatprep.subr.mxu0 0.0
    %2635 = vmatpush1.msra.mxu0 0.0
    %2636 = vmatprep.subr.mxu0 0.0
    %2637 = vmatpush1.msra.mxu0 0.0
    %2638 = vmatprep.subr.mxu0 0.0
    %2639 = vmatpush1.msra.mxu0 0.0
    %2640 = vmatprep.subr.mxu0 0.0
    %2641 = vmatpush1.msra.mxu0 0.0
    %2642 = vmatprep.subr.mxu0 0.0
    %2643 = vmatpush1.msra.mxu0 0.0
    %2644 = vmatprep.subr.mxu0 0.0
    %2645 = vmatpush1.msra.mxu0 0.0
    %2646 = vmatprep.subr.mxu0 0.0
    %2647 = vmatpush1.msra.mxu0 0.0
    %2648 = vmatprep.subr.mxu0 0.0
    %2649 = vmatpush1.msra.mxu0 0.0
    %2650 = vmatprep.subr.mxu0 0.0
    %2651 = vmatpush1.msra.mxu0 0.0
    %2652 = vmatprep.subr.mxu0 0.0
    %2653 = vmatpush1.msra.mxu0 0.0
    %2654 = vmatprep.subr.mxu0 0.0
    %2655 = vmatpush1.msra.mxu0 0.0
    %2656 = vmatprep.subr.mxu0 0.0
    %2657 = vmatpush1.msra.mxu0 0.0
    %2658 = vmatprep.subr.mxu0 0.0
    %2659 = vmatpush1.msra.mxu0 0.0
    %2660 = vmatprep.mubr.f32.mxu0 0.0
    %2661 = vmatmul.mubr.f32.gmra.mrb[0].mxu0 %v2594
    %v2662 = vpop.f32.mrb[0].mxu0
    %v2663 = vadd.f32 0.0, %v2662
    %v2664 = vpop.f32.mrb[0].mxu0
    %2665 = vdwg.mxu0
    %v2667 = vsel %vm1896, %v2586, 0
    %2669 = vmatprep.subr.mxu0 0.0
    %2670 = vmatpush1.msra.mxu0 %v1471
    %2671 = vmatprep.subr.mxu0 0.0
    %2672 = vmatpush1.msra.mxu0 0.0
    %2673 = vmatprep.subr.mxu0 0.0
    %2674 = vmatpush1.msra.mxu0 0.0
    %2675 = vmatprep.subr.mxu0 0.0
    %2676 = vmatpush1.msra.mxu0 0.0
    %2677 = vmatprep.subr.mxu0 0.0
    %2678 = vmatpush1.msra.mxu0 0.0
    %2679 = vmatprep.subr.mxu0 0.0
    %2680 = vmatpush1.msra.mxu0 0.0
    %2681 = vmatprep.subr.mxu0 0.0
    %2682 = vmatpush1.msra.mxu0 0.0
    %2683 = vmatprep.subr.mxu0 0.0
    %2684 = vmatpush1.msra.mxu0 0.0
    %2685 = vmatprep.subr.mxu0 0.0
    %2686 = vmatpush1.msra.mxu0 0.0
    %2687 = vmatprep.subr.mxu0 0.0
    %2688 = vmatpush1.msra.mxu0 0.0
    %2689 = vmatprep.subr.mxu0 0.0
    %2690 = vmatpush1.msra.mxu0 0.0
    %2691 = vmatprep.subr.mxu0 0.0
    %2692 = vmatpush1.msra.mxu0 0.0
    %2693 = vmatprep.subr.mxu0 0.0
    %2694 = vmatpush1.msra.mxu0 0.0
    %2695 = vmatprep.subr.mxu0 0.0
    %2696 = vmatpush1.msra.mxu0 0.0
    %2697 = vmatprep.subr.mxu0 0.0
    %2698 = vmatpush1.msra.mxu0 0.0
    %2699 = vmatprep.subr.mxu0 0.0
    %2700 = vmatpush1.msra.mxu0 0.0
    %2701 = vmatprep.subr.mxu0 0.0
    %2702 = vmatpush1.msra.mxu0 0.0
    %2703 = vmatprep.subr.mxu0 0.0
    %2704 = vmatpush1.msra.mxu0 0.0
    %2705 = vmatprep.subr.mxu0 0.0
    %2706 = vmatpush1.msra.mxu0 0.0
    %2707 = vmatprep.subr.mxu0 0.0
    %2708 = vmatpush1.msra.mxu0 0.0
    %2709 = vmatprep.subr.mxu0 0.0
    %2710 = vmatpush1.msra.mxu0 0.0
    %2711 = vmatprep.subr.mxu0 0.0
    %2712 = vmatpush1.msra.mxu0 0.0
    %2713 = vmatprep.subr.mxu0 0.0
    %2714 = vmatpush1.msra.mxu0 0.0
    %2715 = vmatprep.subr.mxu0 0.0
    %2716 = vmatpush1.msra.mxu0 0.0
    %2717 = vmatprep.subr.mxu0 0.0
    %2718 = vmatpush1.msra.mxu0 0.0
    %2719 = vmatprep.subr.mxu0 0.0
    %2720 = vmatpush1.msra.mxu0 0.0
    %2721 = vmatprep.subr.mxu0 0.0
    %2722 = vmatpush1.msra.mxu0 0.0
    %2723 = vmatprep.subr.mxu0 0.0
    %2724 = vmatpush1.msra.mxu0 0.0
    %2725 = vmatprep.subr.mxu0 0.0
    %2726 = vmatpush1.msra.mxu0 0.0
    %2727 = vmatprep.subr.mxu0 0.0
    %2728 = vmatpush1.msra.mxu0 0.0
    %2729 = vmatprep.subr.mxu0 0.0
    %2730 = vmatpush1.msra.mxu0 0.0
    %2731 = vmatprep.subr.mxu0 0.0
    %2732 = vmatpush1.msra.mxu0 0.0
    %2733 = vmatprep.mubr.f32.mxu0 0.0
    %2734 = vmatmul.mubr.f32.gmra.mrb[0].mxu0 %v2667
    %v2735 = vpop.f32.mrb[0].mxu0
    %v2736 = vadd.f32 0.0, %v2735
    %v2737 = vpop.f32.mrb[0].mxu0
    %2738 = vdwg.mxu0
    %v2740 = vsel %vm1896, %v2587, 0
    %2742 = vmatprep.subr.mxu0 0.0
    %2743 = vmatpush1.msra.mxu0 %v1541
    %2744 = vmatprep.subr.mxu0 0.0
    %2745 = vmatpush1.msra.mxu0 0.0
    %2746 = vmatprep.subr.mxu0 0.0
    %2747 = vmatpush1.msra.mxu0 0.0
    %2748 = vmatprep.subr.mxu0 0.0
    %2749 = vmatpush1.msra.mxu0 0.0
    %2750 = vmatprep.subr.mxu0 0.0
    %2751 = vmatpush1.msra.mxu0 0.0
    %2752 = vmatprep.subr.mxu0 0.0
    %2753 = vmatpush1.msra.mxu0 0.0
    %2754 = vmatprep.subr.mxu0 0.0
    %2755 = vmatpush1.msra.mxu0 0.0
    %2756 = vmatprep.subr.mxu0 0.0
    %2757 = vmatpush1.msra.mxu0 0.0
    %2758 = vmatprep.subr.mxu0 0.0
    %2759 = vmatpush1.msra.mxu0 0.0
    %2760 = vmatprep.subr.mxu0 0.0
    %2761 = vmatpush1.msra.mxu0 0.0
    %2762 = vmatprep.subr.mxu0 0.0
    %2763 = vmatpush1.msra.mxu0 0.0
    %2764 = vmatprep.subr.mxu0 0.0
    %2765 = vmatpush1.msra.mxu0 0.0
    %2766 = vmatprep.subr.mxu0 0.0
    %2767 = vmatpush1.msra.mxu0 0.0
    %2768 = vmatprep.subr.mxu0 0.0
    %2769 = vmatpush1.msra.mxu0 0.0
    %2770 = vmatprep.subr.mxu0 0.0
    %2771 = vmatpush1.msra.mxu0 0.0
    %2772 = vmatprep.subr.mxu0 0.0
    %2773 = vmatpush1.msra.mxu0 0.0
    %2774 = vmatprep.subr.mxu0 0.0
    %2775 = vmatpush1.msra.mxu0 0.0
    %2776 = vmatprep.subr.mxu0 0.0
    %2777 = vmatpush1.msra.mxu0 0.0
    %2778 = vmatprep.subr.mxu0 0.0
    %2779 = vmatpush1.msra.mxu0 0.0
    %2780 = vmatprep.subr.mxu0 0.0
    %2781 = vmatpush1.msra.mxu0 0.0
    %2782 = vmatprep.subr.mxu0 0.0
    %2783 = vmatpush1.msra.mxu0 0.0
    %2784 = vmatprep.subr.mxu0 0.0
    %2785 = vmatpush1.msra.mxu0 0.0
    %2786 = vmatprep.subr.mxu0 0.0
    %2787 = vmatpush1.msra.mxu0 0.0
    %2788 = vmatprep.subr.mxu0 0.0
    %2789 = vmatpush1.msra.mxu0 0.0
    %2790 = vmatprep.subr.mxu0 0.0
    %2791 = vmatpush1.msra.mxu0 0.0
    %2792 = vmatprep.subr.mxu0 0.0
    %2793 = vmatpush1.msra.mxu0 0.0
    %2794 = vmatprep.subr.mxu0 0.0
    %2795 = vmatpush1.msra.mxu0 0.0
    %2796 = vmatprep.subr.mxu0 0.0
    %2797 = vmatpush1.msra.mxu0 0.0
    %2798 = vmatprep.subr.mxu0 0.0
    %2799 = vmatpush1.msra.mxu0 0.0
    %2800 = vmatprep.subr.mxu0 0.0
    %2801 = vmatpush1.msra.mxu0 0.0
    %2802 = vmatprep.subr.mxu0 0.0
    %2803 = vmatpush1.msra.mxu0 0.0
    %2804 = vmatprep.subr.mxu0 0.0
    %2805 = vmatpush1.msra.mxu0 0.0
    %2806 = vmatprep.mubr.f32.mxu0 0.0
    %2807 = vmatmul.mubr.f32.gmra.mrb[0].mxu0 %v2740
    %v2808 = vpop.f32.mrb[0].mxu0
    %v2809 = vadd.f32 0.0, %v2808
    %v2810 = vpop.f32.mrb[0].mxu0
    %2811 = vdwg.mxu0
    %v2813 = vsel %vm1896, %v2588, 0
    %2815 = vmatprep.subr.mxu0 0.0
    %2816 = vmatpush1.msra.mxu0 %v1611
    %2817 = vmatprep.subr.mxu0 0.0
    %2818 = vmatpush1.msra.mxu0 0.0
    %2819 = vmatprep.subr.mxu0 0.0
    %2820 = vmatpush1.msra.mxu0 0.0
    %2821 = vmatprep.subr.mxu0 0.0
    %2822 = vmatpush1.msra.mxu0 0.0
    %2823 = vmatprep.subr.mxu0 0.0
    %2824 = vmatpush1.msra.mxu0 0.0
    %2825 = vmatprep.subr.mxu0 0.0
    %2826 = vmatpush1.msra.mxu0 0.0
    %2827 = vmatprep.subr.mxu0 0.0
    %2828 = vmatpush1.msra.mxu0 0.0
    %2829 = vmatprep.subr.mxu0 0.0
    %2830 = vmatpush1.msra.mxu0 0.0
    %2831 = vmatprep.subr.mxu0 0.0
    %2832 = vmatpush1.msra.mxu0 0.0
    %2833 = vmatprep.subr.mxu0 0.0
    %2834 = vmatpush1.msra.mxu0 0.0
    %2835 = vmatprep.subr.mxu0 0.0
    %2836 = vmatpush1.msra.mxu0 0.0
    %2837 = vmatprep.subr.mxu0 0.0
    %2838 = vmatpush1.msra.mxu0 0.0
    %2839 = vmatprep.subr.mxu0 0.0
    %2840 = vmatpush1.msra.mxu0 0.0
    %2841 = vmatprep.subr.mxu0 0.0
    %2842 = vmatpush1.msra.mxu0 0.0
    %2843 = vmatprep.subr.mxu0 0.0
    %2844 = vmatpush1.msra.mxu0 0.0
    %2845 = vmatprep.subr.mxu0 0.0
    %2846 = vmatpush1.msra.mxu0 0.0
    %2847 = vmatprep.subr.mxu0 0.0
    %2848 = vmatpush1.msra.mxu0 0.0
    %2849 = vmatprep.subr.mxu0 0.0
    %2850 = vmatpush1.msra.mxu0 0.0
    %2851 = vmatprep.subr.mxu0 0.0
    %2852 = vmatpush1.msra.mxu0 0.0
    %2853 = vmatprep.subr.mxu0 0.0
    %2854 = vmatpush1.msra.mxu0 0.0
    %2855 = vmatprep.subr.mxu0 0.0
    %2856 = vmatpush1.msra.mxu0 0.0
    %2857 = vmatprep.subr.mxu0 0.0
    %2858 = vmatpush1.msra.mxu0 0.0
    %2859 = vmatprep.subr.mxu0 0.0
    %2860 = vmatpush1.msra.mxu0 0.0
    %2861 = vmatprep.subr.mxu0 0.0
    %2862 = vmatpush1.msra.mxu0 0.0
    %2863 = vmatprep.subr.mxu0 0.0
    %2864 = vmatpush1.msra.mxu0 0.0
    %2865 = vmatprep.subr.mxu0 0.0
    %2866 = vmatpush1.msra.mxu0 0.0
    %2867 = vmatprep.subr.mxu0 0.0
    %2868 = vmatpush1.msra.mxu0 0.0
    %2869 = vmatprep.subr.mxu0 0.0
    %2870 = vmatpush1.msra.mxu0 0.0
    %2871 = vmatprep.subr.mxu0 0.0
    %2872 = vmatpush1.msra.mxu0 0.0
    %2873 = vmatprep.subr.mxu0 0.0
    %2874 = vmatpush1.msra.mxu0 0.0
    %2875 = vmatprep.subr.mxu0 0.0
    %2876 = vmatpush1.msra.mxu0 0.0
    %2877 = vmatprep.subr.mxu0 0.0
    %2878 = vmatpush1.msra.mxu0 0.0
    %2879 = vmatprep.mubr.f32.mxu0 0.0
    %2880 = vmatmul.mubr.f32.gmra.mrb[0].mxu0 %v2813
    %v2881 = vpop.f32.mrb[0].mxu0
    %v2882 = vadd.f32 0.0, %v2881
    %v2883 = vpop.f32.mrb[0].mxu0
    %2884 = vdwg.mxu0
    %v2886 = vsel %vm1896, %v2589, 0
    %2888 = vmatprep.subr.mxu0 0.0
    %2889 = vmatpush1.msra.mxu0 %v1681
    %2890 = vmatprep.subr.mxu0 0.0
    %2891 = vmatpush1.msra.mxu0 0.0
    %2892 = vmatprep.subr.mxu0 0.0
    %2893 = vmatpush1.msra.mxu0 0.0
    %2894 = vmatprep.subr.mxu0 0.0
    %2895 = vmatpush1.msra.mxu0 0.0
    %2896 = vmatprep.subr.mxu0 0.0
    %2897 = vmatpush1.msra.mxu0 0.0
    %2898 = vmatprep.subr.mxu0 0.0
    %2899 = vmatpush1.msra.mxu0 0.0
    %2900 = vmatprep.subr.mxu0 0.0
    %2901 = vmatpush1.msra.mxu0 0.0
    %2902 = vmatprep.subr.mxu0 0.0
    %2903 = vmatpush1.msra.mxu0 0.0
    %2904 = vmatprep.subr.mxu0 0.0
    %2905 = vmatpush1.msra.mxu0 0.0
    %2906 = vmatprep.subr.mxu0 0.0
    %2907 = vmatpush1.msra.mxu0 0.0
    %2908 = vmatprep.subr.mxu0 0.0
    %2909 = vmatpush1.msra.mxu0 0.0
    %2910 = vmatprep.subr.mxu0 0.0
    %2911 = vmatpush1.msra.mxu0 0.0
    %2912 = vmatprep.subr.mxu0 0.0
    %2913 = vmatpush1.msra.mxu0 0.0
    %2914 = vmatprep.subr.mxu0 0.0
    %2915 = vmatpush1.msra.mxu0 0.0
    %2916 = vmatprep.subr.mxu0 0.0
    %2917 = vmatpush1.msra.mxu0 0.0
    %2918 = vmatprep.subr.mxu0 0.0
    %2919 = vmatpush1.msra.mxu0 0.0
    %2920 = vmatprep.subr.mxu0 0.0
    %2921 = vmatpush1.msra.mxu0 0.0
    %2922 = vmatprep.subr.mxu0 0.0
    %2923 = vmatpush1.msra.mxu0 0.0
    %2924 = vmatprep.subr.mxu0 0.0
    %2925 = vmatpush1.msra.mxu0 0.0
    %2926 = vmatprep.subr.mxu0 0.0
    %2927 = vmatpush1.msra.mxu0 0.0
    %2928 = vmatprep.subr.mxu0 0.0
    %2929 = vmatpush1.msra.mxu0 0.0
    %2930 = vmatprep.subr.mxu0 0.0
    %2931 = vmatpush1.msra.mxu0 0.0
    %2932 = vmatprep.subr.mxu0 0.0
    %2933 = vmatpush1.msra.mxu0 0.0
    %2934 = vmatprep.subr.mxu0 0.0
    %2935 = vmatpush1.msra.mxu0 0.0
    %2936 = vmatprep.subr.mxu0 0.0
    %2937 = vmatpush1.msra.mxu0 0.0
    %2938 = vmatprep.subr.mxu0 0.0
    %2939 = vmatpush1.msra.mxu0 0.0
    %2940 = vmatprep.subr.mxu0 0.0
    %2941 = vmatpush1.msra.mxu0 0.0
    %2942 = vmatprep.subr.mxu0 0.0
    %2943 = vmatpush1.msra.mxu0 0.0
    %2944 = vmatprep.subr.mxu0 0.0
    %2945 = vmatpush1.msra.mxu0 0.0
    %2946 = vmatprep.subr.mxu0 0.0
    %2947 = vmatpush1.msra.mxu0 0.0
    %2948 = vmatprep.subr.mxu0 0.0
    %2949 = vmatpush1.msra.mxu0 0.0
    %2950 = vmatprep.subr.mxu0 0.0
    %2951 = vmatpush1.msra.mxu0 0.0
    %2952 = vmatprep.mubr.f32.mxu0 0.0
    %2953 = vmatmul.mubr.f32.gmra.mrb[0].mxu0 %v2886
    %v2954 = vpop.f32.mrb[0].mxu0
    %v2955 = vadd.f32 0.0, %v2954
    %v2956 = vpop.f32.mrb[0].mxu0
    %2957 = vdwg.mxu0
    %v2959 = vsel %vm1896, %v2590, 0
    %2961 = vmatprep.subr.mxu0 0.0
    %2962 = vmatpush1.msra.mxu0 %v1751
    %2963 = vmatprep.subr.mxu0 0.0
    %2964 = vmatpush1.msra.mxu0 0.0
    %2965 = vmatprep.subr.mxu0 0.0
    %2966 = vmatpush1.msra.mxu0 0.0
    %2967 = vmatprep.subr.mxu0 0.0
    %2968 = vmatpush1.msra.mxu0 0.0
    %2969 = vmatprep.subr.mxu0 0.0
    %2970 = vmatpush1.msra.mxu0 0.0
    %2971 = vmatprep.subr.mxu0 0.0
    %2972 = vmatpush1.msra.mxu0 0.0
    %2973 = vmatprep.subr.mxu0 0.0
    %2974 = vmatpush1.msra.mxu0 0.0
    %2975 = vmatprep.subr.mxu0 0.0
    %2976 = vmatpush1.msra.mxu0 0.0
    %2977 = vmatprep.subr.mxu0 0.0
    %2978 = vmatpush1.msra.mxu0 0.0
    %2979 = vmatprep.subr.mxu0 0.0
    %2980 = vmatpush1.msra.mxu0 0.0
    %2981 = vmatprep.subr.mxu0 0.0
    %2982 = vmatpush1.msra.mxu0 0.0
    %2983 = vmatprep.subr.mxu0 0.0
    %2984 = vmatpush1.msra.mxu0 0.0
    %2985 = vmatprep.subr.mxu0 0.0
    %2986 = vmatpush1.msra.mxu0 0.0
    %2987 = vmatprep.subr.mxu0 0.0
    %2988 = vmatpush1.msra.mxu0 0.0
    %2989 = vmatprep.subr.mxu0 0.0
    %2990 = vmatpush1.msra.mxu0 0.0
    %2991 = vmatprep.subr.mxu0 0.0
    %2992 = vmatpush1.msra.mxu0 0.0
    %2993 = vmatprep.subr.mxu0 0.0
    %2994 = vmatpush1.msra.mxu0 0.0
    %2995 = vmatprep.subr.mxu0 0.0
    %2996 = vmatpush1.msra.mxu0 0.0
    %2997 = vmatprep.subr.mxu0 0.0
    %2998 = vmatpush1.msra.mxu0 0.0
    %2999 = vmatprep.subr.mxu0 0.0
    %3000 = vmatpush1.msra.mxu0 0.0
    %3001 = vmatprep.subr.mxu0 0.0
    %3002 = vmatpush1.msra.mxu0 0.0
    %3003 = vmatprep.subr.mxu0 0.0
    %3004 = vmatpush1.msra.mxu0 0.0
    %3005 = vmatprep.subr.mxu0 0.0
    %3006 = vmatpush1.msra.mxu0 0.0
    %3007 = vmatprep.subr.mxu0 0.0
    %3008 = vmatpush1.msra.mxu0 0.0
    %3009 = vmatprep.subr.mxu0 0.0
    %3010 = vmatpush1.msra.mxu0 0.0
    %3011 = vmatprep.subr.mxu0 0.0
    %3012 = vmatpush1.msra.mxu0 0.0
    %3013 = vmatprep.subr.mxu0 0.0
    %3014 = vmatpush1.msra.mxu0 0.0
    %3015 = vmatprep.subr.mxu0 0.0
    %3016 = vmatpush1.msra.mxu0 0.0
    %3017 = vmatprep.subr.mxu0 0.0
    %3018 = vmatpush1.msra.mxu0 0.0
    %3019 = vmatprep.subr.mxu0 0.0
    %3020 = vmatpush1.msra.mxu0 0.0
    %3021 = vmatprep.subr.mxu0 0.0
    %3022 = vmatpush1.msra.mxu0 0.0
    %3023 = vmatprep.subr.mxu0 0.0
    %3024 = vmatpush1.msra.mxu0 0.0
    %3025 = vmatprep.mubr.f32.mxu0 0.0
    %3026 = vmatmul.mubr.f32.gmra.mrb[0].mxu0 %v2959
    %v3027 = vpop.f32.mrb[0].mxu0
    %v3028 = vadd.f32 0.0, %v3027
    %v3029 = vpop.f32.mrb[0].mxu0
    %3030 = vdwg.mxu0
    %v3032 = vsel %vm1896, %v2591, 0
    %3034 = vmatprep.subr.mxu0 0.0
    %3035 = vmatpush1.msra.mxu0 %v1821
    %3036 = vmatprep.subr.mxu0 0.0
    %3037 = vmatpush1.msra.mxu0 0.0
    %3038 = vmatprep.subr.mxu0 0.0
    %3039 = vmatpush1.msra.mxu0 0.0
    %3040 = vmatprep.subr.mxu0 0.0
    %3041 = vmatpush1.msra.mxu0 0.0
    %3042 = vmatprep.subr.mxu0 0.0
    %3043 = vmatpush1.msra.mxu0 0.0
    %3044 = vmatprep.subr.mxu0 0.0
    %3045 = vmatpush1.msra.mxu0 0.0
    %3046 = vmatprep.subr.mxu0 0.0
    %3047 = vmatpush1.msra.mxu0 0.0
    %3048 = vmatprep.subr.mxu0 0.0
    %3049 = vmatpush1.msra.mxu0 0.0
    %3050 = vmatprep.subr.mxu0 0.0
    %3051 = vmatpush1.msra.mxu0 0.0
    %3052 = vmatprep.subr.mxu0 0.0
    %3053 = vmatpush1.msra.mxu0 0.0
    %3054 = vmatprep.subr.mxu0 0.0
    %3055 = vmatpush1.msra.mxu0 0.0
    %3056 = vmatprep.subr.mxu0 0.0
    %3057 = vmatpush1.msra.mxu0 0.0
    %3058 = vmatprep.subr.mxu0 0.0
    %3059 = vmatpush1.msra.mxu0 0.0
    %3060 = vmatprep.subr.mxu0 0.0
    %3061 = vmatpush1.msra.mxu0 0.0
    %3062 = vmatprep.subr.mxu0 0.0
    %3063 = vmatpush1.msra.mxu0 0.0
    %3064 = vmatprep.subr.mxu0 0.0
    %3065 = vmatpush1.msra.mxu0 0.0
    %3066 = vmatprep.subr.mxu0 0.0
    %3067 = vmatpush1.msra.mxu0 0.0
    %3068 = vmatprep.subr.mxu0 0.0
    %3069 = vmatpush1.msra.mxu0 0.0
    %3070 = vmatprep.subr.mxu0 0.0
    %3071 = vmatpush1.msra.mxu0 0.0
    %3072 = vmatprep.subr.mxu0 0.0
    %3073 = vmatpush1.msra.mxu0 0.0
    %3074 = vmatprep.subr.mxu0 0.0
    %3075 = vmatpush1.msra.mxu0 0.0
    %3076 = vmatprep.subr.mxu0 0.0
    %3077 = vmatpush1.msra.mxu0 0.0
    %3078 = vmatprep.subr.mxu0 0.0
    %3079 = vmatpush1.msra.mxu0 0.0
    %3080 = vmatprep.subr.mxu0 0.0
    %3081 = vmatpush1.msra.mxu0 0.0
    %3082 = vmatprep.subr.mxu0 0.0
    %3083 = vmatpush1.msra.mxu0 0.0
    %3084 = vmatprep.subr.mxu0 0.0
    %3085 = vmatpush1.msra.mxu0 0.0
    %3086 = vmatprep.subr.mxu0 0.0
    %3087 = vmatpush1.msra.mxu0 0.0
    %3088 = vmatprep.subr.mxu0 0.0
    %3089 = vmatpush1.msra.mxu0 0.0
    %3090 = vmatprep.subr.mxu0 0.0
    %3091 = vmatpush1.msra.mxu0 0.0
    %3092 = vmatprep.subr.mxu0 0.0
    %3093 = vmatpush1.msra.mxu0 0.0
    %3094 = vmatprep.subr.mxu0 0.0
    %3095 = vmatpush1.msra.mxu0 0.0
    %3096 = vmatprep.subr.mxu0 0.0
    %3097 = vmatpush1.msra.mxu0 0.0
    %3098 = vmatprep.mubr.f32.mxu0 0.0
    %3099 = vmatmul.mubr.f32.gmra.mrb[0].mxu0 %v3032
    %v3100 = vpop.f32.mrb[0].mxu0
    %v3101 = vadd.f32 0.0, %v3100
    %v3102 = vpop.f32.mrb[0].mxu0
    %3103 = vdwg.mxu0
    %v3105 = vsel %vm1896, %v2592, 0
    %3107 = vmatprep.subr.mxu0 0.0
    %3108 = vmatpush1.msra.mxu0 %v1891
    %3109 = vmatprep.subr.mxu0 0.0
    %3110 = vmatpush1.msra.mxu0 0.0
    %3111 = vmatprep.subr.mxu0 0.0
    %3112 = vmatpush1.msra.mxu0 0.0
    %3113 = vmatprep.subr.mxu0 0.0
    %3114 = vmatpush1.msra.mxu0 0.0
    %3115 = vmatprep.subr.mxu0 0.0
    %3116 = vmatpush1.msra.mxu0 0.0
    %3117 = vmatprep.subr.mxu0 0.0
    %3118 = vmatpush1.msra.mxu0 0.0
    %3119 = vmatprep.subr.mxu0 0.0
    %3120 = vmatpush1.msra.mxu0 0.0
    %3121 = vmatprep.subr.mxu0 0.0
    %3122 = vmatpush1.msra.mxu0 0.0
    %3123 = vmatprep.subr.mxu0 0.0
    %3124 = vmatpush1.msra.mxu0 0.0
    %3125 = vmatprep.subr.mxu0 0.0
    %3126 = vmatpush1.msra.mxu0 0.0
    %3127 = vmatprep.subr.mxu0 0.0
    %3128 = vmatpush1.msra.mxu0 0.0
    %3129 = vmatprep.subr.mxu0 0.0
    %3130 = vmatpush1.msra.mxu0 0.0
    %3131 = vmatprep.subr.mxu0 0.0
    %3132 = vmatpush1.msra.mxu0 0.0
    %3133 = vmatprep.subr.mxu0 0.0
    %3134 = vmatpush1.msra.mxu0 0.0
    %3135 = vmatprep.subr.mxu0 0.0
    %3136 = vmatpush1.msra.mxu0 0.0
    %3137 = vmatprep.subr.mxu0 0.0
    %3138 = vmatpush1.msra.mxu0 0.0
    %3139 = vmatprep.subr.mxu0 0.0
    %3140 = vmatpush1.msra.mxu0 0.0
    %3141 = vmatprep.subr.mxu0 0.0
    %3142 = vmatpush1.msra.mxu0 0.0
    %3143 = vmatprep.subr.mxu0 0.0
    %3144 = vmatpush1.msra.mxu0 0.0
    %3145 = vmatprep.subr.mxu0 0.0
    %3146 = vmatpush1.msra.mxu0 0.0
    %3147 = vmatprep.subr.mxu0 0.0
    %3148 = vmatpush1.msra.mxu0 0.0
    %3149 = vmatprep.subr.mxu0 0.0
    %3150 = vmatpush1.msra.mxu0 0.0
    %3151 = vmatprep.subr.mxu0 0.0
    %3152 = vmatpush1.msra.mxu0 0.0
    %3153 = vmatprep.subr.mxu0 0.0
    %3154 = vmatpush1.msra.mxu0 0.0
    %3155 = vmatprep.subr.mxu0 0.0
    %3156 = vmatpush1.msra.mxu0 0.0
    %3157 = vmatprep.subr.mxu0 0.0
    %3158 = vmatpush1.msra.mxu0 0.0
    %3159 = vmatprep.subr.mxu0 0.0
    %3160 = vmatpush1.msra.mxu0 0.0
    %3161 = vmatprep.subr.mxu0 0.0
    %3162 = vmatpush1.msra.mxu0 0.0
    %3163 = vmatprep.subr.mxu0 0.0
    %3164 = vmatpush1.msra.mxu0 0.0
    %3165 = vmatprep.subr.mxu0 0.0
    %3166 = vmatpush1.msra.mxu0 0.0
    %3167 = vmatprep.subr.mxu0 0.0
    %3168 = vmatpush1.msra.mxu0 0.0
    %3169 = vmatprep.subr.mxu0 0.0
    %3170 = vmatpush1.msra.mxu0 0.0
    %3171 = vmatprep.mubr.f32.mxu0 0.0
    %3172 = vmatmul.mubr.f32.gmra.mrb[0].mxu0 %v3105
    %v3173 = vpop.f32.mrb[0].mxu0
    %v3174 = vadd.f32 0.0, %v3173
    %v3175 = vpop.f32.mrb[0].mxu0
    %3176 = vdwg.mxu0
    %v3177 = vld [vmem:[%s6] sm:$0xff]
    %v3178 = vld [vmem:[%s6 + $0x8] sm:$0xff]
    %v3179 = vld [vmem:[%s6 + $0x10] sm:$0xff]
    %v3180 = vld [vmem:[%s6 + $0x18] sm:$0xff]
    %v3182 = vsel %vm1896, %v2663, 0
    %3184 = vmatprep.subr.mxu0 0.0
    %3185 = vmatpush1.msra.mxu0 %v3177
    %3186 = vmatprep.subr.mxu0 0.0
    %3187 = vmatpush1.msra.mxu0 0.0
    %3188 = vmatprep.subr.mxu0 0.0
    %3189 = vmatpush1.msra.mxu0 0.0
    %3190 = vmatprep.subr.mxu0 0.0
    %3191 = vmatpush1.msra.mxu0 0.0
    %3192 = vmatprep.subr.mxu0 0.0
    %3193 = vmatpush1.msra.mxu0 0.0
    %3194 = vmatprep.subr.mxu0 0.0
    %3195 = vmatpush1.msra.mxu0 0.0
    %3196 = vmatprep.subr.mxu0 0.0
    %3197 = vmatpush1.msra.mxu0 0.0
    %3198 = vmatprep.subr.mxu0 0.0
    %3199 = vmatpush1.msra.mxu0 0.0
    %3200 = vmatprep.subr.mxu0 0.0
    %3201 = vmatpush1.msra.mxu0 0.0
    %3202 = vmatprep.subr.mxu0 0.0
    %3203 = vmatpush1.msra.mxu0 0.0
    %3204 = vmatprep.subr.mxu0 0.0
    %3205 = vmatpush1.msra.mxu0 0.0
    %3206 = vmatprep.subr.mxu0 0.0
    %3207 = vmatpush1.msra.mxu0 0.0
    %3208 = vmatprep.subr.mxu0 0.0
    %3209 = vmatpush1.msra.mxu0 0.0
    %3210 = vmatprep.subr.mxu0 0.0
    %3211 = vmatpush1.msra.mxu0 0.0
    %3212 = vmatprep.subr.mxu0 0.0
    %3213 = vmatpush1.msra.mxu0 0.0
    %3214 = vmatprep.subr.mxu0 0.0
    %3215 = vmatpush1.msra.mxu0 0.0
    %3216 = vmatprep.subr.mxu0 0.0
    %3217 = vmatpush1.msra.mxu0 0.0
    %3218 = vmatprep.subr.mxu0 0.0
    %3219 = vmatpush1.msra.mxu0 0.0
    %3220 = vmatprep.subr.mxu0 0.0
    %3221 = vmatpush1.msra.mxu0 0.0
    %3222 = vmatprep.subr.mxu0 0.0
    %3223 = vmatpush1.msra.mxu0 0.0
    %3224 = vmatprep.subr.mxu0 0.0
    %3225 = vmatpush1.msra.mxu0 0.0
    %3226 = vmatprep.subr.mxu0 0.0
    %3227 = vmatpush1.msra.mxu0 0.0
    %3228 = vmatprep.subr.mxu0 0.0
    %3229 = vmatpush1.msra.mxu0 0.0
    %3230 = vmatprep.subr.mxu0 0.0
    %3231 = vmatpush1.msra.mxu0 0.0
    %3232 = vmatprep.subr.mxu0 0.0
    %3233 = vmatpush1.msra.mxu0 0.0
    %3234 = vmatprep.subr.mxu0 0.0
    %3235 = vmatpush1.msra.mxu0 0.0
    %3236 = vmatprep.subr.mxu0 0.0
    %3237 = vmatpush1.msra.mxu0 0.0
    %3238 = vmatprep.subr.mxu0 0.0
    %3239 = vmatpush1.msra.mxu0 0.0
    %3240 = vmatprep.subr.mxu0 0.0
    %3241 = vmatpush1.msra.mxu0 0.0
    %3242 = vmatprep.subr.mxu0 0.0
    %3243 = vmatpush1.msra.mxu0 0.0
    %3244 = vmatprep.subr.mxu0 0.0
    %3245 = vmatpush1.msra.mxu0 0.0
    %3246 = vmatprep.subr.mxu0 0.0
    %3247 = vmatpush1.msra.mxu0 0.0
    %3248 = vmatprep.mubr.f32.mxu0 0.0
    %3249 = vmatmul.mubr.f32.gmra.mrb[0].mxu0 %v3182
    %v3250 = vpop.f32.mrb[0].mxu0
    %v3251 = vadd.f32 0.0, %v3250
    %v3252 = vpop.f32.mrb[0].mxu0
    %3253 = vdwg.mxu0
    %v3255 = vsel %vm1896, %v2736, 0
    %3257 = vmatprep.subr.mxu0 0.0
    %3258 = vmatpush1.msra.mxu0 %v3178
    %3259 = vmatprep.subr.mxu0 0.0
    %3260 = vmatpush1.msra.mxu0 0.0
    %3261 = vmatprep.subr.mxu0 0.0
    %3262 = vmatpush1.msra.mxu0 0.0
    %3263 = vmatprep.subr.mxu0 0.0
    %3264 = vmatpush1.msra.mxu0 0.0
    %3265 = vmatprep.subr.mxu0 0.0
    %3266 = vmatpush1.msra.mxu0 0.0
    %3267 = vmatprep.subr.mxu0 0.0
    %3268 = vmatpush1.msra.mxu0 0.0
    %3269 = vmatprep.subr.mxu0 0.0
    %3270 = vmatpush1.msra.mxu0 0.0
    %3271 = vmatprep.subr.mxu0 0.0
    %3272 = vmatpush1.msra.mxu0 0.0
    %3273 = vmatprep.subr.mxu0 0.0
    %3274 = vmatpush1.msra.mxu0 0.0
    %3275 = vmatprep.subr.mxu0 0.0
    %3276 = vmatpush1.msra.mxu0 0.0
    %3277 = vmatprep.subr.mxu0 0.0
    %3278 = vmatpush1.msra.mxu0 0.0
    %3279 = vmatprep.subr.mxu0 0.0
    %3280 = vmatpush1.msra.mxu0 0.0
    %3281 = vmatprep.subr.mxu0 0.0
    %3282 = vmatpush1.msra.mxu0 0.0
    %3283 = vmatprep.subr.mxu0 0.0
    %3284 = vmatpush1.msra.mxu0 0.0
    %3285 = vmatprep.subr.mxu0 0.0
    %3286 = vmatpush1.msra.mxu0 0.0
    %3287 = vmatprep.subr.mxu0 0.0
    %3288 = vmatpush1.msra.mxu0 0.0
    %3289 = vmatprep.subr.mxu0 0.0
    %3290 = vmatpush1.msra.mxu0 0.0
    %3291 = vmatprep.subr.mxu0 0.0
    %3292 = vmatpush1.msra.mxu0 0.0
    %3293 = vmatprep.subr.mxu0 0.0
    %3294 = vmatpush1.msra.mxu0 0.0
    %3295 = vmatprep.subr.mxu0 0.0
    %3296 = vmatpush1.msra.mxu0 0.0
    %3297 = vmatprep.subr.mxu0 0.0
    %3298 = vmatpush1.msra.mxu0 0.0
    %3299 = vmatprep.subr.mxu0 0.0
    %3300 = vmatpush1.msra.mxu0 0.0
    %3301 = vmatprep.subr.mxu0 0.0
    %3302 = vmatpush1.msra.mxu0 0.0
    %3303 = vmatprep.subr.mxu0 0.0
    %3304 = vmatpush1.msra.mxu0 0.0
    %3305 = vmatprep.subr.mxu0 0.0
    %3306 = vmatpush1.msra.mxu0 0.0
    %3307 = vmatprep.subr.mxu0 0.0
    %3308 = vmatpush1.msra.mxu0 0.0
    %3309 = vmatprep.subr.mxu0 0.0
    %3310 = vmatpush1.msra.mxu0 0.0
    %3311 = vmatprep.subr.mxu0 0.0
    %3312 = vmatpush1.msra.mxu0 0.0
    %3313 = vmatprep.subr.mxu0 0.0
    %3314 = vmatpush1.msra.mxu0 0.0
    %3315 = vmatprep.subr.mxu0 0.0
    %3316 = vmatpush1.msra.mxu0 0.0
    %3317 = vmatprep.subr.mxu0 0.0
    %3318 = vmatpush1.msra.mxu0 0.0
    %3319 = vmatprep.subr.mxu0 0.0
    %3320 = vmatpush1.msra.mxu0 0.0
    %3321 = vmatprep.mubr.f32.mxu0 0.0
    %3322 = vmatmul.mubr.f32.gmra.mrb[0].mxu0 %v3255
    %v3323 = vpop.f32.mrb[0].mxu0
    %v3324 = vadd.f32 0.0, %v3323
    %v3325 = vpop.f32.mrb[0].mxu0
    %3326 = vdwg.mxu0
    %v3328 = vsel %vm1896, %v2809, 0
    %3330 = vmatprep.subr.mxu0 0.0
    %3331 = vmatpush1.msra.mxu0 %v3179
    %3332 = vmatprep.subr.mxu0 0.0
    %3333 = vmatpush1.msra.mxu0 0.0
    %3334 = vmatprep.subr.mxu0 0.0
    %3335 = vmatpush1.msra.mxu0 0.0
    %3336 = vmatprep.subr.mxu0 0.0
    %3337 = vmatpush1.msra.mxu0 0.0
    %3338 = vmatprep.subr.mxu0 0.0
    %3339 = vmatpush1.msra.mxu0 0.0
    %3340 = vmatprep.subr.mxu0 0.0
    %3341 = vmatpush1.msra.mxu0 0.0
    %3342 = vmatprep.subr.mxu0 0.0
    %3343 = vmatpush1.msra.mxu0 0.0
    %3344 = vmatprep.subr.mxu0 0.0
    %3345 = vmatpush1.msra.mxu0 0.0
    %3346 = vmatprep.subr.mxu0 0.0
    %3347 = vmatpush1.msra.mxu0 0.0
    %3348 = vmatprep.subr.mxu0 0.0
    %3349 = vmatpush1.msra.mxu0 0.0
    %3350 = vmatprep.subr.mxu0 0.0
    %3351 = vmatpush1.msra.mxu0 0.0
    %3352 = vmatprep.subr.mxu0 0.0
    %3353 = vmatpush1.msra.mxu0 0.0
    %3354 = vmatprep.subr.mxu0 0.0
    %3355 = vmatpush1.msra.mxu0 0.0
    %3356 = vmatprep.subr.mxu0 0.0
    %3357 = vmatpush1.msra.mxu0 0.0
    %3358 = vmatprep.subr.mxu0 0.0
    %3359 = vmatpush1.msra.mxu0 0.0
    %3360 = vmatprep.subr.mxu0 0.0
    %3361 = vmatpush1.msra.mxu0 0.0
    %3362 = vmatprep.subr.mxu0 0.0
    %3363 = vmatpush1.msra.mxu0 0.0
    %3364 = vmatprep.subr.mxu0 0.0
    %3365 = vmatpush1.msra.mxu0 0.0
    %3366 = vmatprep.subr.mxu0 0.0
    %3367 = vmatpush1.msra.mxu0 0.0
    %3368 = vmatprep.subr.mxu0 0.0
    %3369 = vmatpush1.msra.mxu0 0.0
    %3370 = vmatprep.subr.mxu0 0.0
    %3371 = vmatpush1.msra.mxu0 0.0
    %3372 = vmatprep.subr.mxu0 0.0
    %3373 = vmatpush1.msra.mxu0 0.0
    %3374 = vmatprep.subr.mxu0 0.0
    %3375 = vmatpush1.msra.mxu0 0.0
    %3376 = vmatprep.subr.mxu0 0.0
    %3377 = vmatpush1.msra.mxu0 0.0
    %3378 = vmatprep.subr.mxu0 0.0
    %3379 = vmatpush1.msra.mxu0 0.0
    %3380 = vmatprep.subr.mxu0 0.0
    %3381 = vmatpush1.msra.mxu0 0.0
    %3382 = vmatprep.subr.mxu0 0.0
    %3383 = vmatpush1.msra.mxu0 0.0
    %3384 = vmatprep.subr.mxu0 0.0
    %3385 = vmatpush1.msra.mxu0 0.0
    %3386 = vmatprep.subr.mxu0 0.0
    %3387 = vmatpush1.msra.mxu0 0.0
    %3388 = vmatprep.subr.mxu0 0.0
    %3389 = vmatpush1.msra.mxu0 0.0
    %3390 = vmatprep.subr.mxu0 0.0
    %3391 = vmatpush1.msra.mxu0 0.0
    %3392 = vmatprep.subr.mxu0 0.0
    %3393 = vmatpush1.msra.mxu0 0.0
    %3394 = vmatprep.mubr.f32.mxu0 0.0
    %3395 = vmatmul.mubr.f32.gmra.mrb[0].mxu0 %v3328
    %v3396 = vpop.f32.mrb[0].mxu0
    %v3397 = vadd.f32 0.0, %v3396
    %v3398 = vpop.f32.mrb[0].mxu0
    %3399 = vdwg.mxu0
    %v3401 = vsel %vm1896, %v2882, 0
    %3403 = vmatprep.subr.mxu0 0.0
    %3404 = vmatpush1.msra.mxu0 %v3180
    %3405 = vmatprep.subr.mxu0 0.0
    %3406 = vmatpush1.msra.mxu0 0.0
    %3407 = vmatprep.subr.mxu0 0.0
    %3408 = vmatpush1.msra.mxu0 0.0
    %3409 = vmatprep.subr.mxu0 0.0
    %3410 = vmatpush1.msra.mxu0 0.0
    %3411 = vmatprep.subr.mxu0 0.0
    %3412 = vmatpush1.msra.mxu0 0.0
    %3413 = vmatprep.subr.mxu0 0.0
    %3414 = vmatpush1.msra.mxu0 0.0
    %3415 = vmatprep.subr.mxu0 0.0
    %3416 = vmatpush1.msra.mxu0 0.0
    %3417 = vmatprep.subr.mxu0 0.0
    %3418 = vmatpush1.msra.mxu0 0.0
    %3419 = vmatprep.subr.mxu0 0.0
    %3420 = vmatpush1.msra.mxu0 0.0
    %3421 = vmatprep.subr.mxu0 0.0
    %3422 = vmatpush1.msra.mxu0 0.0
    %3423 = vmatprep.subr.mxu0 0.0
    %3424 = vmatpush1.msra.mxu0 0.0
    %3425 = vmatprep.subr.mxu0 0.0
    %3426 = vmatpush1.msra.mxu0 0.0
    %3427 = vmatprep.subr.mxu0 0.0
    %3428 = vmatpush1.msra.mxu0 0.0
    %3429 = vmatprep.subr.mxu0 0.0
    %3430 = vmatpush1.msra.mxu0 0.0
    %3431 = vmatprep.subr.mxu0 0.0
    %3432 = vmatpush1.msra.mxu0 0.0
    %3433 = vmatprep.subr.mxu0 0.0
    %3434 = vmatpush1.msra.mxu0 0.0
    %3435 = vmatprep.subr.mxu0 0.0
    %3436 = vmatpush1.msra.mxu0 0.0
    %3437 = vmatprep.subr.mxu0 0.0
    %3438 = vmatpush1.msra.mxu0 0.0
    %3439 = vmatprep.subr.mxu0 0.0
    %3440 = vmatpush1.msra.mxu0 0.0
    %3441 = vmatprep.subr.mxu0 0.0
    %3442 = vmatpush1.msra.mxu0 0.0
    %3443 = vmatprep.subr.mxu0 0.0
    %3444 = vmatpush1.msra.mxu0 0.0
    %3445 = vmatprep.subr.mxu0 0.0
    %3446 = vmatpush1.msra.mxu0 0.0
    %3447 = vmatprep.subr.mxu0 0.0
    %3448 = vmatpush1.msra.mxu0 0.0
    %3449 = vmatprep.subr.mxu0 0.0
    %3450 = vmatpush1.msra.mxu0 0.0
    %3451 = vmatprep.subr.mxu0 0.0
    %3452 = vmatpush1.msra.mxu0 0.0
    %3453 = vmatprep.subr.mxu0 0.0
    %3454 = vmatpush1.msra.mxu0 0.0
    %3455 = vmatprep.subr.mxu0 0.0
    %3456 = vmatpush1.msra.mxu0 0.0
    %3457 = vmatprep.subr.mxu0 0.0
    %3458 = vmatpush1.msra.mxu0 0.0
    %3459 = vmatprep.subr.mxu0 0.0
    %3460 = vmatpush1.msra.mxu0 0.0
    %3461 = vmatprep.subr.mxu0 0.0
    %3462 = vmatpush1.msra.mxu0 0.0
    %3463 = vmatprep.subr.mxu0 0.0
    %3464 = vmatpush1.msra.mxu0 0.0
    %3465 = vmatprep.subr.mxu0 0.0
    %3466 = vmatpush1.msra.mxu0 0.0
    %3467 = vmatprep.mubr.f32.mxu0 0.0
    %3468 = vmatmul.mubr.f32.gmra.mrb[0].mxu0 %v3401
    %v3469 = vpop.f32.mrb[0].mxu0
    %v3470 = vadd.f32 0.0, %v3469
    %v3471 = vpop.f32.mrb[0].mxu0
    %3472 = vdwg.mxu0
    %v3474 = vsel %vm1896, %v2955, 0
    %3476 = vmatprep.subr.mxu0 0.0
    %3477 = vmatpush1.msra.mxu0 %v3177
    %3478 = vmatprep.subr.mxu0 0.0
    %3479 = vmatpush1.msra.mxu0 0.0
    %3480 = vmatprep.subr.mxu0 0.0
    %3481 = vmatpush1.msra.mxu0 0.0
    %3482 = vmatprep.subr.mxu0 0.0
    %3483 = vmatpush1.msra.mxu0 0.0
    %3484 = vmatprep.subr.mxu0 0.0
    %3485 = vmatpush1.msra.mxu0 0.0
    %3486 = vmatprep.subr.mxu0 0.0
    %3487 = vmatpush1.msra.mxu0 0.0
    %3488 = vmatprep.subr.mxu0 0.0
    %3489 = vmatpush1.msra.mxu0 0.0
    %3490 = vmatprep.subr.mxu0 0.0
    %3491 = vmatpush1.msra.mxu0 0.0
    %3492 = vmatprep.subr.mxu0 0.0
    %3493 = vmatpush1.msra.mxu0 0.0
    %3494 = vmatprep.subr.mxu0 0.0
    %3495 = vmatpush1.msra.mxu0 0.0
    %3496 = vmatprep.subr.mxu0 0.0
    %3497 = vmatpush1.msra.mxu0 0.0
    %3498 = vmatprep.subr.mxu0 0.0
    %3499 = vmatpush1.msra.mxu0 0.0
    %3500 = vmatprep.subr.mxu0 0.0
    %3501 = vmatpush1.msra.mxu0 0.0
    %3502 = vmatprep.subr.mxu0 0.0
    %3503 = vmatpush1.msra.mxu0 0.0
    %3504 = vmatprep.subr.mxu0 0.0
    %3505 = vmatpush1.msra.mxu0 0.0
    %3506 = vmatprep.subr.mxu0 0.0
    %3507 = vmatpush1.msra.mxu0 0.0
    %3508 = vmatprep.subr.mxu0 0.0
    %3509 = vmatpush1.msra.mxu0 0.0
    %3510 = vmatprep.subr.mxu0 0.0
    %3511 = vmatpush1.msra.mxu0 0.0
    %3512 = vmatprep.subr.mxu0 0.0
    %3513 = vmatpush1.msra.mxu0 0.0
    %3514 = vmatprep.subr.mxu0 0.0
    %3515 = vmatpush1.msra.mxu0 0.0
    %3516 = vmatprep.subr.mxu0 0.0
    %3517 = vmatpush1.msra.mxu0 0.0
    %3518 = vmatprep.subr.mxu0 0.0
    %3519 = vmatpush1.msra.mxu0 0.0
    %3520 = vmatprep.subr.mxu0 0.0
    %3521 = vmatpush1.msra.mxu0 0.0
    %3522 = vmatprep.subr.mxu0 0.0
    %3523 = vmatpush1.msra.mxu0 0.0
    %3524 = vmatprep.subr.mxu0 0.0
    %3525 = vmatpush1.msra.mxu0 0.0
    %3526 = vmatprep.subr.mxu0 0.0
    %3527 = vmatpush1.msra.mxu0 0.0
    %3528 = vmatprep.subr.mxu0 0.0
    %3529 = vmatpush1.msra.mxu0 0.0
    %3530 = vmatprep.subr.mxu0 0.0
    %3531 = vmatpush1.msra.mxu0 0.0
    %3532 = vmatprep.subr.mxu0 0.0
    %3533 = vmatpush1.msra.mxu0 0.0
    %3534 = vmatprep.subr.mxu0 0.0
    %3535 = vmatpush1.msra.mxu0 0.0
    %3536 = vmatprep.subr.mxu0 0.0
    %3537 = vmatpush1.msra.mxu0 0.0
    %3538 = vmatprep.subr.mxu0 0.0
    %3539 = vmatpush1.msra.mxu0 0.0
    %3540 = vmatprep.mubr.f32.mxu0 0.0
    %3541 = vmatmul.mubr.f32.gmra.mrb[0].mxu0 %v3474
    %v3542 = vpop.f32.mrb[0].mxu0
    %v3543 = vadd.f32 0.0, %v3542
    %v3544 = vpop.f32.mrb[0].mxu0
    %3545 = vdwg.mxu0
    %v3547 = vsel %vm1896, %v3028, 0
    %3549 = vmatprep.subr.mxu0 0.0
    %3550 = vmatpush1.msra.mxu0 %v3178
    %3551 = vmatprep.subr.mxu0 0.0
    %3552 = vmatpush1.msra.mxu0 0.0
    %3553 = vmatprep.subr.mxu0 0.0
    %3554 = vmatpush1.msra.mxu0 0.0
    %3555 = vmatprep.subr.mxu0 0.0
    %3556 = vmatpush1.msra.mxu0 0.0
    %3557 = vmatprep.subr.mxu0 0.0
    %3558 = vmatpush1.msra.mxu0 0.0
    %3559 = vmatprep.subr.mxu0 0.0
    %3560 = vmatpush1.msra.mxu0 0.0
    %3561 = vmatprep.subr.mxu0 0.0
    %3562 = vmatpush1.msra.mxu0 0.0
    %3563 = vmatprep.subr.mxu0 0.0
    %3564 = vmatpush1.msra.mxu0 0.0
    %3565 = vmatprep.subr.mxu0 0.0
    %3566 = vmatpush1.msra.mxu0 0.0
    %3567 = vmatprep.subr.mxu0 0.0
    %3568 = vmatpush1.msra.mxu0 0.0
    %3569 = vmatprep.subr.mxu0 0.0
    %3570 = vmatpush1.msra.mxu0 0.0
    %3571 = vmatprep.subr.mxu0 0.0
    %3572 = vmatpush1.msra.mxu0 0.0
    %3573 = vmatprep.subr.mxu0 0.0
    %3574 = vmatpush1.msra.mxu0 0.0
    %3575 = vmatprep.subr.mxu0 0.0
    %3576 = vmatpush1.msra.mxu0 0.0
    %3577 = vmatprep.subr.mxu0 0.0
    %3578 = vmatpush1.msra.mxu0 0.0
    %3579 = vmatprep.subr.mxu0 0.0
    %3580 = vmatpush1.msra.mxu0 0.0
    %3581 = vmatprep.subr.mxu0 0.0
    %3582 = vmatpush1.msra.mxu0 0.0
    %3583 = vmatprep.subr.mxu0 0.0
    %3584 = vmatpush1.msra.mxu0 0.0
    %3585 = vmatprep.subr.mxu0 0.0
    %3586 = vmatpush1.msra.mxu0 0.0
    %3587 = vmatprep.subr.mxu0 0.0
    %3588 = vmatpush1.msra.mxu0 0.0
    %3589 = vmatprep.subr.mxu0 0.0
    %3590 = vmatpush1.msra.mxu0 0.0
    %3591 = vmatprep.subr.mxu0 0.0
    %3592 = vmatpush1.msra.mxu0 0.0
    %3593 = vmatprep.subr.mxu0 0.0
    %3594 = vmatpush1.msra.mxu0 0.0
    %3595 = vmatprep.subr.mxu0 0.0
    %3596 = vmatpush1.msra.mxu0 0.0
    %3597 = vmatprep.subr.mxu0 0.0
    %3598 = vmatpush1.msra.mxu0 0.0
    %3599 = vmatprep.subr.mxu0 0.0
    %3600 = vmatpush1.msra.mxu0 0.0
    %3601 = vmatprep.subr.mxu0 0.0
    %3602 = vmatpush1.msra.mxu0 0.0
    %3603 = vmatprep.subr.mxu0 0.0
    %3604 = vmatpush1.msra.mxu0 0.0
    %3605 = vmatprep.subr.mxu0 0.0
    %3606 = vmatpush1.msra.mxu0 0.0
    %3607 = vmatprep.subr.mxu0 0.0
    %3608 = vmatpush1.msra.mxu0 0.0
    %3609 = vmatprep.subr.mxu0 0.0
    %3610 = vmatpush1.msra.mxu0 0.0
    %3611 = vmatprep.subr.mxu0 0.0
    %3612 = vmatpush1.msra.mxu0 0.0
    %3613 = vmatprep.mubr.f32.mxu0 0.0
    %3614 = vmatmul.mubr.f32.gmra.mrb[0].mxu0 %v3547
    %v3615 = vpop.f32.mrb[0].mxu0
    %v3616 = vadd.f32 0.0, %v3615
    %v3617 = vpop.f32.mrb[0].mxu0
    %3618 = vdwg.mxu0
    %v3620 = vsel %vm1896, %v3101, 0
    %3622 = vmatprep.subr.mxu0 0.0
    %3623 = vmatpush1.msra.mxu0 %v3179
    %3624 = vmatprep.subr.mxu0 0.0
    %3625 = vmatpush1.msra.mxu0 0.0
    %3626 = vmatprep.subr.mxu0 0.0
    %3627 = vmatpush1.msra.mxu0 0.0
    %3628 = vmatprep.subr.mxu0 0.0
    %3629 = vmatpush1.msra.mxu0 0.0
    %3630 = vmatprep.subr.mxu0 0.0
    %3631 = vmatpush1.msra.mxu0 0.0
    %3632 = vmatprep.subr.mxu0 0.0
    %3633 = vmatpush1.msra.mxu0 0.0
    %3634 = vmatprep.subr.mxu0 0.0
    %3635 = vmatpush1.msra.mxu0 0.0
    %3636 = vmatprep.subr.mxu0 0.0
    %3637 = vmatpush1.msra.mxu0 0.0
    %3638 = vmatprep.subr.mxu0 0.0
    %3639 = vmatpush1.msra.mxu0 0.0
    %3640 = vmatprep.subr.mxu0 0.0
    %3641 = vmatpush1.msra.mxu0 0.0
    %3642 = vmatprep.subr.mxu0 0.0
    %3643 = vmatpush1.msra.mxu0 0.0
    %3644 = vmatprep.subr.mxu0 0.0
    %3645 = vmatpush1.msra.mxu0 0.0
    %3646 = vmatprep.subr.mxu0 0.0
    %3647 = vmatpush1.msra.mxu0 0.0
    %3648 = vmatprep.subr.mxu0 0.0
    %3649 = vmatpush1.msra.mxu0 0.0
    %3650 = vmatprep.subr.mxu0 0.0
    %3651 = vmatpush1.msra.mxu0 0.0
    %3652 = vmatprep.subr.mxu0 0.0
    %3653 = vmatpush1.msra.mxu0 0.0
    %3654 = vmatprep.subr.mxu0 0.0
    %3655 = vmatpush1.msra.mxu0 0.0
    %3656 = vmatprep.subr.mxu0 0.0
    %3657 = vmatpush1.msra.mxu0 0.0
    %3658 = vmatprep.subr.mxu0 0.0
    %3659 = vmatpush1.msra.mxu0 0.0
    %3660 = vmatprep.subr.mxu0 0.0
    %3661 = vmatpush1.msra.mxu0 0.0
    %3662 = vmatprep.subr.mxu0 0.0
    %3663 = vmatpush1.msra.mxu0 0.0
    %3664 = vmatprep.subr.mxu0 0.0
    %3665 = vmatpush1.msra.mxu0 0.0
    %3666 = vmatprep.subr.mxu0 0.0
    %3667 = vmatpush1.msra.mxu0 0.0
    %3668 = vmatprep.subr.mxu0 0.0
    %3669 = vmatpush1.msra.mxu0 0.0
    %3670 = vmatprep.subr.mxu0 0.0
    %3671 = vmatpush1.msra.mxu0 0.0
    %3672 = vmatprep.subr.mxu0 0.0
    %3673 = vmatpush1.msra.mxu0 0.0
    %3674 = vmatprep.subr.mxu0 0.0
    %3675 = vmatpush1.msra.mxu0 0.0
    %3676 = vmatprep.subr.mxu0 0.0
    %3677 = vmatpush1.msra.mxu0 0.0
    %3678 = vmatprep.subr.mxu0 0.0
    %3679 = vmatpush1.msra.mxu0 0.0
    %3680 = vmatprep.subr.mxu0 0.0
    %3681 = vmatpush1.msra.mxu0 0.0
    %3682 = vmatprep.subr.mxu0 0.0
    %3683 = vmatpush1.msra.mxu0 0.0
    %3684 = vmatprep.subr.mxu0 0.0
    %3685 = vmatpush1.msra.mxu0 0.0
    %3686 = vmatprep.mubr.f32.mxu0 0.0
    %3687 = vmatmul.mubr.f32.gmra.mrb[0].mxu0 %v3620
    %v3688 = vpop.f32.mrb[0].mxu0
    %v3689 = vadd.f32 0.0, %v3688
    %v3690 = vpop.f32.mrb[0].mxu0
    %3691 = vdwg.mxu0
    %v3693 = vsel %vm1896, %v3174, 0
    %3695 = vmatprep.subr.mxu0 0.0
    %3696 = vmatpush1.msra.mxu0 %v3180
    %3697 = vmatprep.subr.mxu0 0.0
    %3698 = vmatpush1.msra.mxu0 0.0
    %3699 = vmatprep.subr.mxu0 0.0
    %3700 = vmatpush1.msra.mxu0 0.0
    %3701 = vmatprep.subr.mxu0 0.0
    %3702 = vmatpush1.msra.mxu0 0.0
    %3703 = vmatprep.subr.mxu0 0.0
    %3704 = vmatpush1.msra.mxu0 0.0
    %3705 = vmatprep.subr.mxu0 0.0
    %3706 = vmatpush1.msra.mxu0 0.0
    %3707 = vmatprep.subr.mxu0 0.0
    %3708 = vmatpush1.msra.mxu0 0.0
    %3709 = vmatprep.subr.mxu0 0.0
    %3710 = vmatpush1.msra.mxu0 0.0
    %3711 = vmatprep.subr.mxu0 0.0
    %3712 = vmatpush1.msra.mxu0 0.0
    %3713 = vmatprep.subr.mxu0 0.0
    %3714 = vmatpush1.msra.mxu0 0.0
    %3715 = vmatprep.subr.mxu0 0.0
    %3716 = vmatpush1.msra.mxu0 0.0
    %3717 = vmatprep.subr.mxu0 0.0
    %3718 = vmatpush1.msra.mxu0 0.0
    %3719 = vmatprep.subr.mxu0 0.0
    %3720 = vmatpush1.msra.mxu0 0.0
    %3721 = vmatprep.subr.mxu0 0.0
    %3722 = vmatpush1.msra.mxu0 0.0
    %3723 = vmatprep.subr.mxu0 0.0
    %3724 = vmatpush1.msra.mxu0 0.0
    %3725 = vmatprep.subr.mxu0 0.0
    %3726 = vmatpush1.msra.mxu0 0.0
    %3727 = vmatprep.subr.mxu0 0.0
    %3728 = vmatpush1.msra.mxu0 0.0
    %3729 = vmatprep.subr.mxu0 0.0
    %3730 = vmatpush1.msra.mxu0 0.0
    %3731 = vmatprep.subr.mxu0 0.0
    %3732 = vmatpush1.msra.mxu0 0.0
    %3733 = vmatprep.subr.mxu0 0.0
    %3734 = vmatpush1.msra.mxu0 0.0
    %3735 = vmatprep.subr.mxu0 0.0
    %3736 = vmatpush1.msra.mxu0 0.0
    %3737 = vmatprep.subr.mxu0 0.0
    %3738 = vmatpush1.msra.mxu0 0.0
    %3739 = vmatprep.subr.mxu0 0.0
    %3740 = vmatpush1.msra.mxu0 0.0
    %3741 = vmatprep.subr.mxu0 0.0
    %3742 = vmatpush1.msra.mxu0 0.0
    %3743 = vmatprep.subr.mxu0 0.0
    %3744 = vmatpush1.msra.mxu0 0.0
    %3745 = vmatprep.subr.mxu0 0.0
    %3746 = vmatpush1.msra.mxu0 0.0
    %3747 = vmatprep.subr.mxu0 0.0
    %3748 = vmatpush1.msra.mxu0 0.0
    %3749 = vmatprep.subr.mxu0 0.0
    %3750 = vmatpush1.msra.mxu0 0.0
    %3751 = vmatprep.subr.mxu0 0.0
    %3752 = vmatpush1.msra.mxu0 0.0
    %3753 = vmatprep.subr.mxu0 0.0
    %3754 = vmatpush1.msra.mxu0 0.0
    %3755 = vmatprep.subr.mxu0 0.0
    %3756 = vmatpush1.msra.mxu0 0.0
    %3757 = vmatprep.subr.mxu0 0.0
    %3758 = vmatpush1.msra.mxu0 0.0
    %3759 = vmatprep.mubr.f32.mxu0 0.0
    %3760 = vmatmul.mubr.f32.gmra.mrb[0].mxu0 %v3693
    %v3761 = vpop.f32.mrb[0].mxu0
    %v3762 = vadd.f32 0.0, %v3761
    %v3763 = vpop.f32.mrb[0].mxu0
    %3764 = vdwg.mxu0
    %v3765 = vsel %vm36, %v3251, 0.0
    %v3766 = vsel %vm36, %v3324, 0.0
    %v3767 = vadd.f32 %v3765, %v3766
    %v3768 = vsel %vm36, %v3397, 0.0
    %v3769 = vadd.f32 %v3767, %v3768
    %v3770 = vsel %vm36, %v3470, 0.0
    %v3771 = vadd.f32 %v3769, %v3770
    %v3772 = vsel %vm36, %v3543, 0.0
    %v3773 = vsel %vm36, %v3616, 0.0
    %v3774 = vadd.f32 %v3772, %v3773
    %v3775 = vsel %vm36, %v3689, 0.0
    %v3776 = vadd.f32 %v3774, %v3775
    %v3777 = vsel %vm36, %v3762, 0.0
    %v3778 = vadd.f32 %v3776, %v3777
    %v3779 = vlaneseq
    %v3780 = vshrl.u32 %v3779, 7
    %v3781 = vsub.s32 0, %v3780
    %v3782 = vrot.slane %v33, %v3781
    %v3783 = vadd.f32 %v3771, %v3782
    %v3784 = vadd.f32 %v3778, %v3782
    %v3785 = vadd.f32 %v27, %v3783
    %v3786 = vadd.f32 %v28, %v3784
    %v3787 = vsel %vm36, %v3785, 0.0
    %3788 = vadd.xlane.f32.xlu0 %v3787
    %v3789 = vpop.xlane.xlu0 %3788
    %v3790 = vsel %vm36, %v3786, 0.0
    %3791 = vadd.xlane.f32.xlu0 %v3790
    %v3792 = vpop.xlane.xlu0 %3791
    %v3793 = vmul.f32 %v3789, %v43
    %v3794 = vmul.f32 %v3792, %v43
    %v3795 = vsub.f32 %v3785, %v3793
    %v3796 = vsub.f32 %v3786, %v3794
    %v3797 = vmul.f32 %v3795, %v3795
    %v3798 = vmul.f32 %v3796, %v3796
    %v3799 = vsel %vm36, %v3797, 0.0
    %3800 = vadd.xlane.f32.xlu0 %v3799
    %v3801 = vpop.xlane.xlu0 %3800
    %v3802 = vsel %vm36, %v3798, 0.0
    %3803 = vadd.xlane.f32.xlu0 %v3802
    %v3804 = vpop.xlane.xlu0 %3803
    %v3805 = vmul.f32 %v3801, %v43
    %v3806 = vmul.f32 %v3804, %v43
    %v3807 = vadd.f32 %v3805, 1e-06
    %v3808 = vadd.f32 %v3806, 1e-06
    %v3809 = vrsqrt.pop %v3807
    %v3810 = vrsqrt.pop %v3808
    %v3811 = vmul.f32 %v3795, %v3809
    %v3812 = vmul.f32 %v3796, %v3810
    %v3813 = vlaneseq
    %v3814 = vshrl.u32 %v3813, 7
    %v3815 = vsub.s32 0, %v3814
    %v3816 = vrot.slane %v31, %v3815
    %v3817 = vmul.f32 %v3811, %v3816
    %v3818 = vmul.f32 %v3812, %v3816
    %v3819 = vlaneseq
    %v3820 = vshrl.u32 %v3819, 7
    %v3821 = vsub.s32 0, %v3820
    %v3822 = vrot.slane %v32, %v3821
    %v3823 = vadd.f32 %v3817, %v3822
    %v3824 = vadd.f32 %v3818, %v3822
    %v3825 = vld [vmem:[%s3] sm:$0xff]
    %v3826 = vld [vmem:[%s3 + $0x8] sm:$0xff]
    %v3827 = vld [vmem:[%s3 + $0x10] sm:$0xff]
    %v3828 = vld [vmem:[%s3 + $0x18] sm:$0xff]
    %v3829 = vld [vmem:[%s3 + $0x20] sm:$0xff]
    %v3830 = vld [vmem:[%s3 + $0x28] sm:$0xff]
    %v3831 = vld [vmem:[%s3 + $0x30] sm:$0xff]
    %v3832 = vld [vmem:[%s3 + $0x38] sm:$0xff]
    %v3833 = vld [vmem:[%s3 + $0x40] sm:$0xff]
    %v3834 = vld [vmem:[%s3 + $0x48] sm:$0xff]
    %v3835 = vld [vmem:[%s3 + $0x50] sm:$0xff]
    %v3836 = vld [vmem:[%s3 + $0x58] sm:$0xff]
    %v3837 = vlaneseq
    %v3838 = vshrl.u32 %v3837, 7
    %v3839 = vsub.s32 0, %v3838
    %v3840 = vrot.slane %v35, %v3839
    %v3842 = vsel %vm36, %v3823, 0
    %v3845 = vsel %vm36, %v3824, 0
    %3847 = vmatprep.subr.mxu0 0.0
    %3848 = vmatpush1.msra.mxu0 %v3825
    %3849 = vmatprep.subr.mxu0 0.0
    %3850 = vmatpush1.msra.mxu0 %v3826
    %3851 = vmatprep.subr.mxu0 0.0
    %3852 = vmatpush1.msra.mxu0 %v3827
    %3853 = vmatprep.subr.mxu0 0.0
    %3854 = vmatpush1.msra.mxu0 %v3828
    %3855 = vmatprep.subr.mxu0 0.0
    %3856 = vmatpush1.msra.mxu0 0.0
    %3857 = vmatprep.subr.mxu0 0.0
    %3858 = vmatpush1.msra.mxu0 0.0
    %3859 = vmatprep.subr.mxu0 0.0
    %3860 = vmatpush1.msra.mxu0 0.0
    %3861 = vmatprep.subr.mxu0 0.0
    %3862 = vmatpush1.msra.mxu0 0.0
    %3863 = vmatprep.subr.mxu0 0.0
    %3864 = vmatpush1.msra.mxu0 0.0
    %3865 = vmatprep.subr.mxu0 0.0
    %3866 = vmatpush1.msra.mxu0 0.0
    %3867 = vmatprep.subr.mxu0 0.0
    %3868 = vmatpush1.msra.mxu0 0.0
    %3869 = vmatprep.subr.mxu0 0.0
    %3870 = vmatpush1.msra.mxu0 0.0
    %3871 = vmatprep.subr.mxu0 0.0
    %3872 = vmatpush1.msra.mxu0 0.0
    %3873 = vmatprep.subr.mxu0 0.0
    %3874 = vmatpush1.msra.mxu0 0.0
    %3875 = vmatprep.subr.mxu0 0.0
    %3876 = vmatpush1.msra.mxu0 0.0
    %3877 = vmatprep.subr.mxu0 0.0
    %3878 = vmatpush1.msra.mxu0 0.0
    %3879 = vmatprep.subr.mxu0 0.0
    %3880 = vmatpush1.msra.mxu0 0.0
    %3881 = vmatprep.subr.mxu0 0.0
    %3882 = vmatpush1.msra.mxu0 0.0
    %3883 = vmatprep.subr.mxu0 0.0
    %3884 = vmatpush1.msra.mxu0 0.0
    %3885 = vmatprep.subr.mxu0 0.0
    %3886 = vmatpush1.msra.mxu0 0.0
    %3887 = vmatprep.subr.mxu0 0.0
    %3888 = vmatpush1.msra.mxu0 0.0
    %3889 = vmatprep.subr.mxu0 0.0
    %3890 = vmatpush1.msra.mxu0 0.0
    %3891 = vmatprep.subr.mxu0 0.0
    %3892 = vmatpush1.msra.mxu0 0.0
    %3893 = vmatprep.subr.mxu0 0.0
    %3894 = vmatpush1.msra.mxu0 0.0
    %3895 = vmatprep.subr.mxu0 0.0
    %3896 = vmatpush1.msra.mxu0 0.0
    %3897 = vmatprep.subr.mxu0 0.0
    %3898 = vmatpush1.msra.mxu0 0.0
    %3899 = vmatprep.subr.mxu0 0.0
    %3900 = vmatpush1.msra.mxu0 0.0
    %3901 = vmatprep.subr.mxu0 0.0
    %3902 = vmatpush1.msra.mxu0 0.0
    %3903 = vmatprep.subr.mxu0 0.0
    %3904 = vmatpush1.msra.mxu0 0.0
    %3905 = vmatprep.subr.mxu0 0.0
    %3906 = vmatpush1.msra.mxu0 0.0
    %3907 = vmatprep.subr.mxu0 0.0
    %3908 = vmatpush1.msra.mxu0 0.0
    %3909 = vmatprep.subr.mxu0 0.0
    %3910 = vmatpush1.msra.mxu0 0.0
    %3911 = vmatprep.mubr.f32.mxu0 0.0
    %3912 = vmatmul.mubr.f32.gmra.mrb[0].mxu0 %v3842
    %v3913 = vpop.f32.mrb[0].mxu0
    %v3914 = vadd.f32 %v3840, %v3913
    %v3915 = vpop.f32.mrb[0].mxu0
    %3916 = vmatprep.mubr.f32.mxu0 0.0
    %3917 = vmatmul.mubr.f32.gmra.mrb[0].mxu0 %v3845
    %v3918 = vpop.f32.mrb[0].mxu0
    %v3919 = vadd.f32 %v3840, %v3918
    %v3920 = vpop.f32.mrb[0].mxu0
    %3921 = vdwg.mxu0
    %v3922 = vmul.f32 %v3914, 0.5
    %v3923 = vmul.f32 %v3919, 0.5
    %v3924 = vmul.f32 %v3914, 0.044715
    %v3925 = vmul.f32 %v3919, 0.044715
    %v3926 = vmul.f32 %v3924, %v3914
    %v3927 = vmul.f32 %v3925, %v3919
    %v3928 = vmul.f32 %v3926, %v3914
    %v3929 = vmul.f32 %v3927, %v3919
    %v3930 = vadd.f32 %v3914, %v3928
    %v3931 = vadd.f32 %v3919, %v3929
    %v3932 = vmul.f32 %v3930, 0.7978846
    %v3933 = vmul.f32 %v3931, 0.7978846
    %v3934 = vtanh.pop %v3932
    %v3935 = vtanh.pop %v3933
    %v3936 = vadd.f32 %v3934, 1.0
    %v3937 = vadd.f32 %v3935, 1.0
    %v3938 = vmul.f32 %v3922, %v3936
    %v3939 = vmul.f32 %v3923, %v3937
    %v3940 = vlaneseq
    %v3941 = vshrl.u32 %v3940, 7
    %v3942 = vsub.s32 0, %v3941
    %v3943 = vrot.slane %v34, %v3942
    %vm3944 = vcmask 523264
    %v3946 = vsel %vm3944, %v3938, 0
    %v3949 = vsel %vm3944, %v3939, 0
    %3951 = vmatprep.subr.mxu0 0.0
    %3952 = vmatpush1.msra.mxu0 %v3829
    %3953 = vmatprep.subr.mxu0 0.0
    %3954 = vmatpush1.msra.mxu0 %v3830
    %3955 = vmatprep.subr.mxu0 0.0
    %3956 = vmatpush1.msra.mxu0 %v3831
    %3957 = vmatprep.subr.mxu0 0.0
    %3958 = vmatpush1.msra.mxu0 %v3832
    %3959 = vmatprep.subr.mxu0 0.0
    %3960 = vmatpush1.msra.mxu0 %v3833
    %3961 = vmatprep.subr.mxu0 0.0
    %3962 = vmatpush1.msra.mxu0 %v3834
    %3963 = vmatprep.subr.mxu0 0.0
    %3964 = vmatpush1.msra.mxu0 %v3835
    %3965 = vmatprep.subr.mxu0 0.0
    %3966 = vmatpush1.msra.mxu0 %v3836
    %3967 = vmatprep.subr.mxu0 0.0
    %3968 = vmatpush1.msra.mxu0 0.0
    %3969 = vmatprep.subr.mxu0 0.0
    %3970 = vmatpush1.msra.mxu0 0.0
    %3971 = vmatprep.subr.mxu0 0.0
    %3972 = vmatpush1.msra.mxu0 0.0
    %3973 = vmatprep.subr.mxu0 0.0
    %3974 = vmatpush1.msra.mxu0 0.0
    %3975 = vmatprep.subr.mxu0 0.0
    %3976 = vmatpush1.msra.mxu0 0.0
    %3977 = vmatprep.subr.mxu0 0.0
    %3978 = vmatpush1.msra.mxu0 0.0
    %3979 = vmatprep.subr.mxu0 0.0
    %3980 = vmatpush1.msra.mxu0 0.0
    %3981 = vmatprep.subr.mxu0 0.0
    %3982 = vmatpush1.msra.mxu0 0.0
    %3983 = vmatprep.subr.mxu0 0.0
    %3984 = vmatpush1.msra.mxu0 0.0
    %3985 = vmatprep.subr.mxu0 0.0
    %3986 = vmatpush1.msra.mxu0 0.0
    %3987 = vmatprep.subr.mxu0 0.0
    %3988 = vmatpush1.msra.mxu0 0.0
    %3989 = vmatprep.subr.mxu0 0.0
    %3990 = vmatpush1.msra.mxu0 0.0
    %3991 = vmatprep.subr.mxu0 0.0
    %3992 = vmatpush1.msra.mxu0 0.0
    %3993 = vmatprep.subr.mxu0 0.0
    %3994 = vmatpush1.msra.mxu0 0.0
    %3995 = vmatprep.subr.mxu0 0.0
    %3996 = vmatpush1.msra.mxu0 0.0
    %3997 = vmatprep.subr.mxu0 0.0
    %3998 = vmatpush1.msra.mxu0 0.0
    %3999 = vmatprep.subr.mxu0 0.0
    %4000 = vmatpush1.msra.mxu0 0.0
    %4001 = vmatprep.subr.mxu0 0.0
    %4002 = vmatpush1.msra.mxu0 0.0
    %4003 = vmatprep.subr.mxu0 0.0
    %4004 = vmatpush1.msra.mxu0 0.0
    %4005 = vmatprep.subr.mxu0 0.0
    %4006 = vmatpush1.msra.mxu0 0.0
    %4007 = vmatprep.subr.mxu0 0.0
    %4008 = vmatpush1.msra.mxu0 0.0
    %4009 = vmatprep.subr.mxu0 0.0
    %4010 = vmatpush1.msra.mxu0 0.0
    %4011 = vmatprep.subr.mxu0 0.0
    %4012 = vmatpush1.msra.mxu0 0.0
    %4013 = vmatprep.subr.mxu0 0.0
    %4014 = vmatpush1.msra.mxu0 0.0
    %4015 = vmatprep.mubr.f32.mxu0 0.0
    %4016 = vmatmul.mubr.f32.gmra.mrb[0].mxu0 %v3946
    %v4017 = vpop.f32.mrb[0].mxu0
    %v4018 = vadd.f32 %v3943, %v4017
    %v4019 = vpop.f32.mrb[0].mxu0
    %4020 = vmatprep.mubr.f32.mxu0 0.0
    %4021 = vmatmul.mubr.f32.gmra.mrb[0].mxu0 %v3949
    %v4022 = vpop.f32.mrb[0].mxu0
    %v4023 = vadd.f32 %v3943, %v4022
    %v4024 = vpop.f32.mrb[0].mxu0
    %4025 = vdwg.mxu0
    %v4026 = vadd.f32 %v3785, %v4018
    %v4027 = vadd.f32 %v3786, %v4023
    %4028 = vst.msk [vmem:[#allocation2] sm:$0xff] %vm36, %v4026
    %4029 = vst.msk [vmem:[#allocation2 + $0x8] sm:$0xff] %vm36, %v4027
    // Predicated region
    $region30: #{tpu_custom_call.1} parent=1 // pred_check
      _
    $region31: #{tpu_custom_call.1} parent=1 // pred_check_branch
      %4031 = sbr.rel (0) target = $region33
    $region32: #{tpu_custom_call.1} parent=1 // pred_region
      %s4033 = ssub.s32 256, 256
      %4034 = vsyncadd [#allocation3], %s4033
      %s4035 = sshll.u32 [#allocation2], 4
      %s4036 = int_to_ptr.vmem [resolvable:$true] %s4035
      %4041 = dma.vmem_to_hbm [thread:$0]  %s4036, 256, %s7, [#allocation3], 128, 128, 8
    $region33: #{tpu_custom_call.1} parent=1 // pred_fallthru
      _
    // Predicated region
    $region34: #{tpu_custom_call.1} parent=1 // pred_check
      _
    $region35: #{tpu_custom_call.1} parent=1 // pred_check_branch
      %4043 = sbr.rel (0) target = $region37
    $region36: #{tpu_custom_call.1} parent=1 // pred_region
      %4044 = dma.done [#allocation3], 256
    $region37: #{tpu_custom_call.1} parent=1 // pred_fallthru
      _
    %4045 = vsyncpa [#allocation3], 1

</llo_original>
